<compile_context>
chip_gen: v7x
topology: tpu7x:2x2x1
jax: 0.10.0
libtpu: 0.0.40
codegen_flags: <defaults>
</compile_context>

<pallas_src>
import jax
import jax.numpy as jnp
from jax.experimental import pallas as pl
from jax.experimental.pallas import tpu as pltpu

# ----------------------------- model configuration --------------------------

B = 8                       # batch (demo)
B_BLK = 4                   # examples processed per grid step (stacked along M)
L = 520                     # raw waveform length
FT_K, FT_S, FT_OUT = 16, 8, 24          # frontend conv: kernel, stride, #filters
# TDNN frame layers: (kernel, dilation, c_in, c_out)
TDNN_CFG = [(5, 1, FT_OUT, 32),
            (3, 2, 32, 32),
            (3, 3, 32, 32),
            (1, 1, 32, 32),
            (1, 1, 32, 64)]
EMB = 32                    # segment-level embedding size
N_CLASSES = 10              # output classes
C_STATS = TDNN_CFG[-1][3]   # channels entering stats pooling (64)
LANES = 128                 # everything is padded to lane-dense 128

T0 = (L - FT_K) // FT_S + 1            # frames after frontend = 64
T_PAD = T0                              # per-example activation slab (mult of 8)
T_LIST = [T0]
for (_k, _d, _ci, _co) in TDNN_CFG:
    T_LIST.append(T_LIST[-1] - _d * (_k - 1))
T_VALID = T_LIST[-1]                    # 50 valid frames entering pooling

N_TAP_UNITS = sum(k for (k, _d, _ci, _co) in TDNN_CFG)        # 13
W_ROWS = FT_K + LANES * (N_TAP_UNITS + 2 + 1 + 1)             # 2192
N_BIAS = 1 + len(TDNN_CFG) + 3                                # 9

assert FT_K == 2 * FT_S and (T0 - 1) * FT_S + FT_K == L
assert T_PAD % 8 == 0
# every valid tap read stays inside the example's own T_PAD-row slab:
assert all(T_LIST[i + 1] - 1 + d * (k - 1) < T_PAD
           for i, (k, d, _ci, _co) in enumerate(TDNN_CFG))


# ----------------------------- fused Pallas kernel ---------------------------

def _lft_xvector_kernel(x_ref, w_ref, b_ref, o_ref):
    """x_ref: (B_BLK, T_PAD, FT_K) f32 im2col frames
       w_ref: (W_ROWS, 128) bf16 packed weights (zero-padded lanes/rows)
       b_ref: (N_BIAS, 128) f32 packed biases (zero-padded lanes)
       o_ref: (1, B_BLK, 128) f32 lane-padded logits"""
    f32, bf16 = jnp.float32, jnp.bfloat16
    M = B_BLK * T_PAD                              # stacked rows (128..256)

    def bias(i):                                   # (1, 128) f32
        return b_ref[i:i + 1, :]

    # --- learnable frontend: Conv1d(1->24, k=16, stride=8) + ReLU ------------
    x = x_ref[...].reshape(M, FT_K).astype(bf16)   # (M, 16) im2col rows
    acc = jnp.dot(x, w_ref[0:FT_K, :], preferred_element_type=f32)
    h = jnp.maximum(acc + bias(0), 0.0).astype(bf16)   # (M, 128), lanes>=24 == 0

    # --- TDNN frame layers: per-tap full-length matmul + roll shift ----------
    # out[t] = ReLU(b + sum_j h[t + j*d] @ W_j); roll(p_j, M - j*d) gives
    # p_j[t + j*d] at row t (wrap lands only in pad rows, never read as valid).
    off = FT_K
    for li, (k, d, _cin, _cout) in enumerate(TDNN_CFG):
        acc = jnp.dot(h, w_ref[off:off + LANES, :], preferred_element_type=f32)
        off += LANES
        for j in range(1, k):
            p = jnp.dot(h, w_ref[off:off + LANES, :], preferred_element_type=f32)
            acc = acc + pltpu.roll(p, M - j * d, axis=0)
            off += LANES
        h = jnp.maximum(acc + bias(1 + li), 0.0).astype(bf16)

    # --- statistics pooling over valid frames (mask out the time padding) ----
    hf = h.astype(f32).reshape(B_BLK, T_PAD, LANES)
    t_idx = jax.lax.broadcasted_iota(jnp.int32, (B_BLK, T_PAD, LANES), 1)
    tmask = (t_idx < T_VALID).astype(f32)
    inv_t = 1.0 / T_VALID
    mean = jnp.sum(hf * tmask, axis=1) * inv_t                 # (B_BLK, 128)
    diff = (hf - mean[:, None, :]) * tmask
    var = jnp.sum(diff * diff, axis=1) * inv_t
    # TODO(synk): population variance + eps inside sqrt; the real xvector_model
    # may use unbiased std / different eps placement (reference unavailable).
    std = jnp.sqrt(var + 1e-5)

    # --- segment-level layers: fc1([mean|std]) -> fc2 -> output --------------
    e = jnp.dot(mean.astype(bf16), w_ref[off:off + LANES, :],
                preferred_element_type=f32)
    off += LANES
    e = e + jnp.dot(std.astype(bf16), w_ref[off:off + LANES, :],
                    preferred_element_type=f32)
    off += LANES
    e = jnp.maximum(e + bias(6), 0.0)                          # (B_BLK, 128)
    e = jnp.dot(e.astype(bf16), w_ref[off:off + LANES, :],
                preferred_element_type=f32)
    off += LANES
    e = jnp.maximum(e + bias(7), 0.0)
    logits = jnp.dot(e.astype(bf16), w_ref[off:off + LANES, :],
                     preferred_element_type=f32)
    o_ref[0] = (logits + bias(8)).astype(o_ref.dtype)          # lane-dense store


def _build_pallas_call(num_blocks):
    return pl.pallas_call(
        _lft_xvector_kernel,
        out_shape=jax.ShapeDtypeStruct((num_blocks, B_BLK, LANES), jnp.float32),
        grid_spec=pltpu.PrefetchScalarGridSpec(
            num_scalar_prefetch=0,
            grid=(num_blocks,),                     # B_BLK examples per step
            in_specs=[
                pl.BlockSpec((B_BLK, T_PAD, FT_K), lambda g: (g, 0, 0)),
                pl.BlockSpec((W_ROWS, LANES), lambda g: (0, 0)),   # constant block
                pl.BlockSpec((N_BIAS, LANES), lambda g: (0, 0)),   # constant block
            ],
            out_specs=pl.BlockSpec((1, B_BLK, LANES), lambda g: (g, 0, 0)),
        ),
        compiler_params=pltpu.CompilerParams(
            dimension_semantics=("parallel",)),     # v7x: one block per TensorCore
    )


# ----------------------------- parameters & packing --------------------------

def init_params(key):
    keys = jax.random.split(key, 18)

    def w(k, shape, fan_in):
        return (jax.random.normal(k, shape, jnp.float32) * (fan_in ** -0.5)
                ).astype(jnp.bfloat16)              # MXU operands in bf16

    def bvec(k, n):
        return jax.random.normal(k, (n,), jnp.float32) * 0.05

    p = {}
    p["ft_w"], p["ft_b"] = w(keys[0], (FT_K, FT_OUT), FT_K), bvec(keys[1], FT_OUT)
    for i, (kk, _d, cin, cout) in enumerate(TDNN_CFG):
        p[f"tdnn{i}_w"] = w(keys[2 + i], (kk, cin, cout), kk * cin)
        p[f"tdnn{i}_b"] = bvec(keys[7 + i], cout)
    p["fc1_w"], p["fc1_b"] = w(keys[12], (2, C_STATS, EMB), 2 * C_STATS), bvec(keys[13], EMB)
    p["fc2_w"], p["fc2_b"] = w(keys[14], (EMB, EMB), EMB), bvec(keys[15], EMB)
    p["out_w"], p["out_b"] = w(keys[16], (EMB, N_CLASSES), EMB), bvec(keys[17], N_CLASSES)
    return p


def _pad2(m, rows):
    r, c = m.shape
    return jnp.pad(m, ((0, rows - r), (0, LANES - c)))


def pack_params(p):
    """Pack all weights into one bf16 (W_ROWS,128) blob and biases into one
    f32 (N_BIAS,128) blob; zero padding keeps lane>=cout / row>=cin inert."""
    pieces = [_pad2(p["ft_w"], FT_K)]
    for i, (k, _d, _ci, _co) in enumerate(TDNN_CFG):
        for j in range(k):
            pieces.append(_pad2(p[f"tdnn{i}_w"][j], LANES))
    pieces += [_pad2(p["fc1_w"][0], LANES), _pad2(p["fc1_w"][1], LANES),
               _pad2(p["fc2_w"], LANES), _pad2(p["out_w"], LANES)]
    w_blob = jnp.concatenate(pieces, axis=0)

    def brow(v):
        return jnp.pad(v.astype(jnp.float32), (0, LANES - v.shape[0]))

    b_rows = ([brow(p["ft_b"])]
              + [brow(p[f"tdnn{i}_b"]) for i in range(len(TDNN_CFG))]
              + [brow(p["fc1_b"]), brow(p["fc2_b"]), brow(p["out_b"])])
    b_blob = jnp.stack(b_rows, axis=0)
    return w_blob, b_blob


# ----------------------------- wrapper & reference ---------------------------

def lft_xvector_forward(x, w_blob, b_blob):
    """LFtXvector.forward: waveform (B, 1, L) -> logits (B, N_CLASSES)."""
    bx = x.shape[0]
    xf = x.reshape(bx, L)
    pad = (-bx) % B_BLK
    if pad:
        xf = jnp.concatenate([xf, jnp.zeros((pad, L), xf.dtype)], axis=0)
    bp = xf.shape[0]
    # strided-conv im2col from two contiguous reshapes (no gather):
    # row t of example b holds samples [8t, 8t+16).
    im = jnp.concatenate([xf[:, :L - FT_S].reshape(bp, T0, FT_S),
                          xf[:, FT_S:].reshape(bp, T0, FT_S)], axis=-1)
    out = _build_pallas_call(bp // B_BLK)(im, w_blob, b_blob)   # (nb,B_BLK,128)
    return out.reshape(bp, LANES)[:bx, :N_CLASSES]


def reference_forward(x, p):
    """Pure-JAX mirror of the kernel numerics (bf16 operands, f32 accumulate)."""
    f32, bf16 = jnp.float32, jnp.bfloat16
    bx = x.shape[0]
    xf = x.reshape(bx, L)
    im = jnp.concatenate([xf[:, :L - FT_S].reshape(bx, T0, FT_S),
                          xf[:, FT_S:].reshape(bx, T0, FT_S)], axis=-1)
    h = jnp.einsum("btk,kc->btc", im.astype(bf16), p["ft_w"],
                   preferred_element_type=f32)
    h = jnp.maximum(h + p["ft_b"], 0.0).astype(bf16)
    for i, (k, d, _ci, _co) in enumerate(TDNN_CFG):
        t_out = T_LIST[i + 1]
        acc = 0.0
        for j in range(k):
            acc = acc + jnp.einsum("btc,cd->btd", h[:, j * d:j * d + t_out, :],
                                   p[f"tdnn{i}_w"][j], preferred_element_type=f32)
        h = jnp.maximum(acc + p[f"tdnn{i}_b"], 0.0).astype(bf16)
    hf = h.astype(f32)
    mean = jnp.mean(hf, axis=1)
    var = jnp.mean(jnp.square(hf - mean[:, None, :]), axis=1)
    std = jnp.sqrt(var + 1e-5)
    e = (jnp.dot(mean.astype(bf16), p["fc1_w"][0], preferred_element_type=f32)
         + jnp.dot(std.astype(bf16), p["fc1_w"][1], preferred_element_type=f32))
    e = jnp.maximum(e + p["fc1_b"], 0.0)
    e = jnp.maximum(jnp.dot(e.astype(bf16), p["fc2_w"],
                            preferred_element_type=f32) + p["fc2_b"], 0.0)
    return jnp.dot(e.astype(bf16), p["out_w"],
                   preferred_element_type=f32) + p["out_b"]


if __name__ == "__main__":
    key = jax.random.PRNGKey(0)
    pkey, xkey = jax.random.split(key)
    params = init_params(pkey)
    w_blob, b_blob = pack_params(params)
    assert w_blob.shape == (W_ROWS, LANES) and b_blob.shape == (N_BIAS, LANES)

    x = jax.random.normal(xkey, (B, 1, L), jnp.float32)   # (batch, chan, samples)

    out = jax.jit(lft_xvector_forward)(x, w_blob, b_blob)
    out = jax.block_until_ready(out)
    assert out.shape == (B, N_CLASSES), out.shape
    assert bool(jnp.all(jnp.isfinite(out)))

    ref = reference_forward(x, params)
    err = float(jnp.max(jnp.abs(out - ref)))
    assert err < 5e-2, f"max abs diff vs reference: {err}"
    print("KERNEL_OK")
</pallas_src>

<mosaic_0001>
module attributes {stable_mosaic.version = 11 : i64} {
  func.func @_lft_xvector_kernel(%arg0: i32, %arg1: memref<4x64x16xf32, #tpu.memory_space<vmem>>, %arg2: memref<2192x128xbf16, #tpu.memory_space<vmem>>, %arg3: memref<9x128xf32, #tpu.memory_space<vmem>>, %arg4: memref<1x4x128xf32, #tpu.memory_space<vmem>>) attributes {dimension_semantics = [#tpu.dimension_semantics<parallel>], iteration_bounds = array<i64: 2>, scalar_prefetch = 0 : i64, scratch_operands = 0 : i64, tpu.core_type = #tpu.core_type<tc>, window_params = [{transform_indices = @transform_0, window_bounds = array<i64: 4, 64, 16>}, {pipeline_mode = #tpu.pipeline_mode<synchronous>, transform_indices = @transform_1, window_bounds = array<i64: 2192, 128>}, {pipeline_mode = #tpu.pipeline_mode<synchronous>, transform_indices = @transform_2, window_bounds = array<i64: 9, 128>}, {transform_indices = @transform_3, window_bounds = array<i64: 1, 4, 128>}]} {
    %c0 = arith.constant 0 : index
    %c0_0 = arith.constant 0 : index
    %c0_1 = arith.constant 0 : index
    %0 = vector.load %arg1[%c0, %c0_0, %c0_1] : memref<4x64x16xf32, #tpu.memory_space<vmem>>, vector<4x64x16xf32>
    %1 = vector.shape_cast %0 : vector<4x64x16xf32> to vector<256x16xf32>
    %2 = arith.truncf %1 : vector<256x16xf32> to vector<256x16xbf16>
    %c0_2 = arith.constant 0 : index
    %c0_3 = arith.constant 0 : index
    %3 = vector.load %arg2[%c0_2, %c0_3] : memref<2192x128xbf16, #tpu.memory_space<vmem>>, vector<16x128xbf16>
    %cst = arith.constant dense<0.000000e+00> : vector<256x128xf32>
    %4 = tpu.matmul %2, %3, %cst {dimension_numbers = #tpu.dot_dimension_numbers<[1], [0], [0], [1], [0, 0, 1, 1], [], []>} : vector<256x16xbf16>, vector<16x128xbf16>, vector<256x128xf32> -> vector<256x128xf32>
    %c0_4 = arith.constant 0 : index
    %c0_5 = arith.constant 0 : index
    %5 = vector.load %arg3[%c0_4, %c0_5] : memref<9x128xf32, #tpu.memory_space<vmem>>, vector<1x128xf32>
    %6 = vector.broadcast %5 : vector<1x128xf32> to vector<256x128xf32>
    %7 = arith.addf %4, %6 : vector<256x128xf32>
    %cst_6 = arith.constant 0.000000e+00 : f32
    %8 = vector.broadcast %cst_6 : f32 to vector<256x128xf32>
    %9 = arith.maximumf %7, %8 : vector<256x128xf32>
    %10 = arith.truncf %9 : vector<256x128xf32> to vector<256x128xbf16>
    %c16 = arith.constant 16 : index
    %c0_7 = arith.constant 0 : index
    %11 = vector.load %arg2[%c16, %c0_7] : memref<2192x128xbf16, #tpu.memory_space<vmem>>, vector<128x128xbf16>
    %cst_8 = arith.constant dense<0.000000e+00> : vector<256x128xf32>
    %12 = tpu.matmul %10, %11, %cst_8 {dimension_numbers = #tpu.dot_dimension_numbers<[1], [0], [0], [1], [0, 0, 1, 1], [], []>} : vector<256x128xbf16>, vector<128x128xbf16>, vector<256x128xf32> -> vector<256x128xf32>
    %c144 = arith.constant 144 : index
    %c0_9 = arith.constant 0 : index
    %13 = vector.load %arg2[%c144, %c0_9] : memref<2192x128xbf16, #tpu.memory_space<vmem>>, vector<128x128xbf16>
    %cst_10 = arith.constant dense<0.000000e+00> : vector<256x128xf32>
    %14 = tpu.matmul %10, %13, %cst_10 {dimension_numbers = #tpu.dot_dimension_numbers<[1], [0], [0], [1], [0, 0, 1, 1], [], []>} : vector<256x128xbf16>, vector<128x128xbf16>, vector<256x128xf32> -> vector<256x128xf32>
    %c255_i32 = arith.constant 255 : i32
    %15 = tpu.dynamic_rotate %14 by %c255_i32 dim 0 : vector<256x128xf32>, i32 -> vector<256x128xf32>
    %16 = arith.addf %12, %15 : vector<256x128xf32>
    %c272 = arith.constant 272 : index
    %c0_11 = arith.constant 0 : index
    %17 = vector.load %arg2[%c272, %c0_11] : memref<2192x128xbf16, #tpu.memory_space<vmem>>, vector<128x128xbf16>
    %cst_12 = arith.constant dense<0.000000e+00> : vector<256x128xf32>
    %18 = tpu.matmul %10, %17, %cst_12 {dimension_numbers = #tpu.dot_dimension_numbers<[1], [0], [0], [1], [0, 0, 1, 1], [], []>} : vector<256x128xbf16>, vector<128x128xbf16>, vector<256x128xf32> -> vector<256x128xf32>
    %c254_i32 = arith.constant 254 : i32
    %19 = tpu.dynamic_rotate %18 by %c254_i32 dim 0 : vector<256x128xf32>, i32 -> vector<256x128xf32>
    %20 = arith.addf %16, %19 : vector<256x128xf32>
    %c400 = arith.constant 400 : index
    %c0_13 = arith.constant 0 : index
    %21 = vector.load %arg2[%c400, %c0_13] : memref<2192x128xbf16, #tpu.memory_space<vmem>>, vector<128x128xbf16>
    %cst_14 = arith.constant dense<0.000000e+00> : vector<256x128xf32>
    %22 = tpu.matmul %10, %21, %cst_14 {dimension_numbers = #tpu.dot_dimension_numbers<[1], [0], [0], [1], [0, 0, 1, 1], [], []>} : vector<256x128xbf16>, vector<128x128xbf16>, vector<256x128xf32> -> vector<256x128xf32>
    %c253_i32 = arith.constant 253 : i32
    %23 = tpu.dynamic_rotate %22 by %c253_i32 dim 0 : vector<256x128xf32>, i32 -> vector<256x128xf32>
    %24 = arith.addf %20, %23 : vector<256x128xf32>
    %c528 = arith.constant 528 : index
    %c0_15 = arith.constant 0 : index
    %25 = vector.load %arg2[%c528, %c0_15] : memref<2192x128xbf16, #tpu.memory_space<vmem>>, vector<128x128xbf16>
    %cst_16 = arith.constant dense<0.000000e+00> : vector<256x128xf32>
    %26 = tpu.matmul %10, %25, %cst_16 {dimension_numbers = #tpu.dot_dimension_numbers<[1], [0], [0], [1], [0, 0, 1, 1], [], []>} : vector<256x128xbf16>, vector<128x128xbf16>, vector<256x128xf32> -> vector<256x128xf32>
    %c252_i32 = arith.constant 252 : i32
    %27 = tpu.dynamic_rotate %26 by %c252_i32 dim 0 : vector<256x128xf32>, i32 -> vector<256x128xf32>
    %28 = arith.addf %24, %27 : vector<256x128xf32>
    %c1 = arith.constant 1 : index
    %c0_17 = arith.constant 0 : index
    %29 = vector.load %arg3[%c1, %c0_17] : memref<9x128xf32, #tpu.memory_space<vmem>>, vector<1x128xf32>
    %30 = vector.broadcast %29 : vector<1x128xf32> to vector<256x128xf32>
    %31 = arith.addf %28, %30 : vector<256x128xf32>
    %cst_18 = arith.constant 0.000000e+00 : f32
    %32 = vector.broadcast %cst_18 : f32 to vector<256x128xf32>
    %33 = arith.maximumf %31, %32 : vector<256x128xf32>
    %34 = arith.truncf %33 : vector<256x128xf32> to vector<256x128xbf16>
    %c656 = arith.constant 656 : index
    %c0_19 = arith.constant 0 : index
    %35 = vector.load %arg2[%c656, %c0_19] : memref<2192x128xbf16, #tpu.memory_space<vmem>>, vector<128x128xbf16>
    %cst_20 = arith.constant dense<0.000000e+00> : vector<256x128xf32>
    %36 = tpu.matmul %34, %35, %cst_20 {dimension_numbers = #tpu.dot_dimension_numbers<[1], [0], [0], [1], [0, 0, 1, 1], [], []>} : vector<256x128xbf16>, vector<128x128xbf16>, vector<256x128xf32> -> vector<256x128xf32>
    %c784 = arith.constant 784 : index
    %c0_21 = arith.constant 0 : index
    %37 = vector.load %arg2[%c784, %c0_21] : memref<2192x128xbf16, #tpu.memory_space<vmem>>, vector<128x128xbf16>
    %cst_22 = arith.constant dense<0.000000e+00> : vector<256x128xf32>
    %38 = tpu.matmul %34, %37, %cst_22 {dimension_numbers = #tpu.dot_dimension_numbers<[1], [0], [0], [1], [0, 0, 1, 1], [], []>} : vector<256x128xbf16>, vector<128x128xbf16>, vector<256x128xf32> -> vector<256x128xf32>
    %c254_i32_23 = arith.constant 254 : i32
    %39 = tpu.dynamic_rotate %38 by %c254_i32_23 dim 0 : vector<256x128xf32>, i32 -> vector<256x128xf32>
    %40 = arith.addf %36, %39 : vector<256x128xf32>
    %c912 = arith.constant 912 : index
    %c0_24 = arith.constant 0 : index
    %41 = vector.load %arg2[%c912, %c0_24] : memref<2192x128xbf16, #tpu.memory_space<vmem>>, vector<128x128xbf16>
    %cst_25 = arith.constant dense<0.000000e+00> : vector<256x128xf32>
    %42 = tpu.matmul %34, %41, %cst_25 {dimension_numbers = #tpu.dot_dimension_numbers<[1], [0], [0], [1], [0, 0, 1, 1], [], []>} : vector<256x128xbf16>, vector<128x128xbf16>, vector<256x128xf32> -> vector<256x128xf32>
    %c252_i32_26 = arith.constant 252 : i32
    %43 = tpu.dynamic_rotate %42 by %c252_i32_26 dim 0 : vector<256x128xf32>, i32 -> vector<256x128xf32>
    %44 = arith.addf %40, %43 : vector<256x128xf32>
    %c2 = arith.constant 2 : index
    %c0_27 = arith.constant 0 : index
    %45 = vector.load %arg3[%c2, %c0_27] : memref<9x128xf32, #tpu.memory_space<vmem>>, vector<1x128xf32>
    %46 = vector.broadcast %45 : vector<1x128xf32> to vector<256x128xf32>
    %47 = arith.addf %44, %46 : vector<256x128xf32>
    %cst_28 = arith.constant 0.000000e+00 : f32
    %48 = vector.broadcast %cst_28 : f32 to vector<256x128xf32>
    %49 = arith.maximumf %47, %48 : vector<256x128xf32>
    %50 = arith.truncf %49 : vector<256x128xf32> to vector<256x128xbf16>
    %c1040 = arith.constant 1040 : index
    %c0_29 = arith.constant 0 : index
    %51 = vector.load %arg2[%c1040, %c0_29] : memref<2192x128xbf16, #tpu.memory_space<vmem>>, vector<128x128xbf16>
    %cst_30 = arith.constant dense<0.000000e+00> : vector<256x128xf32>
    %52 = tpu.matmul %50, %51, %cst_30 {dimension_numbers = #tpu.dot_dimension_numbers<[1], [0], [0], [1], [0, 0, 1, 1], [], []>} : vector<256x128xbf16>, vector<128x128xbf16>, vector<256x128xf32> -> vector<256x128xf32>
    %c1168 = arith.constant 1168 : index
    %c0_31 = arith.constant 0 : index
    %53 = vector.load %arg2[%c1168, %c0_31] : memref<2192x128xbf16, #tpu.memory_space<vmem>>, vector<128x128xbf16>
    %cst_32 = arith.constant dense<0.000000e+00> : vector<256x128xf32>
    %54 = tpu.matmul %50, %53, %cst_32 {dimension_numbers = #tpu.dot_dimension_numbers<[1], [0], [0], [1], [0, 0, 1, 1], [], []>} : vector<256x128xbf16>, vector<128x128xbf16>, vector<256x128xf32> -> vector<256x128xf32>
    %c253_i32_33 = arith.constant 253 : i32
    %55 = tpu.dynamic_rotate %54 by %c253_i32_33 dim 0 : vector<256x128xf32>, i32 -> vector<256x128xf32>
    %56 = arith.addf %52, %55 : vector<256x128xf32>
    %c1296 = arith.constant 1296 : index
    %c0_34 = arith.constant 0 : index
    %57 = vector.load %arg2[%c1296, %c0_34] : memref<2192x128xbf16, #tpu.memory_space<vmem>>, vector<128x128xbf16>
    %cst_35 = arith.constant dense<0.000000e+00> : vector<256x128xf32>
    %58 = tpu.matmul %50, %57, %cst_35 {dimension_numbers = #tpu.dot_dimension_numbers<[1], [0], [0], [1], [0, 0, 1, 1], [], []>} : vector<256x128xbf16>, vector<128x128xbf16>, vector<256x128xf32> -> vector<256x128xf32>
    %c250_i32 = arith.constant 250 : i32
    %59 = tpu.dynamic_rotate %58 by %c250_i32 dim 0 : vector<256x128xf32>, i32 -> vector<256x128xf32>
    %60 = arith.addf %56, %59 : vector<256x128xf32>
    %c3 = arith.constant 3 : index
    %c0_36 = arith.constant 0 : index
    %61 = vector.load %arg3[%c3, %c0_36] : memref<9x128xf32, #tpu.memory_space<vmem>>, vector<1x128xf32>
    %62 = vector.broadcast %61 : vector<1x128xf32> to vector<256x128xf32>
    %63 = arith.addf %60, %62 : vector<256x128xf32>
    %cst_37 = arith.constant 0.000000e+00 : f32
    %64 = vector.broadcast %cst_37 : f32 to vector<256x128xf32>
    %65 = arith.maximumf %63, %64 : vector<256x128xf32>
    %66 = arith.truncf %65 : vector<256x128xf32> to vector<256x128xbf16>
    %c1424 = arith.constant 1424 : index
    %c0_38 = arith.constant 0 : index
    %67 = vector.load %arg2[%c1424, %c0_38] : memref<2192x128xbf16, #tpu.memory_space<vmem>>, vector<128x128xbf16>
    %cst_39 = arith.constant dense<0.000000e+00> : vector<256x128xf32>
    %68 = tpu.matmul %66, %67, %cst_39 {dimension_numbers = #tpu.dot_dimension_numbers<[1], [0], [0], [1], [0, 0, 1, 1], [], []>} : vector<256x128xbf16>, vector<128x128xbf16>, vector<256x128xf32> -> vector<256x128xf32>
    %c4 = arith.constant 4 : index
    %c0_40 = arith.constant 0 : index
    %69 = vector.load %arg3[%c4, %c0_40] : memref<9x128xf32, #tpu.memory_space<vmem>>, vector<1x128xf32>
    %70 = vector.broadcast %69 : vector<1x128xf32> to vector<256x128xf32>
    %71 = arith.addf %68, %70 : vector<256x128xf32>
    %cst_41 = arith.constant 0.000000e+00 : f32
    %72 = vector.broadcast %cst_41 : f32 to vector<256x128xf32>
    %73 = arith.maximumf %71, %72 : vector<256x128xf32>
    %74 = arith.truncf %73 : vector<256x128xf32> to vector<256x128xbf16>
    %c1552 = arith.constant 1552 : index
    %c0_42 = arith.constant 0 : index
    %75 = vector.load %arg2[%c1552, %c0_42] : memref<2192x128xbf16, #tpu.memory_space<vmem>>, vector<128x128xbf16>
    %cst_43 = arith.constant dense<0.000000e+00> : vector<256x128xf32>
    %76 = tpu.matmul %74, %75, %cst_43 {dimension_numbers = #tpu.dot_dimension_numbers<[1], [0], [0], [1], [0, 0, 1, 1], [], []>} : vector<256x128xbf16>, vector<128x128xbf16>, vector<256x128xf32> -> vector<256x128xf32>
    %c5 = arith.constant 5 : index
    %c0_44 = arith.constant 0 : index
    %77 = vector.load %arg3[%c5, %c0_44] : memref<9x128xf32, #tpu.memory_space<vmem>>, vector<1x128xf32>
    %78 = vector.broadcast %77 : vector<1x128xf32> to vector<256x128xf32>
    %79 = arith.addf %76, %78 : vector<256x128xf32>
    %cst_45 = arith.constant 0.000000e+00 : f32
    %80 = vector.broadcast %cst_45 : f32 to vector<256x128xf32>
    %81 = arith.maximumf %79, %80 : vector<256x128xf32>
    %82 = arith.truncf %81 : vector<256x128xf32> to vector<256x128xbf16>
    %83 = arith.extf %82 : vector<256x128xbf16> to vector<256x128xf32>
    %84 = vector.shape_cast %83 : vector<256x128xf32> to vector<4x64x128xf32>
    %85 = tpu.iota {dimensions = array<i32: 1>} : vector<4x64x128xi32>
    %c50_i32 = arith.constant 50 : i32
    %86 = vector.broadcast %c50_i32 : i32 to vector<4x64x128xi32>
    %87 = arith.cmpi slt, %85, %86 : vector<4x64x128xi32>
    %88 = arith.extui %87 : vector<4x64x128xi1> to vector<4x64x128xi32>
    %89 = arith.sitofp %88 : vector<4x64x128xi32> to vector<4x64x128xf32>
    %90 = arith.mulf %84, %89 : vector<4x64x128xf32>
    %cst_46 = arith.constant dense<0.000000e+00> : vector<4x128xf32>
    %91 = vector.multi_reduction <add>, %90, %cst_46 [1] : vector<4x64x128xf32> to vector<4x128xf32>
    %cst_47 = arith.constant 2.000000e-02 : f32
    %92 = vector.broadcast %cst_47 : f32 to vector<4x128xf32>
    %93 = arith.mulf %91, %92 : vector<4x128xf32>
    %94 = vector.shape_cast %93 : vector<4x128xf32> to vector<4x1x128xf32>
    %95 = vector.broadcast %94 : vector<4x1x128xf32> to vector<4x64x128xf32>
    %96 = arith.subf %84, %95 : vector<4x64x128xf32>
    %97 = arith.mulf %96, %89 : vector<4x64x128xf32>
    %98 = arith.mulf %97, %97 : vector<4x64x128xf32>
    %cst_48 = arith.constant dense<0.000000e+00> : vector<4x128xf32>
    %99 = vector.multi_reduction <add>, %98, %cst_48 [1] : vector<4x64x128xf32> to vector<4x128xf32>
    %cst_49 = arith.constant 2.000000e-02 : f32
    %100 = vector.broadcast %cst_49 : f32 to vector<4x128xf32>
    %101 = arith.mulf %99, %100 : vector<4x128xf32>
    %cst_50 = arith.constant 9.99999974E-6 : f32
    %102 = vector.broadcast %cst_50 : f32 to vector<4x128xf32>
    %103 = arith.addf %101, %102 : vector<4x128xf32>
    %104 = math.sqrt %103 : vector<4x128xf32>
    %105 = arith.truncf %93 : vector<4x128xf32> to vector<4x128xbf16>
    %c1680 = arith.constant 1680 : index
    %c0_51 = arith.constant 0 : index
    %106 = vector.load %arg2[%c1680, %c0_51] : memref<2192x128xbf16, #tpu.memory_space<vmem>>, vector<128x128xbf16>
    %cst_52 = arith.constant dense<0.000000e+00> : vector<4x128xf32>
    %107 = tpu.matmul %105, %106, %cst_52 {dimension_numbers = #tpu.dot_dimension_numbers<[1], [0], [0], [1], [0, 0, 1, 1], [], []>} : vector<4x128xbf16>, vector<128x128xbf16>, vector<4x128xf32> -> vector<4x128xf32>
    %108 = arith.truncf %104 : vector<4x128xf32> to vector<4x128xbf16>
    %c1808 = arith.constant 1808 : index
    %c0_53 = arith.constant 0 : index
    %109 = vector.load %arg2[%c1808, %c0_53] : memref<2192x128xbf16, #tpu.memory_space<vmem>>, vector<128x128xbf16>
    %cst_54 = arith.constant dense<0.000000e+00> : vector<4x128xf32>
    %110 = tpu.matmul %108, %109, %cst_54 {dimension_numbers = #tpu.dot_dimension_numbers<[1], [0], [0], [1], [0, 0, 1, 1], [], []>} : vector<4x128xbf16>, vector<128x128xbf16>, vector<4x128xf32> -> vector<4x128xf32>
    %111 = arith.addf %107, %110 : vector<4x128xf32>
    %c6 = arith.constant 6 : index
    %c0_55 = arith.constant 0 : index
    %112 = vector.load %arg3[%c6, %c0_55] : memref<9x128xf32, #tpu.memory_space<vmem>>, vector<1x128xf32>
    %113 = vector.broadcast %112 : vector<1x128xf32> to vector<4x128xf32>
    %114 = arith.addf %111, %113 : vector<4x128xf32>
    %cst_56 = arith.constant 0.000000e+00 : f32
    %115 = vector.broadcast %cst_56 : f32 to vector<4x128xf32>
    %116 = arith.maximumf %114, %115 : vector<4x128xf32>
    %117 = arith.truncf %116 : vector<4x128xf32> to vector<4x128xbf16>
    %c1936 = arith.constant 1936 : index
    %c0_57 = arith.constant 0 : index
    %118 = vector.load %arg2[%c1936, %c0_57] : memref<2192x128xbf16, #tpu.memory_space<vmem>>, vector<128x128xbf16>
    %cst_58 = arith.constant dense<0.000000e+00> : vector<4x128xf32>
    %119 = tpu.matmul %117, %118, %cst_58 {dimension_numbers = #tpu.dot_dimension_numbers<[1], [0], [0], [1], [0, 0, 1, 1], [], []>} : vector<4x128xbf16>, vector<128x128xbf16>, vector<4x128xf32> -> vector<4x128xf32>
    %c7 = arith.constant 7 : index
    %c0_59 = arith.constant 0 : index
    %120 = vector.load %arg3[%c7, %c0_59] : memref<9x128xf32, #tpu.memory_space<vmem>>, vector<1x128xf32>
    %121 = vector.broadcast %120 : vector<1x128xf32> to vector<4x128xf32>
    %122 = arith.addf %119, %121 : vector<4x128xf32>
    %cst_60 = arith.constant 0.000000e+00 : f32
    %123 = vector.broadcast %cst_60 : f32 to vector<4x128xf32>
    %124 = arith.maximumf %122, %123 : vector<4x128xf32>
    %125 = arith.truncf %124 : vector<4x128xf32> to vector<4x128xbf16>
    %c2064 = arith.constant 2064 : index
    %c0_61 = arith.constant 0 : index
    %126 = vector.load %arg2[%c2064, %c0_61] : memref<2192x128xbf16, #tpu.memory_space<vmem>>, vector<128x128xbf16>
    %cst_62 = arith.constant dense<0.000000e+00> : vector<4x128xf32>
    %127 = tpu.matmul %125, %126, %cst_62 {dimension_numbers = #tpu.dot_dimension_numbers<[1], [0], [0], [1], [0, 0, 1, 1], [], []>} : vector<4x128xbf16>, vector<128x128xbf16>, vector<4x128xf32> -> vector<4x128xf32>
    %c8 = arith.constant 8 : index
    %c0_63 = arith.constant 0 : index
    %128 = vector.load %arg3[%c8, %c0_63] : memref<9x128xf32, #tpu.memory_space<vmem>>, vector<1x128xf32>
    %129 = vector.broadcast %128 : vector<1x128xf32> to vector<4x128xf32>
    %130 = arith.addf %127, %129 : vector<4x128xf32>
    %c0_64 = arith.constant 0 : index
    %c0_65 = arith.constant 0 : index
    %c0_66 = arith.constant 0 : index
    %131 = vector.load %arg4[%c0_64, %c0_65, %c0_66] : memref<1x4x128xf32, #tpu.memory_space<vmem>>, vector<1x4x128xf32>
    %132 = vector.shape_cast %131 : vector<1x4x128xf32> to vector<4x128xf32>
    %133 = vector.shape_cast %130 : vector<4x128xf32> to vector<1x4x128xf32>
    tpu.vector_store %arg4[%c0_64, %c0_65, %c0_66], %133 {strides = array<i32>} : memref<1x4x128xf32, #tpu.memory_space<vmem>>, vector<1x4x128xf32>,
    return
  }
  func.func @transform_0(%arg0: i32) -> (i32, i32, i32) {
    %c0_i32 = arith.constant 0 : i32
    %c0_i32_0 = arith.constant 0 : i32
    %c0_i32_1 = arith.constant 0 : i32
    return %arg0, %c0_i32, %c0_i32_0 : i32, i32, i32
  }
  func.func @transform_1(%arg0: i32) -> (i32, i32) {
    %c0_i32 = arith.constant 0 : i32
    %c0_i32_0 = arith.constant 0 : i32
    %c0_i32_1 = arith.constant 0 : i32
    return %c0_i32, %c0_i32_0 : i32, i32
  }
  func.func @transform_2(%arg0: i32) -> (i32, i32) {
    %c0_i32 = arith.constant 0 : i32
    %c0_i32_0 = arith.constant 0 : i32
    %c0_i32_1 = arith.constant 0 : i32
    return %c0_i32, %c0_i32_0 : i32, i32
  }
  func.func @transform_3(%arg0: i32) -> (i32, i32, i32) {
    %c0_i32 = arith.constant 0 : i32
    %c0_i32_0 = arith.constant 0 : i32
    %c0_i32_1 = arith.constant 0 : i32
    return %arg0, %c0_i32, %c0_i32_0 : i32, i32, i32
  }
}

</mosaic_0001>

<llo_original>
// kernel: lft_xvector_forward.1
$region0: #{lft_xvector_forward.1}
  #allocation0 [shape = 'u32[]', space=smem, size = 0x4, offset = 0x4, fixed_abs, tag = 'smem constant byte address 0x4 - core index']
  #allocation1 [shape = 'u32[144,128]{1,0:T(1,128)}', space=vmem, size = 0x12000, scoped, tag = 'internal scratch']
  %s0 = inlined_call_operand.vmem [shape: f32[8,64,16], index: 0, kind: input, shape index: {}]
  %s1 = inlined_call_operand.vmem [shape: bf16[2192,128], index: 1, kind: input, shape index: {}]
  %s2 = inlined_call_operand.vmem [shape: f32[9,128], index: 2, kind: input, shape index: {}]
  %s3 = inlined_call_operand.hbm [shape: f32[2,4,128], index: 3, kind: output, shape index: {}]
  %s4 = sld [smem:[#allocation0]]
  $region45: #{lft_xvector_forward.1} parent=0
    _
  %s6 = ssub.s32 1, %s4
  %s7 = scalar_select 0, %s6, %s4
  $region1: #{lft_xvector_forward.1} parent=0
    #allocation2 [shape = 'u8[4096]{0}', space=vmem, size = 0x1000, scoped, tag = 'output window, operand 0']
    #allocation3 [shape = 's32[2]{0}', space=sflag, size = 0x8, scoped, tag = 'scoped memory for lft_xvector_forward.1']
    %8 = vsyncpa [#allocation3], 0
    %s9 = scalar_lea.sflag [#allocation3], 1
    %10 = vsyncpa %s9, 0
    loop: start=0, step=1, limit=4
    $region2: #{lft_xvector_forward.1} parent=1 // loop_pre_header
      _
    $region3: #{lft_xvector_forward.1} parent=1 // loop_header
      %s12 = sphi 0, %s16
      %p13 = scmp.ge.s32.totalorder %s12, 4
      %s22 = sphi 0, %s24
      %s25 = sphi 0, %s22
      %s26 = sphi 0, %s25
      %s42 = sphi 0, %s26
      %s46 = sphi 0, %s46
      %s48 = sphi 0, %s46
      %s49 = sphi 0, %s48
      %s63 = sphi 0, %s49
      %s67 = sphi 0, %s67
      %s69 = sphi 0, %s67
      %s70 = sphi 0, %s69
      %s84 = sphi 0, %s70
      %s90 = sphi 0, %s92
      %s93 = sphi 0, %s90
      %s94 = sphi 0, %s93
      %s110 = sphi 0, %s94
    $region4: #{lft_xvector_forward.1} parent=1 // loop_header_branch
      %15 = sbr.rel (%p13) target = $region8
    $region5: #{lft_xvector_forward.1} parent=1 // loop_body
      %s17 = ssub.s32 %s12, 1
      %s18 = ssub.s32 %s12, 2
      %s19 = sadd.s32 %s12, 1
      %s20 = ssub.s32 %s12, %s19
      %p21 = scmp.eq.s32.totalorder %s20, 0
      %s23 = sadd.s32 %s22, 1
      %s24 = scalar_select %p21, %s22, %s23
      %p27 = pneg %p21
      %p28 = scmp.eq.s32.totalorder %s12, 1
      %p29 = por %p27, %p28
      %p30 = scmp.ne.s32.totalorder %s22, %s25
      %p31 = scmp.eq.s32.totalorder %s12, 0
      %p32 = por %p30, %p31
      %p33 = scmp.ne.s32.totalorder %s22, %s25
      %p34 = scmp.eq.s32.totalorder %s17, 1
      %p35 = por %p33, %p34
      %p36 = scmp.ne.s32.totalorder %s25, %s26
      %p37 = scmp.eq.s32.totalorder %s17, 0
      %p38 = por %p36, %p37
      %p39 = scmp.ne.s32.totalorder %s25, %s26
      %p40 = scmp.eq.s32.totalorder %s18, 1
      %p41 = por %p39, %p40
      %p43 = scmp.ne.s32.totalorder %s26, %s42
      %p44 = scmp.eq.s32.totalorder %s18, 0
      %p45 = por %p43, %p44
      %s47 = sadd.s32 %s46, 1
      %p50 = scmp.eq.s32.totalorder %s12, 1
      %p51 = scmp.ne.s32.totalorder %s46, %s48
      %p52 = scmp.eq.s32.totalorder %s12, 0
      %p53 = por %p51, %p52
      %p54 = scmp.ne.s32.totalorder %s46, %s48
      %p55 = scmp.eq.s32.totalorder %s17, 1
      %p56 = por %p54, %p55
      %p57 = scmp.ne.s32.totalorder %s48, %s49
      %p58 = scmp.eq.s32.totalorder %s17, 0
      %p59 = por %p57, %p58
      %p60 = scmp.ne.s32.totalorder %s48, %s49
      %p61 = scmp.eq.s32.totalorder %s18, 1
      %p62 = por %p60, %p61
      %p64 = scmp.ne.s32.totalorder %s49, %s63
      %p65 = scmp.eq.s32.totalorder %s18, 0
      %p66 = por %p64, %p65
      %s68 = sadd.s32 %s67, 1
      %p71 = scmp.eq.s32.totalorder %s12, 1
      %p72 = scmp.ne.s32.totalorder %s67, %s69
      %p73 = scmp.eq.s32.totalorder %s12, 0
      %p74 = por %p72, %p73
      %p75 = scmp.ne.s32.totalorder %s67, %s69
      %p76 = scmp.eq.s32.totalorder %s17, 1
      %p77 = por %p75, %p76
      %p78 = scmp.ne.s32.totalorder %s69, %s70
      %p79 = scmp.eq.s32.totalorder %s17, 0
      %p80 = por %p78, %p79
      %p81 = scmp.ne.s32.totalorder %s69, %s70
      %p82 = scmp.eq.s32.totalorder %s18, 1
      %p83 = por %p81, %p82
      %p85 = scmp.ne.s32.totalorder %s70, %s84
      %p86 = scmp.eq.s32.totalorder %s18, 0
      %p87 = por %p85, %p86
      %s88 = ssub.s32 %s12, %s19
      %p89 = scmp.eq.s32.totalorder %s88, 0
      %s91 = sadd.s32 %s90, 1
      %s92 = scalar_select %p89, %s90, %s91
      %p95 = pneg %p89
      %p96 = scmp.eq.s32.totalorder %s12, 1
      %p97 = por %p95, %p96
      %p98 = scmp.ne.s32.totalorder %s90, %s93
      %p99 = scmp.eq.s32.totalorder %s12, 0
      %p100 = por %p98, %p99
      %p101 = scmp.ne.s32.totalorder %s90, %s93
      %p102 = scmp.eq.s32.totalorder %s17, 1
      %p103 = por %p101, %p102
      %p104 = scmp.ne.s32.totalorder %s93, %s94
      %p105 = scmp.eq.s32.totalorder %s17, 0
      %p106 = por %p104, %p105
      %p107 = scmp.ne.s32.totalorder %s93, %s94
      %p108 = scmp.eq.s32.totalorder %s18, 1
      %p109 = por %p107, %p108
      %p111 = scmp.ne.s32.totalorder %s94, %s110
      %p112 = scmp.eq.s32.totalorder %s18, 0
      %p113 = por %p111, %p112
      %p114 = scmp.le.s32.totalorder 1, %s12
      %p115 = scmp.lt.s32.totalorder %s12, 3
      %p116 = pnand %p114, %p115
      %p117 = pneg %p116
      // Predicated region
      $region9: #{lft_xvector_forward.1} parent=5 // pred_check
        _
      $region10: #{lft_xvector_forward.1} parent=5 // pred_check_branch
        %119 = sbr.rel (%p116) target = $region12
      $region11: #{lft_xvector_forward.1} parent=5 // pred_region
        %s120 = ssub.s32 %s12, 1
        // Predicated region
        $region13: #{lft_xvector_forward.1} parent=11 // pred_check
          %p121 = pneg %p59
        $region14: #{lft_xvector_forward.1} parent=11 // pred_check_branch
          %123 = sbr.rel (%p121) target = $region16
        $region15: #{lft_xvector_forward.1} parent=11 // pred_region
          _
        $region16: #{lft_xvector_forward.1} parent=11 // pred_fallthru
          _
        // Predicated region
        $region17: #{lft_xvector_forward.1} parent=11 // pred_check
          %p124 = pneg %p80
        $region18: #{lft_xvector_forward.1} parent=11 // pred_check_branch
          %126 = sbr.rel (%p124) target = $region20
        $region19: #{lft_xvector_forward.1} parent=11 // pred_region
          _
        $region20: #{lft_xvector_forward.1} parent=11 // pred_fallthru
          _
      $region12: #{lft_xvector_forward.1} parent=5 // pred_fallthru
        _
      %p127 = scmp.lt.s32.totalorder %s12, 2
      // Predicated region
      $region21: #{lft_xvector_forward.1} parent=5 // pred_check
        %p128 = pneg %p127
      $region22: #{lft_xvector_forward.1} parent=5 // pred_check_branch
        %130 = sbr.rel (%p128) target = $region24
      $region23: #{lft_xvector_forward.1} parent=5 // pred_region
        // Predicated region
        $region25: #{lft_xvector_forward.1} parent=23 // pred_check
          %p131 = pneg %p32
        $region26: #{lft_xvector_forward.1} parent=23 // pred_check_branch
          %133 = sbr.rel (%p131) target = $region28
        $region27: #{lft_xvector_forward.1} parent=23 // pred_region
          %s134 = smul.u32 4, %s12
          %p135 = scmp.lt.s32.totalorder %s134, 7
          %s136 = scalar_select %p135, %s134, 7
          %s137 = smul.addr %s136, 8
          %s138 = smul.addr %s137, 8
          %s139 = scalar_lea.vmem %s0, %s138
          %s140 = smul.u32 4, %s12
        $region28: #{lft_xvector_forward.1} parent=23 // pred_fallthru
          _
      $region24: #{lft_xvector_forward.1} parent=5 // pred_fallthru
        _
      %p141 = scmp.le.s32.totalorder 1, %s12
      %p142 = scmp.lt.s32.totalorder %s12, 3
      %p143 = pnand %p141, %p142
      %p144 = pneg %p143
      // Predicated region
      $region29: #{lft_xvector_forward.1} parent=5 // pred_check
        _
      $region30: #{lft_xvector_forward.1} parent=5 // pred_check_branch
        %146 = sbr.rel (%p143) target = $region32
      $region31: #{lft_xvector_forward.1} parent=5 // pred_region
        %s147 = ssub.s32 %s12, 1
        %s148 = smul.u32 4, %s17
        %p149 = scmp.lt.s32.totalorder %s148, 7
        %s150 = scalar_select %p149, %s148, 7
        %s151 = smul.addr %s150, 8
        %s152 = smul.addr %s151, 8
        %s153 = scalar_lea.vmem %s0, %s152
        %p154 = pneg %p38
        %p155 = pneg %p35
        %p156 = pneg %p59
        %p157 = pneg %p56
        %p158 = pneg %p80
        %p159 = pneg %p77
        %p160 = pneg %p106
        %p161 = pneg %p103
        %s162 = sand.u32 %s93, 1
        %s163 = scalar_lea.sflag [#allocation3], %s162
        %s164 = sand.u32 %s93, 1
        %s165 = smul.addr %s164, 4
        %s166 = scalar_lea.vmem [#allocation2], %s165
        %s167 = smul.u32 4, %s17
        %p168 = scmp.lt.s32.totalorder %s167, 7
        %s169 = scalar_select %p168, %s167, 7
        %s170 = smul.addr %s169, 8
        %s171 = smul.addr %s170, 8
        %s172 = scalar_lea.vmem %s0, %s171
        %s173 = smul.u32 4, %s17
        %v175 = vld [vmem:[%s172] sm:$0xff]
        %v176 = vld [vmem:[%s172 + $0x8] sm:$0xff]
        %v177 = vld [vmem:[%s172 + $0x10] sm:$0xff]
        %v178 = vld [vmem:[%s172 + $0x18] sm:$0xff]
        %v179 = vld [vmem:[%s172 + $0x20] sm:$0xff]
        %v180 = vld [vmem:[%s172 + $0x28] sm:$0xff]
        %v181 = vld [vmem:[%s172 + $0x30] sm:$0xff]
        %v182 = vld [vmem:[%s172 + $0x38] sm:$0xff]
        %v183 = vld [vmem:[%s172 + $0x40] sm:$0xff]
        %v184 = vld [vmem:[%s172 + $0x48] sm:$0xff]
        %v185 = vld [vmem:[%s172 + $0x50] sm:$0xff]
        %v186 = vld [vmem:[%s172 + $0x58] sm:$0xff]
        %v187 = vld [vmem:[%s172 + $0x60] sm:$0xff]
        %v188 = vld [vmem:[%s172 + $0x68] sm:$0xff]
        %v189 = vld [vmem:[%s172 + $0x70] sm:$0xff]
        %v190 = vld [vmem:[%s172 + $0x78] sm:$0xff]
        %v191 = vld [vmem:[%s172 + $0x80] sm:$0xff]
        %v192 = vld [vmem:[%s172 + $0x88] sm:$0xff]
        %v193 = vld [vmem:[%s172 + $0x90] sm:$0xff]
        %v194 = vld [vmem:[%s172 + $0x98] sm:$0xff]
        %v195 = vld [vmem:[%s172 + $0xa0] sm:$0xff]
        %v196 = vld [vmem:[%s172 + $0xa8] sm:$0xff]
        %v197 = vld [vmem:[%s172 + $0xb0] sm:$0xff]
        %v198 = vld [vmem:[%s172 + $0xb8] sm:$0xff]
        %v199 = vld [vmem:[%s172 + $0xc0] sm:$0xff]
        %v200 = vld [vmem:[%s172 + $0xc8] sm:$0xff]
        %v201 = vld [vmem:[%s172 + $0xd0] sm:$0xff]
        %v202 = vld [vmem:[%s172 + $0xd8] sm:$0xff]
        %v203 = vld [vmem:[%s172 + $0xe0] sm:$0xff]
        %v204 = vld [vmem:[%s172 + $0xe8] sm:$0xff]
        %v205 = vld [vmem:[%s172 + $0xf0] sm:$0xff]
        %v206 = vld [vmem:[%s172 + $0xf8] sm:$0xff]
        %v207 = vpack.c.bf16 %v176, %v175
        %v208 = vpack.c.bf16 %v178, %v177
        %v209 = vpack.c.bf16 %v180, %v179
        %v210 = vpack.c.bf16 %v182, %v181
        %v211 = vpack.c.bf16 %v184, %v183
        %v212 = vpack.c.bf16 %v186, %v185
        %v213 = vpack.c.bf16 %v188, %v187
        %v214 = vpack.c.bf16 %v190, %v189
        %v215 = vpack.c.bf16 %v192, %v191
        %v216 = vpack.c.bf16 %v194, %v193
        %v217 = vpack.c.bf16 %v196, %v195
        %v218 = vpack.c.bf16 %v198, %v197
        %v219 = vpack.c.bf16 %v200, %v199
        %v220 = vpack.c.bf16 %v202, %v201
        %v221 = vpack.c.bf16 %v204, %v203
        %v222 = vpack.c.bf16 %v206, %v205
        %v223 = vld [vmem:[%s1] sm:$0xf]
        %v224 = vld [vmem:[%s1 + $0x4] sm:$0xf]
        %v225 = vld [vmem:[%s2] sm:$0x1]
        %v226 = vlaneseq
        %v227 = vshrl.u32 %v226, 7
        %v228 = vsub.s32 0, %v227
        %v229 = vrot.slane %v225, %v228
        %v232 = vunpack.c.l.b16 %v223
        %v233 = vunpack.c.l.b16 %v224
        %v234 = vpack.c.b16 %v233, %v232
        %vm236 = vcmask 130048
        %v238 = vsel %vm236, %v207, 0
        %v241 = vsel %vm236, %v208, 0
        %v244 = vsel %vm236, %v209, 0
        %v247 = vsel %vm236, %v210, 0
        %v250 = vsel %vm236, %v211, 0
        %v253 = vsel %vm236, %v212, 0
        %v256 = vsel %vm236, %v213, 0
        %v259 = vsel %vm236, %v214, 0
        %v262 = vsel %vm236, %v215, 0
        %v265 = vsel %vm236, %v216, 0
        %v268 = vsel %vm236, %v217, 0
        %v271 = vsel %vm236, %v218, 0
        %v274 = vsel %vm236, %v219, 0
        %v277 = vsel %vm236, %v220, 0
        %v280 = vsel %vm236, %v221, 0
        %v283 = vsel %vm236, %v222, 0
        %285 = vmatprep.subr.bf16.mxu0 0
        %286 = vmatpush1.bf16.msra.mxu0 %v234
        %287 = vmatprep.subr.bf16.mxu0 0
        %288 = vmatpush1.bf16.msra.mxu0 0
        %289 = vmatprep.subr.bf16.mxu0 0
        %290 = vmatpush1.bf16.msra.mxu0 0
        %291 = vmatprep.subr.bf16.mxu0 0
        %292 = vmatpush1.bf16.msra.mxu0 0
        %293 = vmatprep.subr.bf16.mxu0 0
        %294 = vmatpush1.bf16.msra.mxu0 0
        %295 = vmatprep.subr.bf16.mxu0 0
        %296 = vmatpush1.bf16.msra.mxu0 0
        %297 = vmatprep.subr.bf16.mxu0 0
        %298 = vmatpush1.bf16.msra.mxu0 0
        %299 = vmatprep.subr.bf16.mxu0 0
        %300 = vmatpush1.bf16.msra.mxu0 0
        %301 = vmatprep.subr.bf16.mxu0 0
        %302 = vmatpush1.bf16.msra.mxu0 0
        %303 = vmatprep.subr.bf16.mxu0 0
        %304 = vmatpush1.bf16.msra.mxu0 0
        %305 = vmatprep.subr.bf16.mxu0 0
        %306 = vmatpush1.bf16.msra.mxu0 0
        %307 = vmatprep.subr.bf16.mxu0 0
        %308 = vmatpush1.bf16.msra.mxu0 0
        %309 = vmatprep.subr.bf16.mxu0 0
        %310 = vmatpush1.bf16.msra.mxu0 0
        %311 = vmatprep.subr.bf16.mxu0 0
        %312 = vmatpush1.bf16.msra.mxu0 0
        %313 = vmatprep.subr.bf16.mxu0 0
        %314 = vmatpush1.bf16.msra.mxu0 0
        %315 = vmatprep.subr.bf16.mxu0 0
        %316 = vmatpush1.bf16.msra.mxu0 0
        %317 = vmatprep.mubr.bf16.mxu0 0
        %318 = vmatmul.mubr.bf16.gmra.mrb[0].mxu0 %v238
        %v319 = vpop.f32.mrb[0].mxu0
        %v320 = vadd.f32 %v229, %v319
        %v321 = vpop.f32.mrb[0].mxu0
        %v322 = vpop.f32.mrb[0].mxu0
        %v323 = vadd.f32 %v229, %v322
        %v324 = vpop.f32.mrb[0].mxu0
        %325 = vmatprep.mubr.bf16.mxu0 0
        %326 = vmatmul.mubr.bf16.gmra.mrb[0].mxu0 %v241
        %v327 = vpop.f32.mrb[0].mxu0
        %v328 = vadd.f32 %v229, %v327
        %v329 = vpop.f32.mrb[0].mxu0
        %v330 = vpop.f32.mrb[0].mxu0
        %v331 = vadd.f32 %v229, %v330
        %v332 = vpop.f32.mrb[0].mxu0
        %333 = vmatprep.mubr.bf16.mxu0 0
        %334 = vmatmul.mubr.bf16.gmra.mrb[0].mxu0 %v244
        %v335 = vpop.f32.mrb[0].mxu0
        %v336 = vadd.f32 %v229, %v335
        %v337 = vpop.f32.mrb[0].mxu0
        %v338 = vpop.f32.mrb[0].mxu0
        %v339 = vadd.f32 %v229, %v338
        %v340 = vpop.f32.mrb[0].mxu0
        %341 = vmatprep.mubr.bf16.mxu0 0
        %342 = vmatmul.mubr.bf16.gmra.mrb[0].mxu0 %v247
        %v343 = vpop.f32.mrb[0].mxu0
        %v344 = vadd.f32 %v229, %v343
        %v345 = vpop.f32.mrb[0].mxu0
        %v346 = vpop.f32.mrb[0].mxu0
        %v347 = vadd.f32 %v229, %v346
        %v348 = vpop.f32.mrb[0].mxu0
        %349 = vmatprep.mubr.bf16.mxu0 0
        %350 = vmatmul.mubr.bf16.gmra.mrb[0].mxu0 %v250
        %v351 = vpop.f32.mrb[0].mxu0
        %v352 = vadd.f32 %v229, %v351
        %v353 = vpop.f32.mrb[0].mxu0
        %v354 = vpop.f32.mrb[0].mxu0
        %v355 = vadd.f32 %v229, %v354
        %v356 = vpop.f32.mrb[0].mxu0
        %357 = vmatprep.mubr.bf16.mxu0 0
        %358 = vmatmul.mubr.bf16.gmra.mrb[0].mxu0 %v253
        %v359 = vpop.f32.mrb[0].mxu0
        %v360 = vadd.f32 %v229, %v359
        %v361 = vpop.f32.mrb[0].mxu0
        %v362 = vpop.f32.mrb[0].mxu0
        %v363 = vadd.f32 %v229, %v362
        %v364 = vpop.f32.mrb[0].mxu0
        %365 = vmatprep.mubr.bf16.mxu0 0
        %366 = vmatmul.mubr.bf16.gmra.mrb[0].mxu0 %v256
        %v367 = vpop.f32.mrb[0].mxu0
        %v368 = vadd.f32 %v229, %v367
        %v369 = vpop.f32.mrb[0].mxu0
        %v370 = vpop.f32.mrb[0].mxu0
        %v371 = vadd.f32 %v229, %v370
        %v372 = vpop.f32.mrb[0].mxu0
        %373 = vmatprep.mubr.bf16.mxu0 0
        %374 = vmatmul.mubr.bf16.gmra.mrb[0].mxu0 %v259
        %v375 = vpop.f32.mrb[0].mxu0
        %v376 = vadd.f32 %v229, %v375
        %v377 = vpop.f32.mrb[0].mxu0
        %v378 = vpop.f32.mrb[0].mxu0
        %v379 = vadd.f32 %v229, %v378
        %v380 = vpop.f32.mrb[0].mxu0
        %381 = vmatprep.mubr.bf16.mxu0 0
        %382 = vmatmul.mubr.bf16.gmra.mrb[0].mxu0 %v262
        %v383 = vpop.f32.mrb[0].mxu0
        %v384 = vadd.f32 %v229, %v383
        %v385 = vpop.f32.mrb[0].mxu0
        %v386 = vpop.f32.mrb[0].mxu0
        %v387 = vadd.f32 %v229, %v386
        %v388 = vpop.f32.mrb[0].mxu0
        %389 = vmatprep.mubr.bf16.mxu0 0
        %390 = vmatmul.mubr.bf16.gmra.mrb[0].mxu0 %v265
        %v391 = vpop.f32.mrb[0].mxu0
        %v392 = vadd.f32 %v229, %v391
        %v393 = vpop.f32.mrb[0].mxu0
        %v394 = vpop.f32.mrb[0].mxu0
        %v395 = vadd.f32 %v229, %v394
        %v396 = vpop.f32.mrb[0].mxu0
        %397 = vmatprep.mubr.bf16.mxu0 0
        %398 = vmatmul.mubr.bf16.gmra.mrb[0].mxu0 %v268
        %v399 = vpop.f32.mrb[0].mxu0
        %v400 = vadd.f32 %v229, %v399
        %v401 = vpop.f32.mrb[0].mxu0
        %v402 = vpop.f32.mrb[0].mxu0
        %v403 = vadd.f32 %v229, %v402
        %v404 = vpop.f32.mrb[0].mxu0
        %405 = vmatprep.mubr.bf16.mxu0 0
        %406 = vmatmul.mubr.bf16.gmra.mrb[0].mxu0 %v271
        %v407 = vpop.f32.mrb[0].mxu0
        %v408 = vadd.f32 %v229, %v407
        %v409 = vpop.f32.mrb[0].mxu0
        %v410 = vpop.f32.mrb[0].mxu0
        %v411 = vadd.f32 %v229, %v410
        %v412 = vpop.f32.mrb[0].mxu0
        %413 = vmatprep.mubr.bf16.mxu0 0
        %414 = vmatmul.mubr.bf16.gmra.mrb[0].mxu0 %v274
        %v415 = vpop.f32.mrb[0].mxu0
        %v416 = vadd.f32 %v229, %v415
        %v417 = vpop.f32.mrb[0].mxu0
        %v418 = vpop.f32.mrb[0].mxu0
        %v419 = vadd.f32 %v229, %v418
        %v420 = vpop.f32.mrb[0].mxu0
        %421 = vmatprep.mubr.bf16.mxu0 0
        %422 = vmatmul.mubr.bf16.gmra.mrb[0].mxu0 %v277
        %v423 = vpop.f32.mrb[0].mxu0
        %v424 = vadd.f32 %v229, %v423
        %v425 = vpop.f32.mrb[0].mxu0
        %v426 = vpop.f32.mrb[0].mxu0
        %v427 = vadd.f32 %v229, %v426
        %v428 = vpop.f32.mrb[0].mxu0
        %429 = vmatprep.mubr.bf16.mxu0 0
        %430 = vmatmul.mubr.bf16.gmra.mrb[0].mxu0 %v280
        %v431 = vpop.f32.mrb[0].mxu0
        %v432 = vadd.f32 %v229, %v431
        %v433 = vpop.f32.mrb[0].mxu0
        %v434 = vpop.f32.mrb[0].mxu0
        %v435 = vadd.f32 %v229, %v434
        %v436 = vpop.f32.mrb[0].mxu0
        %437 = vmatprep.mubr.bf16.mxu0 0
        %438 = vmatmul.mubr.bf16.gmra.mrb[0].mxu0 %v283
        %v439 = vpop.f32.mrb[0].mxu0
        %v440 = vadd.f32 %v229, %v439
        %v441 = vpop.f32.mrb[0].mxu0
        %v442 = vpop.f32.mrb[0].mxu0
        %v443 = vadd.f32 %v229, %v442
        %v444 = vpop.f32.mrb[0].mxu0
        %445 = vdwg.mxu0
        %v446 = vmax.f32 %v320, 0.0
        %v447 = vmax.f32 %v323, 0.0
        %v448 = vmax.f32 %v328, 0.0
        %v449 = vmax.f32 %v331, 0.0
        %v450 = vmax.f32 %v336, 0.0
        %v451 = vmax.f32 %v339, 0.0
        %v452 = vmax.f32 %v344, 0.0
        %v453 = vmax.f32 %v347, 0.0
        %v454 = vmax.f32 %v352, 0.0
        %v455 = vmax.f32 %v355, 0.0
        %v456 = vmax.f32 %v360, 0.0
        %v457 = vmax.f32 %v363, 0.0
        %v458 = vmax.f32 %v368, 0.0
        %v459 = vmax.f32 %v371, 0.0
        %v460 = vmax.f32 %v376, 0.0
        %v461 = vmax.f32 %v379, 0.0
        %v462 = vmax.f32 %v384, 0.0
        %v463 = vmax.f32 %v387, 0.0
        %v464 = vmax.f32 %v392, 0.0
        %v465 = vmax.f32 %v395, 0.0
        %v466 = vmax.f32 %v400, 0.0
        %v467 = vmax.f32 %v403, 0.0
        %v468 = vmax.f32 %v408, 0.0
        %v469 = vmax.f32 %v411, 0.0
        %v470 = vmax.f32 %v416, 0.0
        %v471 = vmax.f32 %v419, 0.0
        %v472 = vmax.f32 %v424, 0.0
        %v473 = vmax.f32 %v427, 0.0
        %v474 = vmax.f32 %v432, 0.0
        %v475 = vmax.f32 %v435, 0.0
        %v476 = vmax.f32 %v440, 0.0
        %v477 = vmax.f32 %v443, 0.0
        %v478 = vpack.c.bf16 %v447, %v446
        %v479 = vpack.c.bf16 %v449, %v448
        %v480 = vpack.c.bf16 %v451, %v450
        %v481 = vpack.c.bf16 %v453, %v452
        %v482 = vpack.c.bf16 %v455, %v454
        %v483 = vpack.c.bf16 %v457, %v456
        %v484 = vpack.c.bf16 %v459, %v458
        %v485 = vpack.c.bf16 %v461, %v460
        %v486 = vpack.c.bf16 %v463, %v462
        %v487 = vpack.c.bf16 %v465, %v464
        %v488 = vpack.c.bf16 %v467, %v466
        %v489 = vpack.c.bf16 %v469, %v468
        %v490 = vpack.c.bf16 %v471, %v470
        %v491 = vpack.c.bf16 %v473, %v472
        %v492 = vpack.c.bf16 %v475, %v474
        %v493 = vpack.c.bf16 %v477, %v476
        %v494 = vld [vmem:[%s1 + $0x8] sm:$0xf]
        %v495 = vld [vmem:[%s1 + $0xc] sm:$0xf]
        %v496 = vld [vmem:[%s1 + $0x10] sm:$0xf]
        %v497 = vld [vmem:[%s1 + $0x14] sm:$0xf]
        %v498 = vld [vmem:[%s1 + $0x18] sm:$0xf]
        %v499 = vld [vmem:[%s1 + $0x1c] sm:$0xf]
        %v500 = vld [vmem:[%s1 + $0x20] sm:$0xf]
        %v501 = vld [vmem:[%s1 + $0x24] sm:$0xf]
        %v502 = vld [vmem:[%s1 + $0x28] sm:$0xf]
        %v503 = vld [vmem:[%s1 + $0x2c] sm:$0xf]
        %v504 = vld [vmem:[%s1 + $0x30] sm:$0xf]
        %v505 = vld [vmem:[%s1 + $0x34] sm:$0xf]
        %v506 = vld [vmem:[%s1 + $0x38] sm:$0xf]
        %v507 = vld [vmem:[%s1 + $0x3c] sm:$0xf]
        %v508 = vld [vmem:[%s1 + $0x40] sm:$0xf]
        %v509 = vld [vmem:[%s1 + $0x44] sm:$0xf]
        %v510 = vld [vmem:[%s1 + $0x48] sm:$0xf]
        %v511 = vld [vmem:[%s1 + $0x4c] sm:$0xf]
        %v512 = vld [vmem:[%s1 + $0x50] sm:$0xf]
        %v513 = vld [vmem:[%s1 + $0x54] sm:$0xf]
        %v514 = vld [vmem:[%s1 + $0x58] sm:$0xf]
        %v515 = vld [vmem:[%s1 + $0x5c] sm:$0xf]
        %v516 = vld [vmem:[%s1 + $0x60] sm:$0xf]
        %v517 = vld [vmem:[%s1 + $0x64] sm:$0xf]
        %v518 = vld [vmem:[%s1 + $0x68] sm:$0xf]
        %v519 = vld [vmem:[%s1 + $0x6c] sm:$0xf]
        %v520 = vld [vmem:[%s1 + $0x70] sm:$0xf]
        %v521 = vld [vmem:[%s1 + $0x74] sm:$0xf]
        %v522 = vld [vmem:[%s1 + $0x78] sm:$0xf]
        %v523 = vld [vmem:[%s1 + $0x7c] sm:$0xf]
        %v524 = vld [vmem:[%s1 + $0x80] sm:$0xf]
        %v525 = vld [vmem:[%s1 + $0x84] sm:$0xf]
        %v542 = vunpack.c.l.b16 %v510
        %v543 = vunpack.c.l.b16 %v511
        %v544 = vunpack.c.l.b16 %v512
        %v545 = vunpack.c.l.b16 %v513
        %v546 = vunpack.c.l.b16 %v514
        %v547 = vunpack.c.l.b16 %v515
        %v548 = vunpack.c.l.b16 %v516
        %v549 = vunpack.c.l.b16 %v517
        %v550 = vunpack.c.l.b16 %v518
        %v551 = vunpack.c.l.b16 %v519
        %v552 = vunpack.c.l.b16 %v520
        %v553 = vunpack.c.l.b16 %v521
        %v554 = vunpack.c.l.b16 %v522
        %v555 = vunpack.c.l.b16 %v523
        %v556 = vunpack.c.l.b16 %v524
        %v557 = vunpack.c.l.b16 %v525
        %v558 = vpack.c.b16 %v543, %v542
        %v559 = vpack.c.b16 %v545, %v544
        %v560 = vpack.c.b16 %v547, %v546
        %v561 = vpack.c.b16 %v549, %v548
        %v562 = vpack.c.b16 %v551, %v550
        %v563 = vpack.c.b16 %v553, %v552
        %v564 = vpack.c.b16 %v555, %v554
        %v565 = vpack.c.b16 %v557, %v556
        %574 = vmatprep.subr.bf16.mxu0 0
        %575 = vmatpush1.bf16.msra.mxu0 %v558
        %576 = vmatprep.subr.bf16.mxu0 0
        %577 = vmatpush1.bf16.msra.mxu0 %v559
        %578 = vmatprep.subr.bf16.mxu0 0
        %579 = vmatpush1.bf16.msra.mxu0 %v560
        %580 = vmatprep.subr.bf16.mxu0 0
        %581 = vmatpush1.bf16.msra.mxu0 %v561
        %582 = vmatprep.subr.bf16.mxu0 0
        %583 = vmatpush1.bf16.msra.mxu0 %v562
        %584 = vmatprep.subr.bf16.mxu0 0
        %585 = vmatpush1.bf16.msra.mxu0 %v563
        %586 = vmatprep.subr.bf16.mxu0 0
        %587 = vmatpush1.bf16.msra.mxu0 %v564
        %588 = vmatprep.subr.bf16.mxu0 0
        %589 = vmatpush1.bf16.msra.mxu0 %v565
        %590 = vmatprep.subr.bf16.mxu0 0
        %591 = vmatpush1.bf16.msra.mxu0 0
        %592 = vmatprep.subr.bf16.mxu0 0
        %593 = vmatpush1.bf16.msra.mxu0 0
        %594 = vmatprep.subr.bf16.mxu0 0
        %595 = vmatpush1.bf16.msra.mxu0 0
        %596 = vmatprep.subr.bf16.mxu0 0
        %597 = vmatpush1.bf16.msra.mxu0 0
        %598 = vmatprep.subr.bf16.mxu0 0
        %599 = vmatpush1.bf16.msra.mxu0 0
        %600 = vmatprep.subr.bf16.mxu0 0
        %601 = vmatpush1.bf16.msra.mxu0 0
        %602 = vmatprep.subr.bf16.mxu0 0
        %603 = vmatpush1.bf16.msra.mxu0 0
        %604 = vmatprep.subr.bf16.mxu0 0
        %605 = vmatpush1.bf16.msra.mxu0 0
        %606 = vmatprep.mubr.bf16.mxu0 0
        %607 = vmatmul.mubr.bf16.gmra.mrb[0].mxu0 %v478
        %v608 = vpop.f32.mrb[0].mxu0
        %v609 = vadd.f32 0.0, %v608
        %v610 = vpop.f32.mrb[0].mxu0
        %v611 = vpop.f32.mrb[0].mxu0
        %v612 = vadd.f32 0.0, %v611
        %v613 = vpop.f32.mrb[0].mxu0
        %614 = vmatprep.mubr.bf16.mxu0 0
        %615 = vmatmul.mubr.bf16.gmra.mrb[0].mxu0 %v479
        %v616 = vpop.f32.mrb[0].mxu0
        %v617 = vadd.f32 0.0, %v616
        %v618 = vpop.f32.mrb[0].mxu0
        %v619 = vpop.f32.mrb[0].mxu0
        %v620 = vadd.f32 0.0, %v619
        %v621 = vpop.f32.mrb[0].mxu0
        %622 = vmatprep.mubr.bf16.mxu0 0
        %623 = vmatmul.mubr.bf16.gmra.mrb[0].mxu0 %v480
        %v624 = vpop.f32.mrb[0].mxu0
        %v625 = vadd.f32 0.0, %v624
        %v626 = vpop.f32.mrb[0].mxu0
        %v627 = vpop.f32.mrb[0].mxu0
        %v628 = vadd.f32 0.0, %v627
        %v629 = vpop.f32.mrb[0].mxu0
        %630 = vmatprep.mubr.bf16.mxu0 0
        %631 = vmatmul.mubr.bf16.gmra.mrb[0].mxu0 %v481
        %v632 = vpop.f32.mrb[0].mxu0
        %v633 = vadd.f32 0.0, %v632
        %v634 = vpop.f32.mrb[0].mxu0
        %v635 = vpop.f32.mrb[0].mxu0
        %v636 = vadd.f32 0.0, %v635
        %v637 = vpop.f32.mrb[0].mxu0
        %638 = vmatprep.mubr.bf16.mxu0 0
        %639 = vmatmul.mubr.bf16.gmra.mrb[0].mxu0 %v482
        %v640 = vpop.f32.mrb[0].mxu0
        %v641 = vadd.f32 0.0, %v640
        %v642 = vpop.f32.mrb[0].mxu0
        %v643 = vpop.f32.mrb[0].mxu0
        %v644 = vadd.f32 0.0, %v643
        %v645 = vpop.f32.mrb[0].mxu0
        %646 = vmatprep.mubr.bf16.mxu0 0
        %647 = vmatmul.mubr.bf16.gmra.mrb[0].mxu0 %v483
        %v648 = vpop.f32.mrb[0].mxu0
        %v649 = vadd.f32 0.0, %v648
        %v650 = vpop.f32.mrb[0].mxu0
        %v651 = vpop.f32.mrb[0].mxu0
        %v652 = vadd.f32 0.0, %v651
        %v653 = vpop.f32.mrb[0].mxu0
        %654 = vmatprep.mubr.bf16.mxu0 0
        %655 = vmatmul.mubr.bf16.gmra.mrb[0].mxu0 %v484
        %v656 = vpop.f32.mrb[0].mxu0
        %v657 = vadd.f32 0.0, %v656
        %v658 = vpop.f32.mrb[0].mxu0
        %v659 = vpop.f32.mrb[0].mxu0
        %v660 = vadd.f32 0.0, %v659
        %v661 = vpop.f32.mrb[0].mxu0
        %662 = vmatprep.mubr.bf16.mxu0 0
        %663 = vmatmul.mubr.bf16.gmra.mrb[0].mxu0 %v485
        %v664 = vpop.f32.mrb[0].mxu0
        %v665 = vadd.f32 0.0, %v664
        %v666 = vpop.f32.mrb[0].mxu0
        %v667 = vpop.f32.mrb[0].mxu0
        %v668 = vadd.f32 0.0, %v667
        %v669 = vpop.f32.mrb[0].mxu0
        %670 = vmatprep.mubr.bf16.mxu0 0
        %671 = vmatmul.mubr.bf16.gmra.mrb[0].mxu0 %v486
        %v672 = vpop.f32.mrb[0].mxu0
        %v673 = vadd.f32 0.0, %v672
        %v674 = vpop.f32.mrb[0].mxu0
        %v675 = vpop.f32.mrb[0].mxu0
        %v676 = vadd.f32 0.0, %v675
        %v677 = vpop.f32.mrb[0].mxu0
        %678 = vmatprep.mubr.bf16.mxu0 0
        %679 = vmatmul.mubr.bf16.gmra.mrb[0].mxu0 %v487
        %v680 = vpop.f32.mrb[0].mxu0
        %v681 = vadd.f32 0.0, %v680
        %v682 = vpop.f32.mrb[0].mxu0
        %v683 = vpop.f32.mrb[0].mxu0
        %v684 = vadd.f32 0.0, %v683
        %v685 = vpop.f32.mrb[0].mxu0
        %686 = vmatprep.mubr.bf16.mxu0 0
        %687 = vmatmul.mubr.bf16.gmra.mrb[0].mxu0 %v488
        %v688 = vpop.f32.mrb[0].mxu0
        %v689 = vadd.f32 0.0, %v688
        %v690 = vpop.f32.mrb[0].mxu0
        %v691 = vpop.f32.mrb[0].mxu0
        %v692 = vadd.f32 0.0, %v691
        %v693 = vpop.f32.mrb[0].mxu0
        %694 = vmatprep.mubr.bf16.mxu0 0
        %695 = vmatmul.mubr.bf16.gmra.mrb[0].mxu0 %v489
        %v696 = vpop.f32.mrb[0].mxu0
        %v697 = vadd.f32 0.0, %v696
        %v698 = vpop.f32.mrb[0].mxu0
        %v699 = vpop.f32.mrb[0].mxu0
        %v700 = vadd.f32 0.0, %v699
        %v701 = vpop.f32.mrb[0].mxu0
        %702 = vmatprep.mubr.bf16.mxu0 0
        %703 = vmatmul.mubr.bf16.gmra.mrb[0].mxu0 %v490
        %v704 = vpop.f32.mrb[0].mxu0
        %v705 = vadd.f32 0.0, %v704
        %v706 = vpop.f32.mrb[0].mxu0
        %v707 = vpop.f32.mrb[0].mxu0
        %v708 = vadd.f32 0.0, %v707
        %v709 = vpop.f32.mrb[0].mxu0
        %710 = vmatprep.mubr.bf16.mxu0 0
        %711 = vmatmul.mubr.bf16.gmra.mrb[0].mxu0 %v491
        %v712 = vpop.f32.mrb[0].mxu0
        %v713 = vadd.f32 0.0, %v712
        %v714 = vpop.f32.mrb[0].mxu0
        %v715 = vpop.f32.mrb[0].mxu0
        %v716 = vadd.f32 0.0, %v715
        %v717 = vpop.f32.mrb[0].mxu0
        %718 = vmatprep.mubr.bf16.mxu0 0
        %719 = vmatmul.mubr.bf16.gmra.mrb[0].mxu0 %v492
        %v720 = vpop.f32.mrb[0].mxu0
        %v721 = vadd.f32 0.0, %v720
        %v722 = vpop.f32.mrb[0].mxu0
        %v723 = vpop.f32.mrb[0].mxu0
        %v724 = vadd.f32 0.0, %v723
        %v725 = vpop.f32.mrb[0].mxu0
        %726 = vmatprep.mubr.bf16.mxu0 0
        %727 = vmatmul.mubr.bf16.gmra.mrb[0].mxu0 %v493
        %v728 = vpop.f32.mrb[0].mxu0
        %v729 = vadd.f32 0.0, %v728
        %v730 = vpop.f32.mrb[0].mxu0
        %v731 = vpop.f32.mrb[0].mxu0
        %v732 = vadd.f32 0.0, %v731
        %v733 = vpop.f32.mrb[0].mxu0
        %734 = vdwg.mxu0
        %v735 = vrot.slane %v609, 1
        %v736 = vrot.slane %v612, 1
        %v737 = vrot.slane %v617, 1
        %v738 = vrot.slane %v620, 1
        %v739 = vrot.slane %v625, 1
        %v740 = vrot.slane %v628, 1
        %v741 = vrot.slane %v633, 1
        %v742 = vrot.slane %v636, 1
        %v743 = vrot.slane %v641, 1
        %v744 = vrot.slane %v644, 1
        %v745 = vrot.slane %v649, 1
        %v746 = vrot.slane %v652, 1
        %v747 = vrot.slane %v657, 1
        %v748 = vrot.slane %v660, 1
        %v749 = vrot.slane %v665, 1
        %v750 = vrot.slane %v668, 1
        %v751 = vrot.slane %v673, 1
        %v752 = vrot.slane %v676, 1
        %v753 = vrot.slane %v681, 1
        %v754 = vrot.slane %v684, 1
        %v755 = vrot.slane %v689, 1
        %v756 = vrot.slane %v692, 1
        %v757 = vrot.slane %v697, 1
        %v758 = vrot.slane %v700, 1
        %v759 = vrot.slane %v705, 1
        %v760 = vrot.slane %v708, 1
        %v761 = vrot.slane %v713, 1
        %v762 = vrot.slane %v716, 1
        %v763 = vrot.slane %v721, 1
        %v764 = vrot.slane %v724, 1
        %v765 = vrot.slane %v729, 1
        %v766 = vrot.slane %v732, 1
        %v767 = vlaneseq
        %v768 = vshrl.u32 %v767, 7
        %vm769 = vcmp.lt.s32.totalorder %v768, 7
        %v770 = vsel %vm769, %v765, %v766
        %v771 = vsel %vm769, %v764, %v765
        %v772 = vsel %vm769, %v763, %v764
        %v773 = vsel %vm769, %v762, %v763
        %v774 = vsel %vm769, %v761, %v762
        %v775 = vsel %vm769, %v760, %v761
        %v776 = vsel %vm769, %v759, %v760
        %v777 = vsel %vm769, %v758, %v759
        %v778 = vsel %vm769, %v757, %v758
        %v779 = vsel %vm769, %v756, %v757
        %v780 = vsel %vm769, %v755, %v756
        %v781 = vsel %vm769, %v754, %v755
        %v782 = vsel %vm769, %v753, %v754
        %v783 = vsel %vm769, %v752, %v753
        %v784 = vsel %vm769, %v751, %v752
        %v785 = vsel %vm769, %v750, %v751
        %v786 = vsel %vm769, %v749, %v750
        %v787 = vsel %vm769, %v748, %v749
        %v788 = vsel %vm769, %v747, %v748
        %v789 = vsel %vm769, %v746, %v747
        %v790 = vsel %vm769, %v745, %v746
        %v791 = vsel %vm769, %v744, %v745
        %v792 = vsel %vm769, %v743, %v744
        %v793 = vsel %vm769, %v742, %v743
        %v794 = vsel %vm769, %v741, %v742
        %v795 = vsel %vm769, %v740, %v741
        %v796 = vsel %vm769, %v739, %v740
        %v797 = vsel %vm769, %v738, %v739
        %v798 = vsel %vm769, %v737, %v738
        %v799 = vsel %vm769, %v736, %v737
        %v800 = vsel %vm769, %v735, %v736
        %v801 = vsel %vm769, %v766, %v735
        %v818 = vunpack.c.l.b16 %v494
        %v819 = vunpack.c.l.b16 %v495
        %v820 = vunpack.c.l.b16 %v496
        %v821 = vunpack.c.l.b16 %v497
        %v822 = vunpack.c.l.b16 %v498
        %v823 = vunpack.c.l.b16 %v499
        %v824 = vunpack.c.l.b16 %v500
        %v825 = vunpack.c.l.b16 %v501
        %v826 = vunpack.c.l.b16 %v502
        %v827 = vunpack.c.l.b16 %v503
        %v828 = vunpack.c.l.b16 %v504
        %v829 = vunpack.c.l.b16 %v505
        %v830 = vunpack.c.l.b16 %v506
        %v831 = vunpack.c.l.b16 %v507
        %v832 = vunpack.c.l.b16 %v508
        %v833 = vunpack.c.l.b16 %v509
        %v834 = vpack.c.b16 %v819, %v818
        %v835 = vpack.c.b16 %v821, %v820
        %v836 = vpack.c.b16 %v823, %v822
        %v837 = vpack.c.b16 %v825, %v824
        %v838 = vpack.c.b16 %v827, %v826
        %v839 = vpack.c.b16 %v829, %v828
        %v840 = vpack.c.b16 %v831, %v830
        %v841 = vpack.c.b16 %v833, %v832
        %850 = vmatprep.subr.bf16.mxu0 0
        %851 = vmatpush1.bf16.msra.mxu0 %v834
        %852 = vmatprep.subr.bf16.mxu0 0
        %853 = vmatpush1.bf16.msra.mxu0 %v835
        %854 = vmatprep.subr.bf16.mxu0 0
        %855 = vmatpush1.bf16.msra.mxu0 %v836
        %856 = vmatprep.subr.bf16.mxu0 0
        %857 = vmatpush1.bf16.msra.mxu0 %v837
        %858 = vmatprep.subr.bf16.mxu0 0
        %859 = vmatpush1.bf16.msra.mxu0 %v838
        %860 = vmatprep.subr.bf16.mxu0 0
        %861 = vmatpush1.bf16.msra.mxu0 %v839
        %862 = vmatprep.subr.bf16.mxu0 0
        %863 = vmatpush1.bf16.msra.mxu0 %v840
        %864 = vmatprep.subr.bf16.mxu0 0
        %865 = vmatpush1.bf16.msra.mxu0 %v841
        %866 = vmatprep.subr.bf16.mxu0 0
        %867 = vmatpush1.bf16.msra.mxu0 0
        %868 = vmatprep.subr.bf16.mxu0 0
        %869 = vmatpush1.bf16.msra.mxu0 0
        %870 = vmatprep.subr.bf16.mxu0 0
        %871 = vmatpush1.bf16.msra.mxu0 0
        %872 = vmatprep.subr.bf16.mxu0 0
        %873 = vmatpush1.bf16.msra.mxu0 0
        %874 = vmatprep.subr.bf16.mxu0 0
        %875 = vmatpush1.bf16.msra.mxu0 0
        %876 = vmatprep.subr.bf16.mxu0 0
        %877 = vmatpush1.bf16.msra.mxu0 0
        %878 = vmatprep.subr.bf16.mxu0 0
        %879 = vmatpush1.bf16.msra.mxu0 0
        %880 = vmatprep.subr.bf16.mxu0 0
        %881 = vmatpush1.bf16.msra.mxu0 0
        %882 = vmatprep.mubr.bf16.mxu0 0
        %883 = vmatmul.mubr.bf16.gmra.mrb[0].mxu0 %v478
        %v884 = vpop.f32.mrb[0].mxu0
        %v885 = vadd.f32 %v800, %v884
        %v886 = vpop.f32.mrb[0].mxu0
        %v887 = vpop.f32.mrb[0].mxu0
        %v888 = vadd.f32 %v799, %v887
        %v889 = vpop.f32.mrb[0].mxu0
        %890 = vmatprep.mubr.bf16.mxu0 0
        %891 = vmatmul.mubr.bf16.gmra.mrb[0].mxu0 %v479
        %v892 = vpop.f32.mrb[0].mxu0
        %v893 = vadd.f32 %v798, %v892
        %v894 = vpop.f32.mrb[0].mxu0
        %v895 = vpop.f32.mrb[0].mxu0
        %v896 = vadd.f32 %v797, %v895
        %v897 = vpop.f32.mrb[0].mxu0
        %898 = vmatprep.mubr.bf16.mxu0 0
        %899 = vmatmul.mubr.bf16.gmra.mrb[0].mxu0 %v480
        %v900 = vpop.f32.mrb[0].mxu0
        %v901 = vadd.f32 %v796, %v900
        %v902 = vpop.f32.mrb[0].mxu0
        %v903 = vpop.f32.mrb[0].mxu0
        %v904 = vadd.f32 %v795, %v903
        %v905 = vpop.f32.mrb[0].mxu0
        %906 = vmatprep.mubr.bf16.mxu0 0
        %907 = vmatmul.mubr.bf16.gmra.mrb[0].mxu0 %v481
        %v908 = vpop.f32.mrb[0].mxu0
        %v909 = vadd.f32 %v794, %v908
        %v910 = vpop.f32.mrb[0].mxu0
        %v911 = vpop.f32.mrb[0].mxu0
        %v912 = vadd.f32 %v793, %v911
        %v913 = vpop.f32.mrb[0].mxu0
        %914 = vmatprep.mubr.bf16.mxu0 0
        %915 = vmatmul.mubr.bf16.gmra.mrb[0].mxu0 %v482
        %v916 = vpop.f32.mrb[0].mxu0
        %v917 = vadd.f32 %v792, %v916
        %v918 = vpop.f32.mrb[0].mxu0
        %v919 = vpop.f32.mrb[0].mxu0
        %v920 = vadd.f32 %v791, %v919
        %v921 = vpop.f32.mrb[0].mxu0
        %922 = vmatprep.mubr.bf16.mxu0 0
        %923 = vmatmul.mubr.bf16.gmra.mrb[0].mxu0 %v483
        %v924 = vpop.f32.mrb[0].mxu0
        %v925 = vadd.f32 %v790, %v924
        %v926 = vpop.f32.mrb[0].mxu0
        %v927 = vpop.f32.mrb[0].mxu0
        %v928 = vadd.f32 %v789, %v927
        %v929 = vpop.f32.mrb[0].mxu0
        %930 = vmatprep.mubr.bf16.mxu0 0
        %931 = vmatmul.mubr.bf16.gmra.mrb[0].mxu0 %v484
        %v932 = vpop.f32.mrb[0].mxu0
        %v933 = vadd.f32 %v788, %v932
        %v934 = vpop.f32.mrb[0].mxu0
        %v935 = vpop.f32.mrb[0].mxu0
        %v936 = vadd.f32 %v787, %v935
        %v937 = vpop.f32.mrb[0].mxu0
        %938 = vmatprep.mubr.bf16.mxu0 0
        %939 = vmatmul.mubr.bf16.gmra.mrb[0].mxu0 %v485
        %v940 = vpop.f32.mrb[0].mxu0
        %v941 = vadd.f32 %v786, %v940
        %v942 = vpop.f32.mrb[0].mxu0
        %v943 = vpop.f32.mrb[0].mxu0
        %v944 = vadd.f32 %v785, %v943
        %v945 = vpop.f32.mrb[0].mxu0
        %946 = vmatprep.mubr.bf16.mxu0 0
        %947 = vmatmul.mubr.bf16.gmra.mrb[0].mxu0 %v486
        %v948 = vpop.f32.mrb[0].mxu0
        %v949 = vadd.f32 %v784, %v948
        %v950 = vpop.f32.mrb[0].mxu0
        %v951 = vpop.f32.mrb[0].mxu0
        %v952 = vadd.f32 %v783, %v951
        %v953 = vpop.f32.mrb[0].mxu0
        %954 = vmatprep.mubr.bf16.mxu0 0
        %955 = vmatmul.mubr.bf16.gmra.mrb[0].mxu0 %v487
        %v956 = vpop.f32.mrb[0].mxu0
        %v957 = vadd.f32 %v782, %v956
        %v958 = vpop.f32.mrb[0].mxu0
        %v959 = vpop.f32.mrb[0].mxu0
        %v960 = vadd.f32 %v781, %v959
        %v961 = vpop.f32.mrb[0].mxu0
        %962 = vmatprep.mubr.bf16.mxu0 0
        %963 = vmatmul.mubr.bf16.gmra.mrb[0].mxu0 %v488
        %v964 = vpop.f32.mrb[0].mxu0
        %v965 = vadd.f32 %v780, %v964
        %v966 = vpop.f32.mrb[0].mxu0
        %v967 = vpop.f32.mrb[0].mxu0
        %v968 = vadd.f32 %v779, %v967
        %v969 = vpop.f32.mrb[0].mxu0
        %970 = vmatprep.mubr.bf16.mxu0 0
        %971 = vmatmul.mubr.bf16.gmra.mrb[0].mxu0 %v489
        %v972 = vpop.f32.mrb[0].mxu0
        %v973 = vadd.f32 %v778, %v972
        %v974 = vpop.f32.mrb[0].mxu0
        %v975 = vpop.f32.mrb[0].mxu0
        %v976 = vadd.f32 %v777, %v975
        %v977 = vpop.f32.mrb[0].mxu0
        %978 = vmatprep.mubr.bf16.mxu0 0
        %979 = vmatmul.mubr.bf16.gmra.mrb[0].mxu0 %v490
        %v980 = vpop.f32.mrb[0].mxu0
        %v981 = vadd.f32 %v776, %v980
        %v982 = vpop.f32.mrb[0].mxu0
        %v983 = vpop.f32.mrb[0].mxu0
        %v984 = vadd.f32 %v775, %v983
        %v985 = vpop.f32.mrb[0].mxu0
        %986 = vmatprep.mubr.bf16.mxu0 0
        %987 = vmatmul.mubr.bf16.gmra.mrb[0].mxu0 %v491
        %v988 = vpop.f32.mrb[0].mxu0
        %v989 = vadd.f32 %v774, %v988
        %v990 = vpop.f32.mrb[0].mxu0
        %v991 = vpop.f32.mrb[0].mxu0
        %v992 = vadd.f32 %v773, %v991
        %v993 = vpop.f32.mrb[0].mxu0
        %994 = vmatprep.mubr.bf16.mxu0 0
        %995 = vmatmul.mubr.bf16.gmra.mrb[0].mxu0 %v492
        %v996 = vpop.f32.mrb[0].mxu0
        %v997 = vadd.f32 %v772, %v996
        %v998 = vpop.f32.mrb[0].mxu0
        %v999 = vpop.f32.mrb[0].mxu0
        %v1000 = vadd.f32 %v771, %v999
        %v1001 = vpop.f32.mrb[0].mxu0
        %1002 = vmatprep.mubr.bf16.mxu0 0
        %1003 = vmatmul.mubr.bf16.gmra.mrb[0].mxu0 %v493
        %v1004 = vpop.f32.mrb[0].mxu0
        %v1005 = vadd.f32 %v770, %v1004
        %v1006 = vpop.f32.mrb[0].mxu0
        %v1007 = vpop.f32.mrb[0].mxu0
        %v1008 = vadd.f32 %v801, %v1007
        %v1009 = vpop.f32.mrb[0].mxu0
        %1010 = vdwg.mxu0
        %v1011 = vld [vmem:[%s1 + $0x88] sm:$0xf]
        %v1012 = vld [vmem:[%s1 + $0x8c] sm:$0xf]
        %v1013 = vld [vmem:[%s1 + $0x90] sm:$0xf]
        %v1014 = vld [vmem:[%s1 + $0x94] sm:$0xf]
        %v1015 = vld [vmem:[%s1 + $0x98] sm:$0xf]
        %v1016 = vld [vmem:[%s1 + $0x9c] sm:$0xf]
        %v1017 = vld [vmem:[%s1 + $0xa0] sm:$0xf]
        %v1018 = vld [vmem:[%s1 + $0xa4] sm:$0xf]
        %v1019 = vld [vmem:[%s1 + $0xa8] sm:$0xf]
        %v1020 = vld [vmem:[%s1 + $0xac] sm:$0xf]
        %v1021 = vld [vmem:[%s1 + $0xb0] sm:$0xf]
        %v1022 = vld [vmem:[%s1 + $0xb4] sm:$0xf]
        %v1023 = vld [vmem:[%s1 + $0xb8] sm:$0xf]
        %v1024 = vld [vmem:[%s1 + $0xbc] sm:$0xf]
        %v1025 = vld [vmem:[%s1 + $0xc0] sm:$0xf]
        %v1026 = vld [vmem:[%s1 + $0xc4] sm:$0xf]
        %v1043 = vunpack.c.l.b16 %v1011
        %v1044 = vunpack.c.l.b16 %v1012
        %v1045 = vunpack.c.l.b16 %v1013
        %v1046 = vunpack.c.l.b16 %v1014
        %v1047 = vunpack.c.l.b16 %v1015
        %v1048 = vunpack.c.l.b16 %v1016
        %v1049 = vunpack.c.l.b16 %v1017
        %v1050 = vunpack.c.l.b16 %v1018
        %v1051 = vunpack.c.l.b16 %v1019
        %v1052 = vunpack.c.l.b16 %v1020
        %v1053 = vunpack.c.l.b16 %v1021
        %v1054 = vunpack.c.l.b16 %v1022
        %v1055 = vunpack.c.l.b16 %v1023
        %v1056 = vunpack.c.l.b16 %v1024
        %v1057 = vunpack.c.l.b16 %v1025
        %v1058 = vunpack.c.l.b16 %v1026
        %v1059 = vpack.c.b16 %v1044, %v1043
        %v1060 = vpack.c.b16 %v1046, %v1045
        %v1061 = vpack.c.b16 %v1048, %v1047
        %v1062 = vpack.c.b16 %v1050, %v1049
        %v1063 = vpack.c.b16 %v1052, %v1051
        %v1064 = vpack.c.b16 %v1054, %v1053
        %v1065 = vpack.c.b16 %v1056, %v1055
        %v1066 = vpack.c.b16 %v1058, %v1057
        %1075 = vmatprep.subr.bf16.mxu0 0
        %1076 = vmatpush1.bf16.msra.mxu0 %v1059
        %1077 = vmatprep.subr.bf16.mxu0 0
        %1078 = vmatpush1.bf16.msra.mxu0 %v1060
        %1079 = vmatprep.subr.bf16.mxu0 0
        %1080 = vmatpush1.bf16.msra.mxu0 %v1061
        %1081 = vmatprep.subr.bf16.mxu0 0
        %1082 = vmatpush1.bf16.msra.mxu0 %v1062
        %1083 = vmatprep.subr.bf16.mxu0 0
        %1084 = vmatpush1.bf16.msra.mxu0 %v1063
        %1085 = vmatprep.subr.bf16.mxu0 0
        %1086 = vmatpush1.bf16.msra.mxu0 %v1064
        %1087 = vmatprep.subr.bf16.mxu0 0
        %1088 = vmatpush1.bf16.msra.mxu0 %v1065
        %1089 = vmatprep.subr.bf16.mxu0 0
        %1090 = vmatpush1.bf16.msra.mxu0 %v1066
        %1091 = vmatprep.subr.bf16.mxu0 0
        %1092 = vmatpush1.bf16.msra.mxu0 0
        %1093 = vmatprep.subr.bf16.mxu0 0
        %1094 = vmatpush1.bf16.msra.mxu0 0
        %1095 = vmatprep.subr.bf16.mxu0 0
        %1096 = vmatpush1.bf16.msra.mxu0 0
        %1097 = vmatprep.subr.bf16.mxu0 0
        %1098 = vmatpush1.bf16.msra.mxu0 0
        %1099 = vmatprep.subr.bf16.mxu0 0
        %1100 = vmatpush1.bf16.msra.mxu0 0
        %1101 = vmatprep.subr.bf16.mxu0 0
        %1102 = vmatpush1.bf16.msra.mxu0 0
        %1103 = vmatprep.subr.bf16.mxu0 0
        %1104 = vmatpush1.bf16.msra.mxu0 0
        %1105 = vmatprep.subr.bf16.mxu0 0
        %1106 = vmatpush1.bf16.msra.mxu0 0
        %1107 = vmatprep.mubr.bf16.mxu0 0
        %1108 = vmatmul.mubr.bf16.gmra.mrb[0].mxu0 %v478
        %v1109 = vpop.f32.mrb[0].mxu0
        %v1110 = vadd.f32 0.0, %v1109
        %v1111 = vpop.f32.mrb[0].mxu0
        %v1112 = vpop.f32.mrb[0].mxu0
        %v1113 = vadd.f32 0.0, %v1112
        %v1114 = vpop.f32.mrb[0].mxu0
        %1115 = vmatprep.mubr.bf16.mxu0 0
        %1116 = vmatmul.mubr.bf16.gmra.mrb[0].mxu0 %v479
        %v1117 = vpop.f32.mrb[0].mxu0
        %v1118 = vadd.f32 0.0, %v1117
        %v1119 = vpop.f32.mrb[0].mxu0
        %v1120 = vpop.f32.mrb[0].mxu0
        %v1121 = vadd.f32 0.0, %v1120
        %v1122 = vpop.f32.mrb[0].mxu0
        %1123 = vmatprep.mubr.bf16.mxu0 0
        %1124 = vmatmul.mubr.bf16.gmra.mrb[0].mxu0 %v480
        %v1125 = vpop.f32.mrb[0].mxu0
        %v1126 = vadd.f32 0.0, %v1125
        %v1127 = vpop.f32.mrb[0].mxu0
        %v1128 = vpop.f32.mrb[0].mxu0
        %v1129 = vadd.f32 0.0, %v1128
        %v1130 = vpop.f32.mrb[0].mxu0
        %1131 = vmatprep.mubr.bf16.mxu0 0
        %1132 = vmatmul.mubr.bf16.gmra.mrb[0].mxu0 %v481
        %v1133 = vpop.f32.mrb[0].mxu0
        %v1134 = vadd.f32 0.0, %v1133
        %v1135 = vpop.f32.mrb[0].mxu0
        %v1136 = vpop.f32.mrb[0].mxu0
        %v1137 = vadd.f32 0.0, %v1136
        %v1138 = vpop.f32.mrb[0].mxu0
        %1139 = vmatprep.mubr.bf16.mxu0 0
        %1140 = vmatmul.mubr.bf16.gmra.mrb[0].mxu0 %v482
        %v1141 = vpop.f32.mrb[0].mxu0
        %v1142 = vadd.f32 0.0, %v1141
        %v1143 = vpop.f32.mrb[0].mxu0
        %v1144 = vpop.f32.mrb[0].mxu0
        %v1145 = vadd.f32 0.0, %v1144
        %v1146 = vpop.f32.mrb[0].mxu0
        %1147 = vmatprep.mubr.bf16.mxu0 0
        %1148 = vmatmul.mubr.bf16.gmra.mrb[0].mxu0 %v483
        %v1149 = vpop.f32.mrb[0].mxu0
        %v1150 = vadd.f32 0.0, %v1149
        %v1151 = vpop.f32.mrb[0].mxu0
        %v1152 = vpop.f32.mrb[0].mxu0
        %v1153 = vadd.f32 0.0, %v1152
        %v1154 = vpop.f32.mrb[0].mxu0
        %1155 = vmatprep.mubr.bf16.mxu0 0
        %1156 = vmatmul.mubr.bf16.gmra.mrb[0].mxu0 %v484
        %v1157 = vpop.f32.mrb[0].mxu0
        %v1158 = vadd.f32 0.0, %v1157
        %v1159 = vpop.f32.mrb[0].mxu0
        %v1160 = vpop.f32.mrb[0].mxu0
        %v1161 = vadd.f32 0.0, %v1160
        %v1162 = vpop.f32.mrb[0].mxu0
        %1163 = vmatprep.mubr.bf16.mxu0 0
        %1164 = vmatmul.mubr.bf16.gmra.mrb[0].mxu0 %v485
        %v1165 = vpop.f32.mrb[0].mxu0
        %v1166 = vadd.f32 0.0, %v1165
        %v1167 = vpop.f32.mrb[0].mxu0
        %v1168 = vpop.f32.mrb[0].mxu0
        %v1169 = vadd.f32 0.0, %v1168
        %v1170 = vpop.f32.mrb[0].mxu0
        %1171 = vmatprep.mubr.bf16.mxu0 0
        %1172 = vmatmul.mubr.bf16.gmra.mrb[0].mxu0 %v486
        %v1173 = vpop.f32.mrb[0].mxu0
        %v1174 = vadd.f32 0.0, %v1173
        %v1175 = vpop.f32.mrb[0].mxu0
        %v1176 = vpop.f32.mrb[0].mxu0
        %v1177 = vadd.f32 0.0, %v1176
        %v1178 = vpop.f32.mrb[0].mxu0
        %1179 = vmatprep.mubr.bf16.mxu0 0
        %1180 = vmatmul.mubr.bf16.gmra.mrb[0].mxu0 %v487
        %v1181 = vpop.f32.mrb[0].mxu0
        %v1182 = vadd.f32 0.0, %v1181
        %v1183 = vpop.f32.mrb[0].mxu0
        %v1184 = vpop.f32.mrb[0].mxu0
        %v1185 = vadd.f32 0.0, %v1184
        %v1186 = vpop.f32.mrb[0].mxu0
        %1187 = vmatprep.mubr.bf16.mxu0 0
        %1188 = vmatmul.mubr.bf16.gmra.mrb[0].mxu0 %v488
        %v1189 = vpop.f32.mrb[0].mxu0
        %v1190 = vadd.f32 0.0, %v1189
        %v1191 = vpop.f32.mrb[0].mxu0
        %v1192 = vpop.f32.mrb[0].mxu0
        %v1193 = vadd.f32 0.0, %v1192
        %v1194 = vpop.f32.mrb[0].mxu0
        %1195 = vmatprep.mubr.bf16.mxu0 0
        %1196 = vmatmul.mubr.bf16.gmra.mrb[0].mxu0 %v489
        %v1197 = vpop.f32.mrb[0].mxu0
        %v1198 = vadd.f32 0.0, %v1197
        %v1199 = vpop.f32.mrb[0].mxu0
        %v1200 = vpop.f32.mrb[0].mxu0
        %v1201 = vadd.f32 0.0, %v1200
        %v1202 = vpop.f32.mrb[0].mxu0
        %1203 = vmatprep.mubr.bf16.mxu0 0
        %1204 = vmatmul.mubr.bf16.gmra.mrb[0].mxu0 %v490
        %v1205 = vpop.f32.mrb[0].mxu0
        %v1206 = vadd.f32 0.0, %v1205
        %v1207 = vpop.f32.mrb[0].mxu0
        %v1208 = vpop.f32.mrb[0].mxu0
        %v1209 = vadd.f32 0.0, %v1208
        %v1210 = vpop.f32.mrb[0].mxu0
        %1211 = vmatprep.mubr.bf16.mxu0 0
        %1212 = vmatmul.mubr.bf16.gmra.mrb[0].mxu0 %v491
        %v1213 = vpop.f32.mrb[0].mxu0
        %v1214 = vadd.f32 0.0, %v1213
        %v1215 = vpop.f32.mrb[0].mxu0
        %v1216 = vpop.f32.mrb[0].mxu0
        %v1217 = vadd.f32 0.0, %v1216
        %v1218 = vpop.f32.mrb[0].mxu0
        %1219 = vmatprep.mubr.bf16.mxu0 0
        %1220 = vmatmul.mubr.bf16.gmra.mrb[0].mxu0 %v492
        %v1221 = vpop.f32.mrb[0].mxu0
        %v1222 = vadd.f32 0.0, %v1221
        %v1223 = vpop.f32.mrb[0].mxu0
        %v1224 = vpop.f32.mrb[0].mxu0
        %v1225 = vadd.f32 0.0, %v1224
        %v1226 = vpop.f32.mrb[0].mxu0
        %1227 = vmatprep.mubr.bf16.mxu0 0
        %1228 = vmatmul.mubr.bf16.gmra.mrb[0].mxu0 %v493
        %v1229 = vpop.f32.mrb[0].mxu0
        %v1230 = vadd.f32 0.0, %v1229
        %v1231 = vpop.f32.mrb[0].mxu0
        %v1232 = vpop.f32.mrb[0].mxu0
        %v1233 = vadd.f32 0.0, %v1232
        %v1234 = vpop.f32.mrb[0].mxu0
        %1235 = vdwg.mxu0
        %v1236 = vrot.slane %v1110, 2
        %v1237 = vrot.slane %v1113, 2
        %v1238 = vrot.slane %v1118, 2
        %v1239 = vrot.slane %v1121, 2
        %v1240 = vrot.slane %v1126, 2
        %v1241 = vrot.slane %v1129, 2
        %v1242 = vrot.slane %v1134, 2
        %v1243 = vrot.slane %v1137, 2
        %v1244 = vrot.slane %v1142, 2
        %v1245 = vrot.slane %v1145, 2
        %v1246 = vrot.slane %v1150, 2
        %v1247 = vrot.slane %v1153, 2
        %v1248 = vrot.slane %v1158, 2
        %v1249 = vrot.slane %v1161, 2
        %v1250 = vrot.slane %v1166, 2
        %v1251 = vrot.slane %v1169, 2
        %v1252 = vrot.slane %v1174, 2
        %v1253 = vrot.slane %v1177, 2
        %v1254 = vrot.slane %v1182, 2
        %v1255 = vrot.slane %v1185, 2
        %v1256 = vrot.slane %v1190, 2
        %v1257 = vrot.slane %v1193, 2
        %v1258 = vrot.slane %v1198, 2
        %v1259 = vrot.slane %v1201, 2
        %v1260 = vrot.slane %v1206, 2
        %v1261 = vrot.slane %v1209, 2
        %v1262 = vrot.slane %v1214, 2
        %v1263 = vrot.slane %v1217, 2
        %v1264 = vrot.slane %v1222, 2
        %v1265 = vrot.slane %v1225, 2
        %v1266 = vrot.slane %v1230, 2
        %v1267 = vrot.slane %v1233, 2
        %vm1268 = vcmp.lt.s32.totalorder %v768, 6
        %v1269 = vsel %vm1268, %v1266, %v1267
        %v1270 = vsel %vm1268, %v1265, %v1266
        %v1271 = vsel %vm1268, %v1264, %v1265
        %v1272 = vsel %vm1268, %v1263, %v1264
        %v1273 = vsel %vm1268, %v1262, %v1263
        %v1274 = vsel %vm1268, %v1261, %v1262
        %v1275 = vsel %vm1268, %v1260, %v1261
        %v1276 = vsel %vm1268, %v1259, %v1260
        %v1277 = vsel %vm1268, %v1258, %v1259
        %v1278 = vsel %vm1268, %v1257, %v1258
        %v1279 = vsel %vm1268, %v1256, %v1257
        %v1280 = vsel %vm1268, %v1255, %v1256
        %v1281 = vsel %vm1268, %v1254, %v1255
        %v1282 = vsel %vm1268, %v1253, %v1254
        %v1283 = vsel %vm1268, %v1252, %v1253
        %v1284 = vsel %vm1268, %v1251, %v1252
        %v1285 = vsel %vm1268, %v1250, %v1251
        %v1286 = vsel %vm1268, %v1249, %v1250
        %v1287 = vsel %vm1268, %v1248, %v1249
        %v1288 = vsel %vm1268, %v1247, %v1248
        %v1289 = vsel %vm1268, %v1246, %v1247
        %v1290 = vsel %vm1268, %v1245, %v1246
        %v1291 = vsel %vm1268, %v1244, %v1245
        %v1292 = vsel %vm1268, %v1243, %v1244
        %v1293 = vsel %vm1268, %v1242, %v1243
        %v1294 = vsel %vm1268, %v1241, %v1242
        %v1295 = vsel %vm1268, %v1240, %v1241
        %v1296 = vsel %vm1268, %v1239, %v1240
        %v1297 = vsel %vm1268, %v1238, %v1239
        %v1298 = vsel %vm1268, %v1237, %v1238
        %v1299 = vsel %vm1268, %v1236, %v1237
        %v1300 = vsel %vm1268, %v1267, %v1236
        %v1301 = vadd.f32 %v885, %v1299
        %v1302 = vadd.f32 %v888, %v1298
        %v1303 = vadd.f32 %v893, %v1297
        %v1304 = vadd.f32 %v896, %v1296
        %v1305 = vadd.f32 %v901, %v1295
        %v1306 = vadd.f32 %v904, %v1294
        %v1307 = vadd.f32 %v909, %v1293
        %v1308 = vadd.f32 %v912, %v1292
        %v1309 = vadd.f32 %v917, %v1291
        %v1310 = vadd.f32 %v920, %v1290
        %v1311 = vadd.f32 %v925, %v1289
        %v1312 = vadd.f32 %v928, %v1288
        %v1313 = vadd.f32 %v933, %v1287
        %v1314 = vadd.f32 %v936, %v1286
        %v1315 = vadd.f32 %v941, %v1285
        %v1316 = vadd.f32 %v944, %v1284
        %v1317 = vadd.f32 %v949, %v1283
        %v1318 = vadd.f32 %v952, %v1282
        %v1319 = vadd.f32 %v957, %v1281
        %v1320 = vadd.f32 %v960, %v1280
        %v1321 = vadd.f32 %v965, %v1279
        %v1322 = vadd.f32 %v968, %v1278
        %v1323 = vadd.f32 %v973, %v1277
        %v1324 = vadd.f32 %v976, %v1276
        %v1325 = vadd.f32 %v981, %v1275
        %v1326 = vadd.f32 %v984, %v1274
        %v1327 = vadd.f32 %v989, %v1273
        %v1328 = vadd.f32 %v992, %v1272
        %v1329 = vadd.f32 %v997, %v1271
        %v1330 = vadd.f32 %v1000, %v1270
        %v1331 = vadd.f32 %v1005, %v1269
        %v1332 = vadd.f32 %v1008, %v1300
        %v1333 = vld [vmem:[%s1 + $0xc8] sm:$0xf]
        %v1334 = vld [vmem:[%s1 + $0xcc] sm:$0xf]
        %v1335 = vld [vmem:[%s1 + $0xd0] sm:$0xf]
        %v1336 = vld [vmem:[%s1 + $0xd4] sm:$0xf]
        %v1337 = vld [vmem:[%s1 + $0xd8] sm:$0xf]
        %v1338 = vld [vmem:[%s1 + $0xdc] sm:$0xf]
        %v1339 = vld [vmem:[%s1 + $0xe0] sm:$0xf]
        %v1340 = vld [vmem:[%s1 + $0xe4] sm:$0xf]
        %v1341 = vld [vmem:[%s1 + $0xe8] sm:$0xf]
        %v1342 = vld [vmem:[%s1 + $0xec] sm:$0xf]
        %v1343 = vld [vmem:[%s1 + $0xf0] sm:$0xf]
        %v1344 = vld [vmem:[%s1 + $0xf4] sm:$0xf]
        %v1345 = vld [vmem:[%s1 + $0xf8] sm:$0xf]
        %v1346 = vld [vmem:[%s1 + $0xfc] sm:$0xf]
        %v1347 = vld [vmem:[%s1 + $0x100] sm:$0xf]
        %v1348 = vld [vmem:[%s1 + $0x104] sm:$0xf]
        %v1365 = vunpack.c.l.b16 %v1333
        %v1366 = vunpack.c.l.b16 %v1334
        %v1367 = vunpack.c.l.b16 %v1335
        %v1368 = vunpack.c.l.b16 %v1336
        %v1369 = vunpack.c.l.b16 %v1337
        %v1370 = vunpack.c.l.b16 %v1338
        %v1371 = vunpack.c.l.b16 %v1339
        %v1372 = vunpack.c.l.b16 %v1340
        %v1373 = vunpack.c.l.b16 %v1341
        %v1374 = vunpack.c.l.b16 %v1342
        %v1375 = vunpack.c.l.b16 %v1343
        %v1376 = vunpack.c.l.b16 %v1344
        %v1377 = vunpack.c.l.b16 %v1345
        %v1378 = vunpack.c.l.b16 %v1346
        %v1379 = vunpack.c.l.b16 %v1347
        %v1380 = vunpack.c.l.b16 %v1348
        %v1381 = vpack.c.b16 %v1366, %v1365
        %v1382 = vpack.c.b16 %v1368, %v1367
        %v1383 = vpack.c.b16 %v1370, %v1369
        %v1384 = vpack.c.b16 %v1372, %v1371
        %v1385 = vpack.c.b16 %v1374, %v1373
        %v1386 = vpack.c.b16 %v1376, %v1375
        %v1387 = vpack.c.b16 %v1378, %v1377
        %v1388 = vpack.c.b16 %v1380, %v1379
        %1397 = vmatprep.subr.bf16.mxu0 0
        %1398 = vmatpush1.bf16.msra.mxu0 %v1381
        %1399 = vmatprep.subr.bf16.mxu0 0
        %1400 = vmatpush1.bf16.msra.mxu0 %v1382
        %1401 = vmatprep.subr.bf16.mxu0 0
        %1402 = vmatpush1.bf16.msra.mxu0 %v1383
        %1403 = vmatprep.subr.bf16.mxu0 0
        %1404 = vmatpush1.bf16.msra.mxu0 %v1384
        %1405 = vmatprep.subr.bf16.mxu0 0
        %1406 = vmatpush1.bf16.msra.mxu0 %v1385
        %1407 = vmatprep.subr.bf16.mxu0 0
        %1408 = vmatpush1.bf16.msra.mxu0 %v1386
        %1409 = vmatprep.subr.bf16.mxu0 0
        %1410 = vmatpush1.bf16.msra.mxu0 %v1387
        %1411 = vmatprep.subr.bf16.mxu0 0
        %1412 = vmatpush1.bf16.msra.mxu0 %v1388
        %1413 = vmatprep.subr.bf16.mxu0 0
        %1414 = vmatpush1.bf16.msra.mxu0 0
        %1415 = vmatprep.subr.bf16.mxu0 0
        %1416 = vmatpush1.bf16.msra.mxu0 0
        %1417 = vmatprep.subr.bf16.mxu0 0
        %1418 = vmatpush1.bf16.msra.mxu0 0
        %1419 = vmatprep.subr.bf16.mxu0 0
        %1420 = vmatpush1.bf16.msra.mxu0 0
        %1421 = vmatprep.subr.bf16.mxu0 0
        %1422 = vmatpush1.bf16.msra.mxu0 0
        %1423 = vmatprep.subr.bf16.mxu0 0
        %1424 = vmatpush1.bf16.msra.mxu0 0
        %1425 = vmatprep.subr.bf16.mxu0 0
        %1426 = vmatpush1.bf16.msra.mxu0 0
        %1427 = vmatprep.subr.bf16.mxu0 0
        %1428 = vmatpush1.bf16.msra.mxu0 0
        %1429 = vmatprep.mubr.bf16.mxu0 0
        %1430 = vmatmul.mubr.bf16.gmra.mrb[0].mxu0 %v478
        %v1431 = vpop.f32.mrb[0].mxu0
        %v1432 = vadd.f32 0.0, %v1431
        %v1433 = vpop.f32.mrb[0].mxu0
        %v1434 = vpop.f32.mrb[0].mxu0
        %v1435 = vadd.f32 0.0, %v1434
        %v1436 = vpop.f32.mrb[0].mxu0
        %1437 = vmatprep.mubr.bf16.mxu0 0
        %1438 = vmatmul.mubr.bf16.gmra.mrb[0].mxu0 %v479
        %v1439 = vpop.f32.mrb[0].mxu0
        %v1440 = vadd.f32 0.0, %v1439
        %v1441 = vpop.f32.mrb[0].mxu0
        %v1442 = vpop.f32.mrb[0].mxu0
        %v1443 = vadd.f32 0.0, %v1442
        %v1444 = vpop.f32.mrb[0].mxu0
        %1445 = vmatprep.mubr.bf16.mxu0 0
        %1446 = vmatmul.mubr.bf16.gmra.mrb[0].mxu0 %v480
        %v1447 = vpop.f32.mrb[0].mxu0
        %v1448 = vadd.f32 0.0, %v1447
        %v1449 = vpop.f32.mrb[0].mxu0
        %v1450 = vpop.f32.mrb[0].mxu0
        %v1451 = vadd.f32 0.0, %v1450
        %v1452 = vpop.f32.mrb[0].mxu0
        %1453 = vmatprep.mubr.bf16.mxu0 0
        %1454 = vmatmul.mubr.bf16.gmra.mrb[0].mxu0 %v481
        %v1455 = vpop.f32.mrb[0].mxu0
        %v1456 = vadd.f32 0.0, %v1455
        %v1457 = vpop.f32.mrb[0].mxu0
        %v1458 = vpop.f32.mrb[0].mxu0
        %v1459 = vadd.f32 0.0, %v1458
        %v1460 = vpop.f32.mrb[0].mxu0
        %1461 = vmatprep.mubr.bf16.mxu0 0
        %1462 = vmatmul.mubr.bf16.gmra.mrb[0].mxu0 %v482
        %v1463 = vpop.f32.mrb[0].mxu0
        %v1464 = vadd.f32 0.0, %v1463
        %v1465 = vpop.f32.mrb[0].mxu0
        %v1466 = vpop.f32.mrb[0].mxu0
        %v1467 = vadd.f32 0.0, %v1466
        %v1468 = vpop.f32.mrb[0].mxu0
        %1469 = vmatprep.mubr.bf16.mxu0 0
        %1470 = vmatmul.mubr.bf16.gmra.mrb[0].mxu0 %v483
        %v1471 = vpop.f32.mrb[0].mxu0
        %v1472 = vadd.f32 0.0, %v1471
        %v1473 = vpop.f32.mrb[0].mxu0
        %v1474 = vpop.f32.mrb[0].mxu0
        %v1475 = vadd.f32 0.0, %v1474
        %v1476 = vpop.f32.mrb[0].mxu0
        %1477 = vmatprep.mubr.bf16.mxu0 0
        %1478 = vmatmul.mubr.bf16.gmra.mrb[0].mxu0 %v484
        %v1479 = vpop.f32.mrb[0].mxu0
        %v1480 = vadd.f32 0.0, %v1479
        %v1481 = vpop.f32.mrb[0].mxu0
        %v1482 = vpop.f32.mrb[0].mxu0
        %v1483 = vadd.f32 0.0, %v1482
        %v1484 = vpop.f32.mrb[0].mxu0
        %1485 = vmatprep.mubr.bf16.mxu0 0
        %1486 = vmatmul.mubr.bf16.gmra.mrb[0].mxu0 %v485
        %v1487 = vpop.f32.mrb[0].mxu0
        %v1488 = vadd.f32 0.0, %v1487
        %v1489 = vpop.f32.mrb[0].mxu0
        %v1490 = vpop.f32.mrb[0].mxu0
        %v1491 = vadd.f32 0.0, %v1490
        %v1492 = vpop.f32.mrb[0].mxu0
        %1493 = vmatprep.mubr.bf16.mxu0 0
        %1494 = vmatmul.mubr.bf16.gmra.mrb[0].mxu0 %v486
        %v1495 = vpop.f32.mrb[0].mxu0
        %v1496 = vadd.f32 0.0, %v1495
        %v1497 = vpop.f32.mrb[0].mxu0
        %v1498 = vpop.f32.mrb[0].mxu0
        %v1499 = vadd.f32 0.0, %v1498
        %v1500 = vpop.f32.mrb[0].mxu0
        %1501 = vmatprep.mubr.bf16.mxu0 0
        %1502 = vmatmul.mubr.bf16.gmra.mrb[0].mxu0 %v487
        %v1503 = vpop.f32.mrb[0].mxu0
        %v1504 = vadd.f32 0.0, %v1503
        %v1505 = vpop.f32.mrb[0].mxu0
        %v1506 = vpop.f32.mrb[0].mxu0
        %v1507 = vadd.f32 0.0, %v1506
        %v1508 = vpop.f32.mrb[0].mxu0
        %1509 = vmatprep.mubr.bf16.mxu0 0
        %1510 = vmatmul.mubr.bf16.gmra.mrb[0].mxu0 %v488
        %v1511 = vpop.f32.mrb[0].mxu0
        %v1512 = vadd.f32 0.0, %v1511
        %v1513 = vpop.f32.mrb[0].mxu0
        %v1514 = vpop.f32.mrb[0].mxu0
        %v1515 = vadd.f32 0.0, %v1514
        %v1516 = vpop.f32.mrb[0].mxu0
        %1517 = vmatprep.mubr.bf16.mxu0 0
        %1518 = vmatmul.mubr.bf16.gmra.mrb[0].mxu0 %v489
        %v1519 = vpop.f32.mrb[0].mxu0
        %v1520 = vadd.f32 0.0, %v1519
        %v1521 = vpop.f32.mrb[0].mxu0
        %v1522 = vpop.f32.mrb[0].mxu0
        %v1523 = vadd.f32 0.0, %v1522
        %v1524 = vpop.f32.mrb[0].mxu0
        %1525 = vmatprep.mubr.bf16.mxu0 0
        %1526 = vmatmul.mubr.bf16.gmra.mrb[0].mxu0 %v490
        %v1527 = vpop.f32.mrb[0].mxu0
        %v1528 = vadd.f32 0.0, %v1527
        %v1529 = vpop.f32.mrb[0].mxu0
        %v1530 = vpop.f32.mrb[0].mxu0
        %v1531 = vadd.f32 0.0, %v1530
        %v1532 = vpop.f32.mrb[0].mxu0
        %1533 = vmatprep.mubr.bf16.mxu0 0
        %1534 = vmatmul.mubr.bf16.gmra.mrb[0].mxu0 %v491
        %v1535 = vpop.f32.mrb[0].mxu0
        %v1536 = vadd.f32 0.0, %v1535
        %v1537 = vpop.f32.mrb[0].mxu0
        %v1538 = vpop.f32.mrb[0].mxu0
        %v1539 = vadd.f32 0.0, %v1538
        %v1540 = vpop.f32.mrb[0].mxu0
        %1541 = vmatprep.mubr.bf16.mxu0 0
        %1542 = vmatmul.mubr.bf16.gmra.mrb[0].mxu0 %v492
        %v1543 = vpop.f32.mrb[0].mxu0
        %v1544 = vadd.f32 0.0, %v1543
        %v1545 = vpop.f32.mrb[0].mxu0
        %v1546 = vpop.f32.mrb[0].mxu0
        %v1547 = vadd.f32 0.0, %v1546
        %v1548 = vpop.f32.mrb[0].mxu0
        %1549 = vmatprep.mubr.bf16.mxu0 0
        %1550 = vmatmul.mubr.bf16.gmra.mrb[0].mxu0 %v493
        %v1551 = vpop.f32.mrb[0].mxu0
        %v1552 = vadd.f32 0.0, %v1551
        %v1553 = vpop.f32.mrb[0].mxu0
        %v1554 = vpop.f32.mrb[0].mxu0
        %v1555 = vadd.f32 0.0, %v1554
        %v1556 = vpop.f32.mrb[0].mxu0
        %1557 = vdwg.mxu0
        %v1558 = vrot.slane %v1432, 3
        %v1559 = vrot.slane %v1435, 3
        %v1560 = vrot.slane %v1440, 3
        %v1561 = vrot.slane %v1443, 3
        %v1562 = vrot.slane %v1448, 3
        %v1563 = vrot.slane %v1451, 3
        %v1564 = vrot.slane %v1456, 3
        %v1565 = vrot.slane %v1459, 3
        %v1566 = vrot.slane %v1464, 3
        %v1567 = vrot.slane %v1467, 3
        %v1568 = vrot.slane %v1472, 3
        %v1569 = vrot.slane %v1475, 3
        %v1570 = vrot.slane %v1480, 3
        %v1571 = vrot.slane %v1483, 3
        %v1572 = vrot.slane %v1488, 3
        %v1573 = vrot.slane %v1491, 3
        %v1574 = vrot.slane %v1496, 3
        %v1575 = vrot.slane %v1499, 3
        %v1576 = vrot.slane %v1504, 3
        %v1577 = vrot.slane %v1507, 3
        %v1578 = vrot.slane %v1512, 3
        %v1579 = vrot.slane %v1515, 3
        %v1580 = vrot.slane %v1520, 3
        %v1581 = vrot.slane %v1523, 3
        %v1582 = vrot.slane %v1528, 3
        %v1583 = vrot.slane %v1531, 3
        %v1584 = vrot.slane %v1536, 3
        %v1585 = vrot.slane %v1539, 3
        %v1586 = vrot.slane %v1544, 3
        %v1587 = vrot.slane %v1547, 3
        %v1588 = vrot.slane %v1552, 3
        %v1589 = vrot.slane %v1555, 3
        %vm1590 = vcmp.lt.s32.totalorder %v768, 5
        %v1591 = vsel %vm1590, %v1588, %v1589
        %v1592 = vsel %vm1590, %v1587, %v1588
        %v1593 = vsel %vm1590, %v1586, %v1587
        %v1594 = vsel %vm1590, %v1585, %v1586
        %v1595 = vsel %vm1590, %v1584, %v1585
        %v1596 = vsel %vm1590, %v1583, %v1584
        %v1597 = vsel %vm1590, %v1582, %v1583
        %v1598 = vsel %vm1590, %v1581, %v1582
        %v1599 = vsel %vm1590, %v1580, %v1581
        %v1600 = vsel %vm1590, %v1579, %v1580
        %v1601 = vsel %vm1590, %v1578, %v1579
        %v1602 = vsel %vm1590, %v1577, %v1578
        %v1603 = vsel %vm1590, %v1576, %v1577
        %v1604 = vsel %vm1590, %v1575, %v1576
        %v1605 = vsel %vm1590, %v1574, %v1575
        %v1606 = vsel %vm1590, %v1573, %v1574
        %v1607 = vsel %vm1590, %v1572, %v1573
        %v1608 = vsel %vm1590, %v1571, %v1572
        %v1609 = vsel %vm1590, %v1570, %v1571
        %v1610 = vsel %vm1590, %v1569, %v1570
        %v1611 = vsel %vm1590, %v1568, %v1569
        %v1612 = vsel %vm1590, %v1567, %v1568
        %v1613 = vsel %vm1590, %v1566, %v1567
        %v1614 = vsel %vm1590, %v1565, %v1566
        %v1615 = vsel %vm1590, %v1564, %v1565
        %v1616 = vsel %vm1590, %v1563, %v1564
        %v1617 = vsel %vm1590, %v1562, %v1563
        %v1618 = vsel %vm1590, %v1561, %v1562
        %v1619 = vsel %vm1590, %v1560, %v1561
        %v1620 = vsel %vm1590, %v1559, %v1560
        %v1621 = vsel %vm1590, %v1558, %v1559
        %v1622 = vsel %vm1590, %v1589, %v1558
        %v1623 = vadd.f32 %v1301, %v1621
        %v1624 = vadd.f32 %v1302, %v1620
        %v1625 = vadd.f32 %v1303, %v1619
        %v1626 = vadd.f32 %v1304, %v1618
        %v1627 = vadd.f32 %v1305, %v1617
        %v1628 = vadd.f32 %v1306, %v1616
        %v1629 = vadd.f32 %v1307, %v1615
        %v1630 = vadd.f32 %v1308, %v1614
        %v1631 = vadd.f32 %v1309, %v1613
        %v1632 = vadd.f32 %v1310, %v1612
        %v1633 = vadd.f32 %v1311, %v1611
        %v1634 = vadd.f32 %v1312, %v1610
        %v1635 = vadd.f32 %v1313, %v1609
        %v1636 = vadd.f32 %v1314, %v1608
        %v1637 = vadd.f32 %v1315, %v1607
        %v1638 = vadd.f32 %v1316, %v1606
        %v1639 = vadd.f32 %v1317, %v1605
        %v1640 = vadd.f32 %v1318, %v1604
        %v1641 = vadd.f32 %v1319, %v1603
        %v1642 = vadd.f32 %v1320, %v1602
        %v1643 = vadd.f32 %v1321, %v1601
        %v1644 = vadd.f32 %v1322, %v1600
        %v1645 = vadd.f32 %v1323, %v1599
        %v1646 = vadd.f32 %v1324, %v1598
        %v1647 = vadd.f32 %v1325, %v1597
        %v1648 = vadd.f32 %v1326, %v1596
        %v1649 = vadd.f32 %v1327, %v1595
        %v1650 = vadd.f32 %v1328, %v1594
        %v1651 = vadd.f32 %v1329, %v1593
        %v1652 = vadd.f32 %v1330, %v1592
        %v1653 = vadd.f32 %v1331, %v1591
        %v1654 = vadd.f32 %v1332, %v1622
        %v1655 = vld [vmem:[%s1 + $0x108] sm:$0xf]
        %v1656 = vld [vmem:[%s1 + $0x10c] sm:$0xf]
        %v1657 = vld [vmem:[%s1 + $0x110] sm:$0xf]
        %v1658 = vld [vmem:[%s1 + $0x114] sm:$0xf]
        %v1659 = vld [vmem:[%s1 + $0x118] sm:$0xf]
        %v1660 = vld [vmem:[%s1 + $0x11c] sm:$0xf]
        %v1661 = vld [vmem:[%s1 + $0x120] sm:$0xf]
        %v1662 = vld [vmem:[%s1 + $0x124] sm:$0xf]
        %v1663 = vld [vmem:[%s1 + $0x128] sm:$0xf]
        %v1664 = vld [vmem:[%s1 + $0x12c] sm:$0xf]
        %v1665 = vld [vmem:[%s1 + $0x130] sm:$0xf]
        %v1666 = vld [vmem:[%s1 + $0x134] sm:$0xf]
        %v1667 = vld [vmem:[%s1 + $0x138] sm:$0xf]
        %v1668 = vld [vmem:[%s1 + $0x13c] sm:$0xf]
        %v1669 = vld [vmem:[%s1 + $0x140] sm:$0xf]
        %v1670 = vld [vmem:[%s1 + $0x144] sm:$0xf]
        %v1687 = vunpack.c.l.b16 %v1655
        %v1688 = vunpack.c.l.b16 %v1656
        %v1689 = vunpack.c.l.b16 %v1657
        %v1690 = vunpack.c.l.b16 %v1658
        %v1691 = vunpack.c.l.b16 %v1659
        %v1692 = vunpack.c.l.b16 %v1660
        %v1693 = vunpack.c.l.b16 %v1661
        %v1694 = vunpack.c.l.b16 %v1662
        %v1695 = vunpack.c.l.b16 %v1663
        %v1696 = vunpack.c.l.b16 %v1664
        %v1697 = vunpack.c.l.b16 %v1665
        %v1698 = vunpack.c.l.b16 %v1666
        %v1699 = vunpack.c.l.b16 %v1667
        %v1700 = vunpack.c.l.b16 %v1668
        %v1701 = vunpack.c.l.b16 %v1669
        %v1702 = vunpack.c.l.b16 %v1670
        %v1703 = vpack.c.b16 %v1688, %v1687
        %v1704 = vpack.c.b16 %v1690, %v1689
        %v1705 = vpack.c.b16 %v1692, %v1691
        %v1706 = vpack.c.b16 %v1694, %v1693
        %v1707 = vpack.c.b16 %v1696, %v1695
        %v1708 = vpack.c.b16 %v1698, %v1697
        %v1709 = vpack.c.b16 %v1700, %v1699
        %v1710 = vpack.c.b16 %v1702, %v1701
        %1719 = vmatprep.subr.bf16.mxu0 0
        %1720 = vmatpush1.bf16.msra.mxu0 %v1703
        %1721 = vmatprep.subr.bf16.mxu0 0
        %1722 = vmatpush1.bf16.msra.mxu0 %v1704
        %1723 = vmatprep.subr.bf16.mxu0 0
        %1724 = vmatpush1.bf16.msra.mxu0 %v1705
        %1725 = vmatprep.subr.bf16.mxu0 0
        %1726 = vmatpush1.bf16.msra.mxu0 %v1706
        %1727 = vmatprep.subr.bf16.mxu0 0
        %1728 = vmatpush1.bf16.msra.mxu0 %v1707
        %1729 = vmatprep.subr.bf16.mxu0 0
        %1730 = vmatpush1.bf16.msra.mxu0 %v1708
        %1731 = vmatprep.subr.bf16.mxu0 0
        %1732 = vmatpush1.bf16.msra.mxu0 %v1709
        %1733 = vmatprep.subr.bf16.mxu0 0
        %1734 = vmatpush1.bf16.msra.mxu0 %v1710
        %1735 = vmatprep.subr.bf16.mxu0 0
        %1736 = vmatpush1.bf16.msra.mxu0 0
        %1737 = vmatprep.subr.bf16.mxu0 0
        %1738 = vmatpush1.bf16.msra.mxu0 0
        %1739 = vmatprep.subr.bf16.mxu0 0
        %1740 = vmatpush1.bf16.msra.mxu0 0
        %1741 = vmatprep.subr.bf16.mxu0 0
        %1742 = vmatpush1.bf16.msra.mxu0 0
        %1743 = vmatprep.subr.bf16.mxu0 0
        %1744 = vmatpush1.bf16.msra.mxu0 0
        %1745 = vmatprep.subr.bf16.mxu0 0
        %1746 = vmatpush1.bf16.msra.mxu0 0
        %1747 = vmatprep.subr.bf16.mxu0 0
        %1748 = vmatpush1.bf16.msra.mxu0 0
        %1749 = vmatprep.subr.bf16.mxu0 0
        %1750 = vmatpush1.bf16.msra.mxu0 0
        %1751 = vmatprep.mubr.bf16.mxu0 0
        %1752 = vmatmul.mubr.bf16.gmra.mrb[0].mxu0 %v478
        %v1753 = vpop.f32.mrb[0].mxu0
        %v1754 = vadd.f32 0.0, %v1753
        %v1755 = vpop.f32.mrb[0].mxu0
        %v1756 = vpop.f32.mrb[0].mxu0
        %v1757 = vadd.f32 0.0, %v1756
        %v1758 = vpop.f32.mrb[0].mxu0
        %1759 = vmatprep.mubr.bf16.mxu0 0
        %1760 = vmatmul.mubr.bf16.gmra.mrb[0].mxu0 %v479
        %v1761 = vpop.f32.mrb[0].mxu0
        %v1762 = vadd.f32 0.0, %v1761
        %v1763 = vpop.f32.mrb[0].mxu0
        %v1764 = vpop.f32.mrb[0].mxu0
        %v1765 = vadd.f32 0.0, %v1764
        %v1766 = vpop.f32.mrb[0].mxu0
        %1767 = vmatprep.mubr.bf16.mxu0 0
        %1768 = vmatmul.mubr.bf16.gmra.mrb[0].mxu0 %v480
        %v1769 = vpop.f32.mrb[0].mxu0
        %v1770 = vadd.f32 0.0, %v1769
        %v1771 = vpop.f32.mrb[0].mxu0
        %v1772 = vpop.f32.mrb[0].mxu0
        %v1773 = vadd.f32 0.0, %v1772
        %v1774 = vpop.f32.mrb[0].mxu0
        %1775 = vmatprep.mubr.bf16.mxu0 0
        %1776 = vmatmul.mubr.bf16.gmra.mrb[0].mxu0 %v481
        %v1777 = vpop.f32.mrb[0].mxu0
        %v1778 = vadd.f32 0.0, %v1777
        %v1779 = vpop.f32.mrb[0].mxu0
        %v1780 = vpop.f32.mrb[0].mxu0
        %v1781 = vadd.f32 0.0, %v1780
        %v1782 = vpop.f32.mrb[0].mxu0
        %1783 = vmatprep.mubr.bf16.mxu0 0
        %1784 = vmatmul.mubr.bf16.gmra.mrb[0].mxu0 %v482
        %v1785 = vpop.f32.mrb[0].mxu0
        %v1786 = vadd.f32 0.0, %v1785
        %v1787 = vpop.f32.mrb[0].mxu0
        %v1788 = vpop.f32.mrb[0].mxu0
        %v1789 = vadd.f32 0.0, %v1788
        %v1790 = vpop.f32.mrb[0].mxu0
        %1791 = vmatprep.mubr.bf16.mxu0 0
        %1792 = vmatmul.mubr.bf16.gmra.mrb[0].mxu0 %v483
        %v1793 = vpop.f32.mrb[0].mxu0
        %v1794 = vadd.f32 0.0, %v1793
        %v1795 = vpop.f32.mrb[0].mxu0
        %v1796 = vpop.f32.mrb[0].mxu0
        %v1797 = vadd.f32 0.0, %v1796
        %v1798 = vpop.f32.mrb[0].mxu0
        %1799 = vmatprep.mubr.bf16.mxu0 0
        %1800 = vmatmul.mubr.bf16.gmra.mrb[0].mxu0 %v484
        %v1801 = vpop.f32.mrb[0].mxu0
        %v1802 = vadd.f32 0.0, %v1801
        %v1803 = vpop.f32.mrb[0].mxu0
        %v1804 = vpop.f32.mrb[0].mxu0
        %v1805 = vadd.f32 0.0, %v1804
        %v1806 = vpop.f32.mrb[0].mxu0
        %1807 = vmatprep.mubr.bf16.mxu0 0
        %1808 = vmatmul.mubr.bf16.gmra.mrb[0].mxu0 %v485
        %v1809 = vpop.f32.mrb[0].mxu0
        %v1810 = vadd.f32 0.0, %v1809
        %v1811 = vpop.f32.mrb[0].mxu0
        %v1812 = vpop.f32.mrb[0].mxu0
        %v1813 = vadd.f32 0.0, %v1812
        %v1814 = vpop.f32.mrb[0].mxu0
        %1815 = vmatprep.mubr.bf16.mxu0 0
        %1816 = vmatmul.mubr.bf16.gmra.mrb[0].mxu0 %v486
        %v1817 = vpop.f32.mrb[0].mxu0
        %v1818 = vadd.f32 0.0, %v1817
        %v1819 = vpop.f32.mrb[0].mxu0
        %v1820 = vpop.f32.mrb[0].mxu0
        %v1821 = vadd.f32 0.0, %v1820
        %v1822 = vpop.f32.mrb[0].mxu0
        %1823 = vmatprep.mubr.bf16.mxu0 0
        %1824 = vmatmul.mubr.bf16.gmra.mrb[0].mxu0 %v487
        %v1825 = vpop.f32.mrb[0].mxu0
        %v1826 = vadd.f32 0.0, %v1825
        %v1827 = vpop.f32.mrb[0].mxu0
        %v1828 = vpop.f32.mrb[0].mxu0
        %v1829 = vadd.f32 0.0, %v1828
        %v1830 = vpop.f32.mrb[0].mxu0
        %1831 = vmatprep.mubr.bf16.mxu0 0
        %1832 = vmatmul.mubr.bf16.gmra.mrb[0].mxu0 %v488
        %v1833 = vpop.f32.mrb[0].mxu0
        %v1834 = vadd.f32 0.0, %v1833
        %v1835 = vpop.f32.mrb[0].mxu0
        %v1836 = vpop.f32.mrb[0].mxu0
        %v1837 = vadd.f32 0.0, %v1836
        %v1838 = vpop.f32.mrb[0].mxu0
        %1839 = vmatprep.mubr.bf16.mxu0 0
        %1840 = vmatmul.mubr.bf16.gmra.mrb[0].mxu0 %v489
        %v1841 = vpop.f32.mrb[0].mxu0
        %v1842 = vadd.f32 0.0, %v1841
        %v1843 = vpop.f32.mrb[0].mxu0
        %v1844 = vpop.f32.mrb[0].mxu0
        %v1845 = vadd.f32 0.0, %v1844
        %v1846 = vpop.f32.mrb[0].mxu0
        %1847 = vmatprep.mubr.bf16.mxu0 0
        %1848 = vmatmul.mubr.bf16.gmra.mrb[0].mxu0 %v490
        %v1849 = vpop.f32.mrb[0].mxu0
        %v1850 = vadd.f32 0.0, %v1849
        %v1851 = vpop.f32.mrb[0].mxu0
        %v1852 = vpop.f32.mrb[0].mxu0
        %v1853 = vadd.f32 0.0, %v1852
        %v1854 = vpop.f32.mrb[0].mxu0
        %1855 = vmatprep.mubr.bf16.mxu0 0
        %1856 = vmatmul.mubr.bf16.gmra.mrb[0].mxu0 %v491
        %v1857 = vpop.f32.mrb[0].mxu0
        %v1858 = vadd.f32 0.0, %v1857
        %v1859 = vpop.f32.mrb[0].mxu0
        %v1860 = vpop.f32.mrb[0].mxu0
        %v1861 = vadd.f32 0.0, %v1860
        %v1862 = vpop.f32.mrb[0].mxu0
        %1863 = vmatprep.mubr.bf16.mxu0 0
        %1864 = vmatmul.mubr.bf16.gmra.mrb[0].mxu0 %v492
        %v1865 = vpop.f32.mrb[0].mxu0
        %v1866 = vadd.f32 0.0, %v1865
        %v1867 = vpop.f32.mrb[0].mxu0
        %v1868 = vpop.f32.mrb[0].mxu0
        %v1869 = vadd.f32 0.0, %v1868
        %v1870 = vpop.f32.mrb[0].mxu0
        %1871 = vmatprep.mubr.bf16.mxu0 0
        %1872 = vmatmul.mubr.bf16.gmra.mrb[0].mxu0 %v493
        %v1873 = vpop.f32.mrb[0].mxu0
        %v1874 = vadd.f32 0.0, %v1873
        %v1875 = vpop.f32.mrb[0].mxu0
        %v1876 = vpop.f32.mrb[0].mxu0
        %v1877 = vadd.f32 0.0, %v1876
        %v1878 = vpop.f32.mrb[0].mxu0
        %1879 = vdwg.mxu0
        %v1880 = vrot.slane %v1754, 4
        %v1881 = vrot.slane %v1757, 4
        %v1882 = vrot.slane %v1762, 4
        %v1883 = vrot.slane %v1765, 4
        %v1884 = vrot.slane %v1770, 4
        %v1885 = vrot.slane %v1773, 4
        %v1886 = vrot.slane %v1778, 4
        %v1887 = vrot.slane %v1781, 4
        %v1888 = vrot.slane %v1786, 4
        %v1889 = vrot.slane %v1789, 4
        %v1890 = vrot.slane %v1794, 4
        %v1891 = vrot.slane %v1797, 4
        %v1892 = vrot.slane %v1802, 4
        %v1893 = vrot.slane %v1805, 4
        %v1894 = vrot.slane %v1810, 4
        %v1895 = vrot.slane %v1813, 4
        %v1896 = vrot.slane %v1818, 4
        %v1897 = vrot.slane %v1821, 4
        %v1898 = vrot.slane %v1826, 4
        %v1899 = vrot.slane %v1829, 4
        %v1900 = vrot.slane %v1834, 4
        %v1901 = vrot.slane %v1837, 4
        %v1902 = vrot.slane %v1842, 4
        %v1903 = vrot.slane %v1845, 4
        %v1904 = vrot.slane %v1850, 4
        %v1905 = vrot.slane %v1853, 4
        %v1906 = vrot.slane %v1858, 4
        %v1907 = vrot.slane %v1861, 4
        %v1908 = vrot.slane %v1866, 4
        %v1909 = vrot.slane %v1869, 4
        %v1910 = vrot.slane %v1874, 4
        %v1911 = vrot.slane %v1877, 4
        %vm1912 = vcmp.lt.s32.totalorder %v768, 4
        %v1913 = vsel %vm1912, %v1910, %v1911
        %v1914 = vsel %vm1912, %v1909, %v1910
        %v1915 = vsel %vm1912, %v1908, %v1909
        %v1916 = vsel %vm1912, %v1907, %v1908
        %v1917 = vsel %vm1912, %v1906, %v1907
        %v1918 = vsel %vm1912, %v1905, %v1906
        %v1919 = vsel %vm1912, %v1904, %v1905
        %v1920 = vsel %vm1912, %v1903, %v1904
        %v1921 = vsel %vm1912, %v1902, %v1903
        %v1922 = vsel %vm1912, %v1901, %v1902
        %v1923 = vsel %vm1912, %v1900, %v1901
        %v1924 = vsel %vm1912, %v1899, %v1900
        %v1925 = vsel %vm1912, %v1898, %v1899
        %v1926 = vsel %vm1912, %v1897, %v1898
        %v1927 = vsel %vm1912, %v1896, %v1897
        %v1928 = vsel %vm1912, %v1895, %v1896
        %v1929 = vsel %vm1912, %v1894, %v1895
        %v1930 = vsel %vm1912, %v1893, %v1894
        %v1931 = vsel %vm1912, %v1892, %v1893
        %v1932 = vsel %vm1912, %v1891, %v1892
        %v1933 = vsel %vm1912, %v1890, %v1891
        %v1934 = vsel %vm1912, %v1889, %v1890
        %v1935 = vsel %vm1912, %v1888, %v1889
        %v1936 = vsel %vm1912, %v1887, %v1888
        %v1937 = vsel %vm1912, %v1886, %v1887
        %v1938 = vsel %vm1912, %v1885, %v1886
        %v1939 = vsel %vm1912, %v1884, %v1885
        %v1940 = vsel %vm1912, %v1883, %v1884
        %v1941 = vsel %vm1912, %v1882, %v1883
        %v1942 = vsel %vm1912, %v1881, %v1882
        %v1943 = vsel %vm1912, %v1880, %v1881
        %v1944 = vsel %vm1912, %v1911, %v1880
        %v1945 = vadd.f32 %v1623, %v1943
        %v1946 = vadd.f32 %v1624, %v1942
        %v1947 = vadd.f32 %v1625, %v1941
        %v1948 = vadd.f32 %v1626, %v1940
        %v1949 = vadd.f32 %v1627, %v1939
        %v1950 = vadd.f32 %v1628, %v1938
        %v1951 = vadd.f32 %v1629, %v1937
        %v1952 = vadd.f32 %v1630, %v1936
        %v1953 = vadd.f32 %v1631, %v1935
        %v1954 = vadd.f32 %v1632, %v1934
        %v1955 = vadd.f32 %v1633, %v1933
        %v1956 = vadd.f32 %v1634, %v1932
        %v1957 = vadd.f32 %v1635, %v1931
        %v1958 = vadd.f32 %v1636, %v1930
        %v1959 = vadd.f32 %v1637, %v1929
        %v1960 = vadd.f32 %v1638, %v1928
        %v1961 = vadd.f32 %v1639, %v1927
        %v1962 = vadd.f32 %v1640, %v1926
        %v1963 = vadd.f32 %v1641, %v1925
        %v1964 = vadd.f32 %v1642, %v1924
        %v1965 = vadd.f32 %v1643, %v1923
        %v1966 = vadd.f32 %v1644, %v1922
        %v1967 = vadd.f32 %v1645, %v1921
        %v1968 = vadd.f32 %v1646, %v1920
        %v1969 = vadd.f32 %v1647, %v1919
        %v1970 = vadd.f32 %v1648, %v1918
        %v1971 = vadd.f32 %v1649, %v1917
        %v1972 = vadd.f32 %v1650, %v1916
        %v1973 = vadd.f32 %v1651, %v1915
        %v1974 = vadd.f32 %v1652, %v1914
        %v1975 = vadd.f32 %v1653, %v1913
        %v1976 = vadd.f32 %v1654, %v1944
        %v1977 = vld [vmem:[%s2 + $0x1] sm:$0x1]
        %v1978 = vlaneseq
        %v1979 = vshrl.u32 %v1978, 7
        %v1980 = vsub.s32 0, %v1979
        %v1981 = vrot.slane %v1977, %v1980
        %v1982 = vadd.f32 %v1945, %v1981
        %v1983 = vadd.f32 %v1946, %v1981
        %v1984 = vadd.f32 %v1947, %v1981
        %v1985 = vadd.f32 %v1948, %v1981
        %v1986 = vadd.f32 %v1949, %v1981
        %v1987 = vadd.f32 %v1950, %v1981
        %v1988 = vadd.f32 %v1951, %v1981
        %v1989 = vadd.f32 %v1952, %v1981
        %v1990 = vadd.f32 %v1953, %v1981
        %v1991 = vadd.f32 %v1954, %v1981
        %v1992 = vadd.f32 %v1955, %v1981
        %v1993 = vadd.f32 %v1956, %v1981
        %v1994 = vadd.f32 %v1957, %v1981
        %v1995 = vadd.f32 %v1958, %v1981
        %v1996 = vadd.f32 %v1959, %v1981
        %v1997 = vadd.f32 %v1960, %v1981
        %v1998 = vadd.f32 %v1961, %v1981
        %v1999 = vadd.f32 %v1962, %v1981
        %v2000 = vadd.f32 %v1963, %v1981
        %v2001 = vadd.f32 %v1964, %v1981
        %v2002 = vadd.f32 %v1965, %v1981
        %v2003 = vadd.f32 %v1966, %v1981
        %v2004 = vadd.f32 %v1967, %v1981
        %v2005 = vadd.f32 %v1968, %v1981
        %v2006 = vadd.f32 %v1969, %v1981
        %v2007 = vadd.f32 %v1970, %v1981
        %v2008 = vadd.f32 %v1971, %v1981
        %v2009 = vadd.f32 %v1972, %v1981
        %v2010 = vadd.f32 %v1973, %v1981
        %v2011 = vadd.f32 %v1974, %v1981
        %v2012 = vadd.f32 %v1975, %v1981
        %v2013 = vadd.f32 %v1976, %v1981
        %v2014 = vmax.f32 %v1982, 0.0
        %v2015 = vmax.f32 %v1983, 0.0
        %v2016 = vmax.f32 %v1984, 0.0
        %v2017 = vmax.f32 %v1985, 0.0
        %v2018 = vmax.f32 %v1986, 0.0
        %v2019 = vmax.f32 %v1987, 0.0
        %v2020 = vmax.f32 %v1988, 0.0
        %v2021 = vmax.f32 %v1989, 0.0
        %v2022 = vmax.f32 %v1990, 0.0
        %v2023 = vmax.f32 %v1991, 0.0
        %v2024 = vmax.f32 %v1992, 0.0
        %v2025 = vmax.f32 %v1993, 0.0
        %v2026 = vmax.f32 %v1994, 0.0
        %v2027 = vmax.f32 %v1995, 0.0
        %v2028 = vmax.f32 %v1996, 0.0
        %v2029 = vmax.f32 %v1997, 0.0
        %v2030 = vmax.f32 %v1998, 0.0
        %v2031 = vmax.f32 %v1999, 0.0
        %v2032 = vmax.f32 %v2000, 0.0
        %v2033 = vmax.f32 %v2001, 0.0
        %v2034 = vmax.f32 %v2002, 0.0
        %v2035 = vmax.f32 %v2003, 0.0
        %v2036 = vmax.f32 %v2004, 0.0
        %v2037 = vmax.f32 %v2005, 0.0
        %v2038 = vmax.f32 %v2006, 0.0
        %v2039 = vmax.f32 %v2007, 0.0
        %v2040 = vmax.f32 %v2008, 0.0
        %v2041 = vmax.f32 %v2009, 0.0
        %v2042 = vmax.f32 %v2010, 0.0
        %v2043 = vmax.f32 %v2011, 0.0
        %v2044 = vmax.f32 %v2012, 0.0
        %v2045 = vmax.f32 %v2013, 0.0
        %v2046 = vpack.c.bf16 %v2015, %v2014
        %v2047 = vpack.c.bf16 %v2017, %v2016
        %v2048 = vpack.c.bf16 %v2019, %v2018
        %v2049 = vpack.c.bf16 %v2021, %v2020
        %v2050 = vpack.c.bf16 %v2023, %v2022
        %v2051 = vpack.c.bf16 %v2025, %v2024
        %v2052 = vpack.c.bf16 %v2027, %v2026
        %v2053 = vpack.c.bf16 %v2029, %v2028
        %v2054 = vpack.c.bf16 %v2031, %v2030
        %v2055 = vpack.c.bf16 %v2033, %v2032
        %v2056 = vpack.c.bf16 %v2035, %v2034
        %v2057 = vpack.c.bf16 %v2037, %v2036
        %v2058 = vpack.c.bf16 %v2039, %v2038
        %v2059 = vpack.c.bf16 %v2041, %v2040
        %v2060 = vpack.c.bf16 %v2043, %v2042
        %v2061 = vpack.c.bf16 %v2045, %v2044
        %v2062 = vld [vmem:[%s1 + $0x148] sm:$0xf]
        %v2063 = vld [vmem:[%s1 + $0x14c] sm:$0xf]
        %v2064 = vld [vmem:[%s1 + $0x150] sm:$0xf]
        %v2065 = vld [vmem:[%s1 + $0x154] sm:$0xf]
        %v2066 = vld [vmem:[%s1 + $0x158] sm:$0xf]
        %v2067 = vld [vmem:[%s1 + $0x15c] sm:$0xf]
        %v2068 = vld [vmem:[%s1 + $0x160] sm:$0xf]
        %v2069 = vld [vmem:[%s1 + $0x164] sm:$0xf]
        %v2070 = vld [vmem:[%s1 + $0x168] sm:$0xf]
        %v2071 = vld [vmem:[%s1 + $0x16c] sm:$0xf]
        %v2072 = vld [vmem:[%s1 + $0x170] sm:$0xf]
        %v2073 = vld [vmem:[%s1 + $0x174] sm:$0xf]
        %v2074 = vld [vmem:[%s1 + $0x178] sm:$0xf]
        %v2075 = vld [vmem:[%s1 + $0x17c] sm:$0xf]
        %v2076 = vld [vmem:[%s1 + $0x180] sm:$0xf]
        %v2077 = vld [vmem:[%s1 + $0x184] sm:$0xf]
        %v2078 = vld [vmem:[%s1 + $0x188] sm:$0xf]
        %v2079 = vld [vmem:[%s1 + $0x18c] sm:$0xf]
        %v2080 = vld [vmem:[%s1 + $0x190] sm:$0xf]
        %v2081 = vld [vmem:[%s1 + $0x194] sm:$0xf]
        %v2082 = vld [vmem:[%s1 + $0x198] sm:$0xf]
        %v2083 = vld [vmem:[%s1 + $0x19c] sm:$0xf]
        %v2084 = vld [vmem:[%s1 + $0x1a0] sm:$0xf]
        %v2085 = vld [vmem:[%s1 + $0x1a4] sm:$0xf]
        %v2086 = vld [vmem:[%s1 + $0x1a8] sm:$0xf]
        %v2087 = vld [vmem:[%s1 + $0x1ac] sm:$0xf]
        %v2088 = vld [vmem:[%s1 + $0x1b0] sm:$0xf]
        %v2089 = vld [vmem:[%s1 + $0x1b4] sm:$0xf]
        %v2090 = vld [vmem:[%s1 + $0x1b8] sm:$0xf]
        %v2091 = vld [vmem:[%s1 + $0x1bc] sm:$0xf]
        %v2092 = vld [vmem:[%s1 + $0x1c0] sm:$0xf]
        %v2093 = vld [vmem:[%s1 + $0x1c4] sm:$0xf]
        %v2110 = vunpack.c.l.b16 %v2078
        %v2111 = vunpack.c.l.b16 %v2079
        %v2112 = vunpack.c.l.b16 %v2080
        %v2113 = vunpack.c.l.b16 %v2081
        %v2114 = vunpack.c.l.b16 %v2082
        %v2115 = vunpack.c.l.b16 %v2083
        %v2116 = vunpack.c.l.b16 %v2084
        %v2117 = vunpack.c.l.b16 %v2085
        %v2118 = vunpack.c.l.b16 %v2086
        %v2119 = vunpack.c.l.b16 %v2087
        %v2120 = vunpack.c.l.b16 %v2088
        %v2121 = vunpack.c.l.b16 %v2089
        %v2122 = vunpack.c.l.b16 %v2090
        %v2123 = vunpack.c.l.b16 %v2091
        %v2124 = vunpack.c.l.b16 %v2092
        %v2125 = vunpack.c.l.b16 %v2093
        %v2126 = vpack.c.b16 %v2111, %v2110
        %v2127 = vpack.c.b16 %v2113, %v2112
        %v2128 = vpack.c.b16 %v2115, %v2114
        %v2129 = vpack.c.b16 %v2117, %v2116
        %v2130 = vpack.c.b16 %v2119, %v2118
        %v2131 = vpack.c.b16 %v2121, %v2120
        %v2132 = vpack.c.b16 %v2123, %v2122
        %v2133 = vpack.c.b16 %v2125, %v2124
        %2142 = vmatprep.subr.bf16.mxu0 0
        %2143 = vmatpush1.bf16.msra.mxu0 %v2126
        %2144 = vmatprep.subr.bf16.mxu0 0
        %2145 = vmatpush1.bf16.msra.mxu0 %v2127
        %2146 = vmatprep.subr.bf16.mxu0 0
        %2147 = vmatpush1.bf16.msra.mxu0 %v2128
        %2148 = vmatprep.subr.bf16.mxu0 0
        %2149 = vmatpush1.bf16.msra.mxu0 %v2129
        %2150 = vmatprep.subr.bf16.mxu0 0
        %2151 = vmatpush1.bf16.msra.mxu0 %v2130
        %2152 = vmatprep.subr.bf16.mxu0 0
        %2153 = vmatpush1.bf16.msra.mxu0 %v2131
        %2154 = vmatprep.subr.bf16.mxu0 0
        %2155 = vmatpush1.bf16.msra.mxu0 %v2132
        %2156 = vmatprep.subr.bf16.mxu0 0
        %2157 = vmatpush1.bf16.msra.mxu0 %v2133
        %2158 = vmatprep.subr.bf16.mxu0 0
        %2159 = vmatpush1.bf16.msra.mxu0 0
        %2160 = vmatprep.subr.bf16.mxu0 0
        %2161 = vmatpush1.bf16.msra.mxu0 0
        %2162 = vmatprep.subr.bf16.mxu0 0
        %2163 = vmatpush1.bf16.msra.mxu0 0
        %2164 = vmatprep.subr.bf16.mxu0 0
        %2165 = vmatpush1.bf16.msra.mxu0 0
        %2166 = vmatprep.subr.bf16.mxu0 0
        %2167 = vmatpush1.bf16.msra.mxu0 0
        %2168 = vmatprep.subr.bf16.mxu0 0
        %2169 = vmatpush1.bf16.msra.mxu0 0
        %2170 = vmatprep.subr.bf16.mxu0 0
        %2171 = vmatpush1.bf16.msra.mxu0 0
        %2172 = vmatprep.subr.bf16.mxu0 0
        %2173 = vmatpush1.bf16.msra.mxu0 0
        %2174 = vmatprep.mubr.bf16.mxu0 0
        %2175 = vmatmul.mubr.bf16.gmra.mrb[0].mxu0 %v2046
        %v2176 = vpop.f32.mrb[0].mxu0
        %v2177 = vadd.f32 0.0, %v2176
        %v2178 = vpop.f32.mrb[0].mxu0
        %v2179 = vpop.f32.mrb[0].mxu0
        %v2180 = vadd.f32 0.0, %v2179
        %v2181 = vpop.f32.mrb[0].mxu0
        %2182 = vmatprep.mubr.bf16.mxu0 0
        %2183 = vmatmul.mubr.bf16.gmra.mrb[0].mxu0 %v2047
        %v2184 = vpop.f32.mrb[0].mxu0
        %v2185 = vadd.f32 0.0, %v2184
        %v2186 = vpop.f32.mrb[0].mxu0
        %v2187 = vpop.f32.mrb[0].mxu0
        %v2188 = vadd.f32 0.0, %v2187
        %v2189 = vpop.f32.mrb[0].mxu0
        %2190 = vmatprep.mubr.bf16.mxu0 0
        %2191 = vmatmul.mubr.bf16.gmra.mrb[0].mxu0 %v2048
        %v2192 = vpop.f32.mrb[0].mxu0
        %v2193 = vadd.f32 0.0, %v2192
        %v2194 = vpop.f32.mrb[0].mxu0
        %v2195 = vpop.f32.mrb[0].mxu0
        %v2196 = vadd.f32 0.0, %v2195
        %v2197 = vpop.f32.mrb[0].mxu0
        %2198 = vmatprep.mubr.bf16.mxu0 0
        %2199 = vmatmul.mubr.bf16.gmra.mrb[0].mxu0 %v2049
        %v2200 = vpop.f32.mrb[0].mxu0
        %v2201 = vadd.f32 0.0, %v2200
        %v2202 = vpop.f32.mrb[0].mxu0
        %v2203 = vpop.f32.mrb[0].mxu0
        %v2204 = vadd.f32 0.0, %v2203
        %v2205 = vpop.f32.mrb[0].mxu0
        %2206 = vmatprep.mubr.bf16.mxu0 0
        %2207 = vmatmul.mubr.bf16.gmra.mrb[0].mxu0 %v2050
        %v2208 = vpop.f32.mrb[0].mxu0
        %v2209 = vadd.f32 0.0, %v2208
        %v2210 = vpop.f32.mrb[0].mxu0
        %v2211 = vpop.f32.mrb[0].mxu0
        %v2212 = vadd.f32 0.0, %v2211
        %v2213 = vpop.f32.mrb[0].mxu0
        %2214 = vmatprep.mubr.bf16.mxu0 0
        %2215 = vmatmul.mubr.bf16.gmra.mrb[0].mxu0 %v2051
        %v2216 = vpop.f32.mrb[0].mxu0
        %v2217 = vadd.f32 0.0, %v2216
        %v2218 = vpop.f32.mrb[0].mxu0
        %v2219 = vpop.f32.mrb[0].mxu0
        %v2220 = vadd.f32 0.0, %v2219
        %v2221 = vpop.f32.mrb[0].mxu0
        %2222 = vmatprep.mubr.bf16.mxu0 0
        %2223 = vmatmul.mubr.bf16.gmra.mrb[0].mxu0 %v2052
        %v2224 = vpop.f32.mrb[0].mxu0
        %v2225 = vadd.f32 0.0, %v2224
        %v2226 = vpop.f32.mrb[0].mxu0
        %v2227 = vpop.f32.mrb[0].mxu0
        %v2228 = vadd.f32 0.0, %v2227
        %v2229 = vpop.f32.mrb[0].mxu0
        %2230 = vmatprep.mubr.bf16.mxu0 0
        %2231 = vmatmul.mubr.bf16.gmra.mrb[0].mxu0 %v2053
        %v2232 = vpop.f32.mrb[0].mxu0
        %v2233 = vadd.f32 0.0, %v2232
        %v2234 = vpop.f32.mrb[0].mxu0
        %v2235 = vpop.f32.mrb[0].mxu0
        %v2236 = vadd.f32 0.0, %v2235
        %v2237 = vpop.f32.mrb[0].mxu0
        %2238 = vmatprep.mubr.bf16.mxu0 0
        %2239 = vmatmul.mubr.bf16.gmra.mrb[0].mxu0 %v2054
        %v2240 = vpop.f32.mrb[0].mxu0
        %v2241 = vadd.f32 0.0, %v2240
        %v2242 = vpop.f32.mrb[0].mxu0
        %v2243 = vpop.f32.mrb[0].mxu0
        %v2244 = vadd.f32 0.0, %v2243
        %v2245 = vpop.f32.mrb[0].mxu0
        %2246 = vmatprep.mubr.bf16.mxu0 0
        %2247 = vmatmul.mubr.bf16.gmra.mrb[0].mxu0 %v2055
        %v2248 = vpop.f32.mrb[0].mxu0
        %v2249 = vadd.f32 0.0, %v2248
        %v2250 = vpop.f32.mrb[0].mxu0
        %v2251 = vpop.f32.mrb[0].mxu0
        %v2252 = vadd.f32 0.0, %v2251
        %v2253 = vpop.f32.mrb[0].mxu0
        %2254 = vmatprep.mubr.bf16.mxu0 0
        %2255 = vmatmul.mubr.bf16.gmra.mrb[0].mxu0 %v2056
        %v2256 = vpop.f32.mrb[0].mxu0
        %v2257 = vadd.f32 0.0, %v2256
        %v2258 = vpop.f32.mrb[0].mxu0
        %v2259 = vpop.f32.mrb[0].mxu0
        %v2260 = vadd.f32 0.0, %v2259
        %v2261 = vpop.f32.mrb[0].mxu0
        %2262 = vmatprep.mubr.bf16.mxu0 0
        %2263 = vmatmul.mubr.bf16.gmra.mrb[0].mxu0 %v2057
        %v2264 = vpop.f32.mrb[0].mxu0
        %v2265 = vadd.f32 0.0, %v2264
        %v2266 = vpop.f32.mrb[0].mxu0
        %v2267 = vpop.f32.mrb[0].mxu0
        %v2268 = vadd.f32 0.0, %v2267
        %v2269 = vpop.f32.mrb[0].mxu0
        %2270 = vmatprep.mubr.bf16.mxu0 0
        %2271 = vmatmul.mubr.bf16.gmra.mrb[0].mxu0 %v2058
        %v2272 = vpop.f32.mrb[0].mxu0
        %v2273 = vadd.f32 0.0, %v2272
        %v2274 = vpop.f32.mrb[0].mxu0
        %v2275 = vpop.f32.mrb[0].mxu0
        %v2276 = vadd.f32 0.0, %v2275
        %v2277 = vpop.f32.mrb[0].mxu0
        %2278 = vmatprep.mubr.bf16.mxu0 0
        %2279 = vmatmul.mubr.bf16.gmra.mrb[0].mxu0 %v2059
        %v2280 = vpop.f32.mrb[0].mxu0
        %v2281 = vadd.f32 0.0, %v2280
        %v2282 = vpop.f32.mrb[0].mxu0
        %v2283 = vpop.f32.mrb[0].mxu0
        %v2284 = vadd.f32 0.0, %v2283
        %v2285 = vpop.f32.mrb[0].mxu0
        %2286 = vmatprep.mubr.bf16.mxu0 0
        %2287 = vmatmul.mubr.bf16.gmra.mrb[0].mxu0 %v2060
        %v2288 = vpop.f32.mrb[0].mxu0
        %v2289 = vadd.f32 0.0, %v2288
        %v2290 = vpop.f32.mrb[0].mxu0
        %v2291 = vpop.f32.mrb[0].mxu0
        %v2292 = vadd.f32 0.0, %v2291
        %v2293 = vpop.f32.mrb[0].mxu0
        %2294 = vmatprep.mubr.bf16.mxu0 0
        %2295 = vmatmul.mubr.bf16.gmra.mrb[0].mxu0 %v2061
        %v2296 = vpop.f32.mrb[0].mxu0
        %v2297 = vadd.f32 0.0, %v2296
        %v2298 = vpop.f32.mrb[0].mxu0
        %v2299 = vpop.f32.mrb[0].mxu0
        %v2300 = vadd.f32 0.0, %v2299
        %v2301 = vpop.f32.mrb[0].mxu0
        %2302 = vdwg.mxu0
        %v2303 = vrot.slane %v2177, 2
        %v2304 = vrot.slane %v2180, 2
        %v2305 = vrot.slane %v2185, 2
        %v2306 = vrot.slane %v2188, 2
        %v2307 = vrot.slane %v2193, 2
        %v2308 = vrot.slane %v2196, 2
        %v2309 = vrot.slane %v2201, 2
        %v2310 = vrot.slane %v2204, 2
        %v2311 = vrot.slane %v2209, 2
        %v2312 = vrot.slane %v2212, 2
        %v2313 = vrot.slane %v2217, 2
        %v2314 = vrot.slane %v2220, 2
        %v2315 = vrot.slane %v2225, 2
        %v2316 = vrot.slane %v2228, 2
        %v2317 = vrot.slane %v2233, 2
        %v2318 = vrot.slane %v2236, 2
        %v2319 = vrot.slane %v2241, 2
        %v2320 = vrot.slane %v2244, 2
        %v2321 = vrot.slane %v2249, 2
        %v2322 = vrot.slane %v2252, 2
        %v2323 = vrot.slane %v2257, 2
        %v2324 = vrot.slane %v2260, 2
        %v2325 = vrot.slane %v2265, 2
        %v2326 = vrot.slane %v2268, 2
        %v2327 = vrot.slane %v2273, 2
        %v2328 = vrot.slane %v2276, 2
        %v2329 = vrot.slane %v2281, 2
        %v2330 = vrot.slane %v2284, 2
        %v2331 = vrot.slane %v2289, 2
        %v2332 = vrot.slane %v2292, 2
        %v2333 = vrot.slane %v2297, 2
        %v2334 = vrot.slane %v2300, 2
        %v2335 = vsel %vm1268, %v2333, %v2334
        %v2336 = vsel %vm1268, %v2332, %v2333
        %v2337 = vsel %vm1268, %v2331, %v2332
        %v2338 = vsel %vm1268, %v2330, %v2331
        %v2339 = vsel %vm1268, %v2329, %v2330
        %v2340 = vsel %vm1268, %v2328, %v2329
        %v2341 = vsel %vm1268, %v2327, %v2328
        %v2342 = vsel %vm1268, %v2326, %v2327
        %v2343 = vsel %vm1268, %v2325, %v2326
        %v2344 = vsel %vm1268, %v2324, %v2325
        %v2345 = vsel %vm1268, %v2323, %v2324
        %v2346 = vsel %vm1268, %v2322, %v2323
        %v2347 = vsel %vm1268, %v2321, %v2322
        %v2348 = vsel %vm1268, %v2320, %v2321
        %v2349 = vsel %vm1268, %v2319, %v2320
        %v2350 = vsel %vm1268, %v2318, %v2319
        %v2351 = vsel %vm1268, %v2317, %v2318
        %v2352 = vsel %vm1268, %v2316, %v2317
        %v2353 = vsel %vm1268, %v2315, %v2316
        %v2354 = vsel %vm1268, %v2314, %v2315
        %v2355 = vsel %vm1268, %v2313, %v2314
        %v2356 = vsel %vm1268, %v2312, %v2313
        %v2357 = vsel %vm1268, %v2311, %v2312
        %v2358 = vsel %vm1268, %v2310, %v2311
        %v2359 = vsel %vm1268, %v2309, %v2310
        %v2360 = vsel %vm1268, %v2308, %v2309
        %v2361 = vsel %vm1268, %v2307, %v2308
        %v2362 = vsel %vm1268, %v2306, %v2307
        %v2363 = vsel %vm1268, %v2305, %v2306
        %v2364 = vsel %vm1268, %v2304, %v2305
        %v2365 = vsel %vm1268, %v2303, %v2304
        %v2366 = vsel %vm1268, %v2334, %v2303
        %v2383 = vunpack.c.l.b16 %v2062
        %v2384 = vunpack.c.l.b16 %v2063
        %v2385 = vunpack.c.l.b16 %v2064
        %v2386 = vunpack.c.l.b16 %v2065
        %v2387 = vunpack.c.l.b16 %v2066
        %v2388 = vunpack.c.l.b16 %v2067
        %v2389 = vunpack.c.l.b16 %v2068
        %v2390 = vunpack.c.l.b16 %v2069
        %v2391 = vunpack.c.l.b16 %v2070
        %v2392 = vunpack.c.l.b16 %v2071
        %v2393 = vunpack.c.l.b16 %v2072
        %v2394 = vunpack.c.l.b16 %v2073
        %v2395 = vunpack.c.l.b16 %v2074
        %v2396 = vunpack.c.l.b16 %v2075
        %v2397 = vunpack.c.l.b16 %v2076
        %v2398 = vunpack.c.l.b16 %v2077
        %v2399 = vpack.c.b16 %v2384, %v2383
        %v2400 = vpack.c.b16 %v2386, %v2385
        %v2401 = vpack.c.b16 %v2388, %v2387
        %v2402 = vpack.c.b16 %v2390, %v2389
        %v2403 = vpack.c.b16 %v2392, %v2391
        %v2404 = vpack.c.b16 %v2394, %v2393
        %v2405 = vpack.c.b16 %v2396, %v2395
        %v2406 = vpack.c.b16 %v2398, %v2397
        %2415 = vmatprep.subr.bf16.mxu0 0
        %2416 = vmatpush1.bf16.msra.mxu0 %v2399
        %2417 = vmatprep.subr.bf16.mxu0 0
        %2418 = vmatpush1.bf16.msra.mxu0 %v2400
        %2419 = vmatprep.subr.bf16.mxu0 0
        %2420 = vmatpush1.bf16.msra.mxu0 %v2401
        %2421 = vmatprep.subr.bf16.mxu0 0
        %2422 = vmatpush1.bf16.msra.mxu0 %v2402
        %2423 = vmatprep.subr.bf16.mxu0 0
        %2424 = vmatpush1.bf16.msra.mxu0 %v2403
        %2425 = vmatprep.subr.bf16.mxu0 0
        %2426 = vmatpush1.bf16.msra.mxu0 %v2404
        %2427 = vmatprep.subr.bf16.mxu0 0
        %2428 = vmatpush1.bf16.msra.mxu0 %v2405
        %2429 = vmatprep.subr.bf16.mxu0 0
        %2430 = vmatpush1.bf16.msra.mxu0 %v2406
        %2431 = vmatprep.subr.bf16.mxu0 0
        %2432 = vmatpush1.bf16.msra.mxu0 0
        %2433 = vmatprep.subr.bf16.mxu0 0
        %2434 = vmatpush1.bf16.msra.mxu0 0
        %2435 = vmatprep.subr.bf16.mxu0 0
        %2436 = vmatpush1.bf16.msra.mxu0 0
        %2437 = vmatprep.subr.bf16.mxu0 0
        %2438 = vmatpush1.bf16.msra.mxu0 0
        %2439 = vmatprep.subr.bf16.mxu0 0
        %2440 = vmatpush1.bf16.msra.mxu0 0
        %2441 = vmatprep.subr.bf16.mxu0 0
        %2442 = vmatpush1.bf16.msra.mxu0 0
        %2443 = vmatprep.subr.bf16.mxu0 0
        %2444 = vmatpush1.bf16.msra.mxu0 0
        %2445 = vmatprep.subr.bf16.mxu0 0
        %2446 = vmatpush1.bf16.msra.mxu0 0
        %2447 = vmatprep.mubr.bf16.mxu0 0
        %2448 = vmatmul.mubr.bf16.gmra.mrb[0].mxu0 %v2046
        %v2449 = vpop.f32.mrb[0].mxu0
        %v2450 = vadd.f32 %v2365, %v2449
        %v2451 = vpop.f32.mrb[0].mxu0
        %v2452 = vpop.f32.mrb[0].mxu0
        %v2453 = vadd.f32 %v2364, %v2452
        %v2454 = vpop.f32.mrb[0].mxu0
        %2455 = vmatprep.mubr.bf16.mxu0 0
        %2456 = vmatmul.mubr.bf16.gmra.mrb[0].mxu0 %v2047
        %v2457 = vpop.f32.mrb[0].mxu0
        %v2458 = vadd.f32 %v2363, %v2457
        %v2459 = vpop.f32.mrb[0].mxu0
        %v2460 = vpop.f32.mrb[0].mxu0
        %v2461 = vadd.f32 %v2362, %v2460
        %v2462 = vpop.f32.mrb[0].mxu0
        %2463 = vmatprep.mubr.bf16.mxu0 0
        %2464 = vmatmul.mubr.bf16.gmra.mrb[0].mxu0 %v2048
        %v2465 = vpop.f32.mrb[0].mxu0
        %v2466 = vadd.f32 %v2361, %v2465
        %v2467 = vpop.f32.mrb[0].mxu0
        %v2468 = vpop.f32.mrb[0].mxu0
        %v2469 = vadd.f32 %v2360, %v2468
        %v2470 = vpop.f32.mrb[0].mxu0
        %2471 = vmatprep.mubr.bf16.mxu0 0
        %2472 = vmatmul.mubr.bf16.gmra.mrb[0].mxu0 %v2049
        %v2473 = vpop.f32.mrb[0].mxu0
        %v2474 = vadd.f32 %v2359, %v2473
        %v2475 = vpop.f32.mrb[0].mxu0
        %v2476 = vpop.f32.mrb[0].mxu0
        %v2477 = vadd.f32 %v2358, %v2476
        %v2478 = vpop.f32.mrb[0].mxu0
        %2479 = vmatprep.mubr.bf16.mxu0 0
        %2480 = vmatmul.mubr.bf16.gmra.mrb[0].mxu0 %v2050
        %v2481 = vpop.f32.mrb[0].mxu0
        %v2482 = vadd.f32 %v2357, %v2481
        %v2483 = vpop.f32.mrb[0].mxu0
        %v2484 = vpop.f32.mrb[0].mxu0
        %v2485 = vadd.f32 %v2356, %v2484
        %v2486 = vpop.f32.mrb[0].mxu0
        %2487 = vmatprep.mubr.bf16.mxu0 0
        %2488 = vmatmul.mubr.bf16.gmra.mrb[0].mxu0 %v2051
        %v2489 = vpop.f32.mrb[0].mxu0
        %v2490 = vadd.f32 %v2355, %v2489
        %v2491 = vpop.f32.mrb[0].mxu0
        %v2492 = vpop.f32.mrb[0].mxu0
        %v2493 = vadd.f32 %v2354, %v2492
        %v2494 = vpop.f32.mrb[0].mxu0
        %2495 = vmatprep.mubr.bf16.mxu0 0
        %2496 = vmatmul.mubr.bf16.gmra.mrb[0].mxu0 %v2052
        %v2497 = vpop.f32.mrb[0].mxu0
        %v2498 = vadd.f32 %v2353, %v2497
        %v2499 = vpop.f32.mrb[0].mxu0
        %v2500 = vpop.f32.mrb[0].mxu0
        %v2501 = vadd.f32 %v2352, %v2500
        %v2502 = vpop.f32.mrb[0].mxu0
        %2503 = vmatprep.mubr.bf16.mxu0 0
        %2504 = vmatmul.mubr.bf16.gmra.mrb[0].mxu0 %v2053
        %v2505 = vpop.f32.mrb[0].mxu0
        %v2506 = vadd.f32 %v2351, %v2505
        %v2507 = vpop.f32.mrb[0].mxu0
        %v2508 = vpop.f32.mrb[0].mxu0
        %v2509 = vadd.f32 %v2350, %v2508
        %v2510 = vpop.f32.mrb[0].mxu0
        %2511 = vmatprep.mubr.bf16.mxu0 0
        %2512 = vmatmul.mubr.bf16.gmra.mrb[0].mxu0 %v2054
        %v2513 = vpop.f32.mrb[0].mxu0
        %v2514 = vadd.f32 %v2349, %v2513
        %v2515 = vpop.f32.mrb[0].mxu0
        %v2516 = vpop.f32.mrb[0].mxu0
        %v2517 = vadd.f32 %v2348, %v2516
        %v2518 = vpop.f32.mrb[0].mxu0
        %2519 = vmatprep.mubr.bf16.mxu0 0
        %2520 = vmatmul.mubr.bf16.gmra.mrb[0].mxu0 %v2055
        %v2521 = vpop.f32.mrb[0].mxu0
        %v2522 = vadd.f32 %v2347, %v2521
        %v2523 = vpop.f32.mrb[0].mxu0
        %v2524 = vpop.f32.mrb[0].mxu0
        %v2525 = vadd.f32 %v2346, %v2524
        %v2526 = vpop.f32.mrb[0].mxu0
        %2527 = vmatprep.mubr.bf16.mxu0 0
        %2528 = vmatmul.mubr.bf16.gmra.mrb[0].mxu0 %v2056
        %v2529 = vpop.f32.mrb[0].mxu0
        %v2530 = vadd.f32 %v2345, %v2529
        %v2531 = vpop.f32.mrb[0].mxu0
        %v2532 = vpop.f32.mrb[0].mxu0
        %v2533 = vadd.f32 %v2344, %v2532
        %v2534 = vpop.f32.mrb[0].mxu0
        %2535 = vmatprep.mubr.bf16.mxu0 0
        %2536 = vmatmul.mubr.bf16.gmra.mrb[0].mxu0 %v2057
        %v2537 = vpop.f32.mrb[0].mxu0
        %v2538 = vadd.f32 %v2343, %v2537
        %v2539 = vpop.f32.mrb[0].mxu0
        %v2540 = vpop.f32.mrb[0].mxu0
        %v2541 = vadd.f32 %v2342, %v2540
        %v2542 = vpop.f32.mrb[0].mxu0
        %2543 = vmatprep.mubr.bf16.mxu0 0
        %2544 = vmatmul.mubr.bf16.gmra.mrb[0].mxu0 %v2058
        %v2545 = vpop.f32.mrb[0].mxu0
        %v2546 = vadd.f32 %v2341, %v2545
        %v2547 = vpop.f32.mrb[0].mxu0
        %v2548 = vpop.f32.mrb[0].mxu0
        %v2549 = vadd.f32 %v2340, %v2548
        %v2550 = vpop.f32.mrb[0].mxu0
        %2551 = vmatprep.mubr.bf16.mxu0 0
        %2552 = vmatmul.mubr.bf16.gmra.mrb[0].mxu0 %v2059
        %v2553 = vpop.f32.mrb[0].mxu0
        %v2554 = vadd.f32 %v2339, %v2553
        %v2555 = vpop.f32.mrb[0].mxu0
        %v2556 = vpop.f32.mrb[0].mxu0
        %v2557 = vadd.f32 %v2338, %v2556
        %v2558 = vpop.f32.mrb[0].mxu0
        %2559 = vmatprep.mubr.bf16.mxu0 0
        %2560 = vmatmul.mubr.bf16.gmra.mrb[0].mxu0 %v2060
        %v2561 = vpop.f32.mrb[0].mxu0
        %v2562 = vadd.f32 %v2337, %v2561
        %v2563 = vpop.f32.mrb[0].mxu0
        %v2564 = vpop.f32.mrb[0].mxu0
        %v2565 = vadd.f32 %v2336, %v2564
        %v2566 = vpop.f32.mrb[0].mxu0
        %2567 = vmatprep.mubr.bf16.mxu0 0
        %2568 = vmatmul.mubr.bf16.gmra.mrb[0].mxu0 %v2061
        %v2569 = vpop.f32.mrb[0].mxu0
        %v2570 = vadd.f32 %v2335, %v2569
        %v2571 = vpop.f32.mrb[0].mxu0
        %v2572 = vpop.f32.mrb[0].mxu0
        %v2573 = vadd.f32 %v2366, %v2572
        %v2574 = vpop.f32.mrb[0].mxu0
        %2575 = vdwg.mxu0
        %v2576 = vld [vmem:[%s1 + $0x1c8] sm:$0xf]
        %v2577 = vld [vmem:[%s1 + $0x1cc] sm:$0xf]
        %v2578 = vld [vmem:[%s1 + $0x1d0] sm:$0xf]
        %v2579 = vld [vmem:[%s1 + $0x1d4] sm:$0xf]
        %v2580 = vld [vmem:[%s1 + $0x1d8] sm:$0xf]
        %v2581 = vld [vmem:[%s1 + $0x1dc] sm:$0xf]
        %v2582 = vld [vmem:[%s1 + $0x1e0] sm:$0xf]
        %v2583 = vld [vmem:[%s1 + $0x1e4] sm:$0xf]
        %v2584 = vld [vmem:[%s1 + $0x1e8] sm:$0xf]
        %v2585 = vld [vmem:[%s1 + $0x1ec] sm:$0xf]
        %v2586 = vld [vmem:[%s1 + $0x1f0] sm:$0xf]
        %v2587 = vld [vmem:[%s1 + $0x1f4] sm:$0xf]
        %v2588 = vld [vmem:[%s1 + $0x1f8] sm:$0xf]
        %v2589 = vld [vmem:[%s1 + $0x1fc] sm:$0xf]
        %v2590 = vld [vmem:[%s1 + $0x200] sm:$0xf]
        %v2591 = vld [vmem:[%s1 + $0x204] sm:$0xf]
        %v2608 = vunpack.c.l.b16 %v2576
        %v2609 = vunpack.c.l.b16 %v2577
        %v2610 = vunpack.c.l.b16 %v2578
        %v2611 = vunpack.c.l.b16 %v2579
        %v2612 = vunpack.c.l.b16 %v2580
        %v2613 = vunpack.c.l.b16 %v2581
        %v2614 = vunpack.c.l.b16 %v2582
        %v2615 = vunpack.c.l.b16 %v2583
        %v2616 = vunpack.c.l.b16 %v2584
        %v2617 = vunpack.c.l.b16 %v2585
        %v2618 = vunpack.c.l.b16 %v2586
        %v2619 = vunpack.c.l.b16 %v2587
        %v2620 = vunpack.c.l.b16 %v2588
        %v2621 = vunpack.c.l.b16 %v2589
        %v2622 = vunpack.c.l.b16 %v2590
        %v2623 = vunpack.c.l.b16 %v2591
        %v2624 = vpack.c.b16 %v2609, %v2608
        %v2625 = vpack.c.b16 %v2611, %v2610
        %v2626 = vpack.c.b16 %v2613, %v2612
        %v2627 = vpack.c.b16 %v2615, %v2614
        %v2628 = vpack.c.b16 %v2617, %v2616
        %v2629 = vpack.c.b16 %v2619, %v2618
        %v2630 = vpack.c.b16 %v2621, %v2620
        %v2631 = vpack.c.b16 %v2623, %v2622
        %2640 = vmatprep.subr.bf16.mxu0 0
        %2641 = vmatpush1.bf16.msra.mxu0 %v2624
        %2642 = vmatprep.subr.bf16.mxu0 0
        %2643 = vmatpush1.bf16.msra.mxu0 %v2625
        %2644 = vmatprep.subr.bf16.mxu0 0
        %2645 = vmatpush1.bf16.msra.mxu0 %v2626
        %2646 = vmatprep.subr.bf16.mxu0 0
        %2647 = vmatpush1.bf16.msra.mxu0 %v2627
        %2648 = vmatprep.subr.bf16.mxu0 0
        %2649 = vmatpush1.bf16.msra.mxu0 %v2628
        %2650 = vmatprep.subr.bf16.mxu0 0
        %2651 = vmatpush1.bf16.msra.mxu0 %v2629
        %2652 = vmatprep.subr.bf16.mxu0 0
        %2653 = vmatpush1.bf16.msra.mxu0 %v2630
        %2654 = vmatprep.subr.bf16.mxu0 0
        %2655 = vmatpush1.bf16.msra.mxu0 %v2631
        %2656 = vmatprep.subr.bf16.mxu0 0
        %2657 = vmatpush1.bf16.msra.mxu0 0
        %2658 = vmatprep.subr.bf16.mxu0 0
        %2659 = vmatpush1.bf16.msra.mxu0 0
        %2660 = vmatprep.subr.bf16.mxu0 0
        %2661 = vmatpush1.bf16.msra.mxu0 0
        %2662 = vmatprep.subr.bf16.mxu0 0
        %2663 = vmatpush1.bf16.msra.mxu0 0
        %2664 = vmatprep.subr.bf16.mxu0 0
        %2665 = vmatpush1.bf16.msra.mxu0 0
        %2666 = vmatprep.subr.bf16.mxu0 0
        %2667 = vmatpush1.bf16.msra.mxu0 0
        %2668 = vmatprep.subr.bf16.mxu0 0
        %2669 = vmatpush1.bf16.msra.mxu0 0
        %2670 = vmatprep.subr.bf16.mxu0 0
        %2671 = vmatpush1.bf16.msra.mxu0 0
        %2672 = vmatprep.mubr.bf16.mxu0 0
        %2673 = vmatmul.mubr.bf16.gmra.mrb[0].mxu0 %v2046
        %v2674 = vpop.f32.mrb[0].mxu0
        %v2675 = vadd.f32 0.0, %v2674
        %v2676 = vpop.f32.mrb[0].mxu0
        %v2677 = vpop.f32.mrb[0].mxu0
        %v2678 = vadd.f32 0.0, %v2677
        %v2679 = vpop.f32.mrb[0].mxu0
        %2680 = vmatprep.mubr.bf16.mxu0 0
        %2681 = vmatmul.mubr.bf16.gmra.mrb[0].mxu0 %v2047
        %v2682 = vpop.f32.mrb[0].mxu0
        %v2683 = vadd.f32 0.0, %v2682
        %v2684 = vpop.f32.mrb[0].mxu0
        %v2685 = vpop.f32.mrb[0].mxu0
        %v2686 = vadd.f32 0.0, %v2685
        %v2687 = vpop.f32.mrb[0].mxu0
        %2688 = vmatprep.mubr.bf16.mxu0 0
        %2689 = vmatmul.mubr.bf16.gmra.mrb[0].mxu0 %v2048
        %v2690 = vpop.f32.mrb[0].mxu0
        %v2691 = vadd.f32 0.0, %v2690
        %v2692 = vpop.f32.mrb[0].mxu0
        %v2693 = vpop.f32.mrb[0].mxu0
        %v2694 = vadd.f32 0.0, %v2693
        %v2695 = vpop.f32.mrb[0].mxu0
        %2696 = vmatprep.mubr.bf16.mxu0 0
        %2697 = vmatmul.mubr.bf16.gmra.mrb[0].mxu0 %v2049
        %v2698 = vpop.f32.mrb[0].mxu0
        %v2699 = vadd.f32 0.0, %v2698
        %v2700 = vpop.f32.mrb[0].mxu0
        %v2701 = vpop.f32.mrb[0].mxu0
        %v2702 = vadd.f32 0.0, %v2701
        %v2703 = vpop.f32.mrb[0].mxu0
        %2704 = vmatprep.mubr.bf16.mxu0 0
        %2705 = vmatmul.mubr.bf16.gmra.mrb[0].mxu0 %v2050
        %v2706 = vpop.f32.mrb[0].mxu0
        %v2707 = vadd.f32 0.0, %v2706
        %v2708 = vpop.f32.mrb[0].mxu0
        %v2709 = vpop.f32.mrb[0].mxu0
        %v2710 = vadd.f32 0.0, %v2709
        %v2711 = vpop.f32.mrb[0].mxu0
        %2712 = vmatprep.mubr.bf16.mxu0 0
        %2713 = vmatmul.mubr.bf16.gmra.mrb[0].mxu0 %v2051
        %v2714 = vpop.f32.mrb[0].mxu0
        %v2715 = vadd.f32 0.0, %v2714
        %v2716 = vpop.f32.mrb[0].mxu0
        %v2717 = vpop.f32.mrb[0].mxu0
        %v2718 = vadd.f32 0.0, %v2717
        %v2719 = vpop.f32.mrb[0].mxu0
        %2720 = vmatprep.mubr.bf16.mxu0 0
        %2721 = vmatmul.mubr.bf16.gmra.mrb[0].mxu0 %v2052
        %v2722 = vpop.f32.mrb[0].mxu0
        %v2723 = vadd.f32 0.0, %v2722
        %v2724 = vpop.f32.mrb[0].mxu0
        %v2725 = vpop.f32.mrb[0].mxu0
        %v2726 = vadd.f32 0.0, %v2725
        %v2727 = vpop.f32.mrb[0].mxu0
        %2728 = vmatprep.mubr.bf16.mxu0 0
        %2729 = vmatmul.mubr.bf16.gmra.mrb[0].mxu0 %v2053
        %v2730 = vpop.f32.mrb[0].mxu0
        %v2731 = vadd.f32 0.0, %v2730
        %v2732 = vpop.f32.mrb[0].mxu0
        %v2733 = vpop.f32.mrb[0].mxu0
        %v2734 = vadd.f32 0.0, %v2733
        %v2735 = vpop.f32.mrb[0].mxu0
        %2736 = vmatprep.mubr.bf16.mxu0 0
        %2737 = vmatmul.mubr.bf16.gmra.mrb[0].mxu0 %v2054
        %v2738 = vpop.f32.mrb[0].mxu0
        %v2739 = vadd.f32 0.0, %v2738
        %v2740 = vpop.f32.mrb[0].mxu0
        %v2741 = vpop.f32.mrb[0].mxu0
        %v2742 = vadd.f32 0.0, %v2741
        %v2743 = vpop.f32.mrb[0].mxu0
        %2744 = vmatprep.mubr.bf16.mxu0 0
        %2745 = vmatmul.mubr.bf16.gmra.mrb[0].mxu0 %v2055
        %v2746 = vpop.f32.mrb[0].mxu0
        %v2747 = vadd.f32 0.0, %v2746
        %v2748 = vpop.f32.mrb[0].mxu0
        %v2749 = vpop.f32.mrb[0].mxu0
        %v2750 = vadd.f32 0.0, %v2749
        %v2751 = vpop.f32.mrb[0].mxu0
        %2752 = vmatprep.mubr.bf16.mxu0 0
        %2753 = vmatmul.mubr.bf16.gmra.mrb[0].mxu0 %v2056
        %v2754 = vpop.f32.mrb[0].mxu0
        %v2755 = vadd.f32 0.0, %v2754
        %v2756 = vpop.f32.mrb[0].mxu0
        %v2757 = vpop.f32.mrb[0].mxu0
        %v2758 = vadd.f32 0.0, %v2757
        %v2759 = vpop.f32.mrb[0].mxu0
        %2760 = vmatprep.mubr.bf16.mxu0 0
        %2761 = vmatmul.mubr.bf16.gmra.mrb[0].mxu0 %v2057
        %v2762 = vpop.f32.mrb[0].mxu0
        %v2763 = vadd.f32 0.0, %v2762
        %v2764 = vpop.f32.mrb[0].mxu0
        %v2765 = vpop.f32.mrb[0].mxu0
        %v2766 = vadd.f32 0.0, %v2765
        %v2767 = vpop.f32.mrb[0].mxu0
        %2768 = vmatprep.mubr.bf16.mxu0 0
        %2769 = vmatmul.mubr.bf16.gmra.mrb[0].mxu0 %v2058
        %v2770 = vpop.f32.mrb[0].mxu0
        %v2771 = vadd.f32 0.0, %v2770
        %v2772 = vpop.f32.mrb[0].mxu0
        %v2773 = vpop.f32.mrb[0].mxu0
        %v2774 = vadd.f32 0.0, %v2773
        %v2775 = vpop.f32.mrb[0].mxu0
        %2776 = vmatprep.mubr.bf16.mxu0 0
        %2777 = vmatmul.mubr.bf16.gmra.mrb[0].mxu0 %v2059
        %v2778 = vpop.f32.mrb[0].mxu0
        %v2779 = vadd.f32 0.0, %v2778
        %v2780 = vpop.f32.mrb[0].mxu0
        %v2781 = vpop.f32.mrb[0].mxu0
        %v2782 = vadd.f32 0.0, %v2781
        %v2783 = vpop.f32.mrb[0].mxu0
        %2784 = vmatprep.mubr.bf16.mxu0 0
        %2785 = vmatmul.mubr.bf16.gmra.mrb[0].mxu0 %v2060
        %v2786 = vpop.f32.mrb[0].mxu0
        %v2787 = vadd.f32 0.0, %v2786
        %v2788 = vpop.f32.mrb[0].mxu0
        %v2789 = vpop.f32.mrb[0].mxu0
        %v2790 = vadd.f32 0.0, %v2789
        %v2791 = vpop.f32.mrb[0].mxu0
        %2792 = vmatprep.mubr.bf16.mxu0 0
        %2793 = vmatmul.mubr.bf16.gmra.mrb[0].mxu0 %v2061
        %v2794 = vpop.f32.mrb[0].mxu0
        %v2795 = vadd.f32 0.0, %v2794
        %v2796 = vpop.f32.mrb[0].mxu0
        %v2797 = vpop.f32.mrb[0].mxu0
        %v2798 = vadd.f32 0.0, %v2797
        %v2799 = vpop.f32.mrb[0].mxu0
        %2800 = vdwg.mxu0
        %v2801 = vrot.slane %v2675, 4
        %v2802 = vrot.slane %v2678, 4
        %v2803 = vrot.slane %v2683, 4
        %v2804 = vrot.slane %v2686, 4
        %v2805 = vrot.slane %v2691, 4
        %v2806 = vrot.slane %v2694, 4
        %v2807 = vrot.slane %v2699, 4
        %v2808 = vrot.slane %v2702, 4
        %v2809 = vrot.slane %v2707, 4
        %v2810 = vrot.slane %v2710, 4
        %v2811 = vrot.slane %v2715, 4
        %v2812 = vrot.slane %v2718, 4
        %v2813 = vrot.slane %v2723, 4
        %v2814 = vrot.slane %v2726, 4
        %v2815 = vrot.slane %v2731, 4
        %v2816 = vrot.slane %v2734, 4
        %v2817 = vrot.slane %v2739, 4
        %v2818 = vrot.slane %v2742, 4
        %v2819 = vrot.slane %v2747, 4
        %v2820 = vrot.slane %v2750, 4
        %v2821 = vrot.slane %v2755, 4
        %v2822 = vrot.slane %v2758, 4
        %v2823 = vrot.slane %v2763, 4
        %v2824 = vrot.slane %v2766, 4
        %v2825 = vrot.slane %v2771, 4
        %v2826 = vrot.slane %v2774, 4
        %v2827 = vrot.slane %v2779, 4
        %v2828 = vrot.slane %v2782, 4
        %v2829 = vrot.slane %v2787, 4
        %v2830 = vrot.slane %v2790, 4
        %v2831 = vrot.slane %v2795, 4
        %v2832 = vrot.slane %v2798, 4
        %v2833 = vsel %vm1912, %v2831, %v2832
        %v2834 = vsel %vm1912, %v2830, %v2831
        %v2835 = vsel %vm1912, %v2829, %v2830
        %v2836 = vsel %vm1912, %v2828, %v2829
        %v2837 = vsel %vm1912, %v2827, %v2828
        %v2838 = vsel %vm1912, %v2826, %v2827
        %v2839 = vsel %vm1912, %v2825, %v2826
        %v2840 = vsel %vm1912, %v2824, %v2825
        %v2841 = vsel %vm1912, %v2823, %v2824
        %v2842 = vsel %vm1912, %v2822, %v2823
        %v2843 = vsel %vm1912, %v2821, %v2822
        %v2844 = vsel %vm1912, %v2820, %v2821
        %v2845 = vsel %vm1912, %v2819, %v2820
        %v2846 = vsel %vm1912, %v2818, %v2819
        %v2847 = vsel %vm1912, %v2817, %v2818
        %v2848 = vsel %vm1912, %v2816, %v2817
        %v2849 = vsel %vm1912, %v2815, %v2816
        %v2850 = vsel %vm1912, %v2814, %v2815
        %v2851 = vsel %vm1912, %v2813, %v2814
        %v2852 = vsel %vm1912, %v2812, %v2813
        %v2853 = vsel %vm1912, %v2811, %v2812
        %v2854 = vsel %vm1912, %v2810, %v2811
        %v2855 = vsel %vm1912, %v2809, %v2810
        %v2856 = vsel %vm1912, %v2808, %v2809
        %v2857 = vsel %vm1912, %v2807, %v2808
        %v2858 = vsel %vm1912, %v2806, %v2807
        %v2859 = vsel %vm1912, %v2805, %v2806
        %v2860 = vsel %vm1912, %v2804, %v2805
        %v2861 = vsel %vm1912, %v2803, %v2804
        %v2862 = vsel %vm1912, %v2802, %v2803
        %v2863 = vsel %vm1912, %v2801, %v2802
        %v2864 = vsel %vm1912, %v2832, %v2801
        %v2865 = vadd.f32 %v2450, %v2863
        %v2866 = vadd.f32 %v2453, %v2862
        %v2867 = vadd.f32 %v2458, %v2861
        %v2868 = vadd.f32 %v2461, %v2860
        %v2869 = vadd.f32 %v2466, %v2859
        %v2870 = vadd.f32 %v2469, %v2858
        %v2871 = vadd.f32 %v2474, %v2857
        %v2872 = vadd.f32 %v2477, %v2856
        %v2873 = vadd.f32 %v2482, %v2855
        %v2874 = vadd.f32 %v2485, %v2854
        %v2875 = vadd.f32 %v2490, %v2853
        %v2876 = vadd.f32 %v2493, %v2852
        %v2877 = vadd.f32 %v2498, %v2851
        %v2878 = vadd.f32 %v2501, %v2850
        %v2879 = vadd.f32 %v2506, %v2849
        %v2880 = vadd.f32 %v2509, %v2848
        %v2881 = vadd.f32 %v2514, %v2847
        %v2882 = vadd.f32 %v2517, %v2846
        %v2883 = vadd.f32 %v2522, %v2845
        %v2884 = vadd.f32 %v2525, %v2844
        %v2885 = vadd.f32 %v2530, %v2843
        %v2886 = vadd.f32 %v2533, %v2842
        %v2887 = vadd.f32 %v2538, %v2841
        %v2888 = vadd.f32 %v2541, %v2840
        %v2889 = vadd.f32 %v2546, %v2839
        %v2890 = vadd.f32 %v2549, %v2838
        %v2891 = vadd.f32 %v2554, %v2837
        %v2892 = vadd.f32 %v2557, %v2836
        %v2893 = vadd.f32 %v2562, %v2835
        %v2894 = vadd.f32 %v2565, %v2834
        %v2895 = vadd.f32 %v2570, %v2833
        %v2896 = vadd.f32 %v2573, %v2864
        %v2897 = vld [vmem:[%s2 + $0x2] sm:$0x1]
        %v2898 = vlaneseq
        %v2899 = vshrl.u32 %v2898, 7
        %v2900 = vsub.s32 0, %v2899
        %v2901 = vrot.slane %v2897, %v2900
        %v2902 = vadd.f32 %v2865, %v2901
        %v2903 = vadd.f32 %v2866, %v2901
        %v2904 = vadd.f32 %v2867, %v2901
        %v2905 = vadd.f32 %v2868, %v2901
        %v2906 = vadd.f32 %v2869, %v2901
        %v2907 = vadd.f32 %v2870, %v2901
        %v2908 = vadd.f32 %v2871, %v2901
        %v2909 = vadd.f32 %v2872, %v2901
        %v2910 = vadd.f32 %v2873, %v2901
        %v2911 = vadd.f32 %v2874, %v2901
        %v2912 = vadd.f32 %v2875, %v2901
        %v2913 = vadd.f32 %v2876, %v2901
        %v2914 = vadd.f32 %v2877, %v2901
        %v2915 = vadd.f32 %v2878, %v2901
        %v2916 = vadd.f32 %v2879, %v2901
        %v2917 = vadd.f32 %v2880, %v2901
        %v2918 = vadd.f32 %v2881, %v2901
        %v2919 = vadd.f32 %v2882, %v2901
        %v2920 = vadd.f32 %v2883, %v2901
        %v2921 = vadd.f32 %v2884, %v2901
        %v2922 = vadd.f32 %v2885, %v2901
        %v2923 = vadd.f32 %v2886, %v2901
        %v2924 = vadd.f32 %v2887, %v2901
        %v2925 = vadd.f32 %v2888, %v2901
        %v2926 = vadd.f32 %v2889, %v2901
        %v2927 = vadd.f32 %v2890, %v2901
        %v2928 = vadd.f32 %v2891, %v2901
        %v2929 = vadd.f32 %v2892, %v2901
        %v2930 = vadd.f32 %v2893, %v2901
        %v2931 = vadd.f32 %v2894, %v2901
        %v2932 = vadd.f32 %v2895, %v2901
        %v2933 = vadd.f32 %v2896, %v2901
        %v2934 = vmax.f32 %v2902, 0.0
        %v2935 = vmax.f32 %v2903, 0.0
        %v2936 = vmax.f32 %v2904, 0.0
        %v2937 = vmax.f32 %v2905, 0.0
        %v2938 = vmax.f32 %v2906, 0.0
        %v2939 = vmax.f32 %v2907, 0.0
        %v2940 = vmax.f32 %v2908, 0.0
        %v2941 = vmax.f32 %v2909, 0.0
        %v2942 = vmax.f32 %v2910, 0.0
        %v2943 = vmax.f32 %v2911, 0.0
        %v2944 = vmax.f32 %v2912, 0.0
        %v2945 = vmax.f32 %v2913, 0.0
        %v2946 = vmax.f32 %v2914, 0.0
        %v2947 = vmax.f32 %v2915, 0.0
        %v2948 = vmax.f32 %v2916, 0.0
        %v2949 = vmax.f32 %v2917, 0.0
        %v2950 = vmax.f32 %v2918, 0.0
        %v2951 = vmax.f32 %v2919, 0.0
        %v2952 = vmax.f32 %v2920, 0.0
        %v2953 = vmax.f32 %v2921, 0.0
        %v2954 = vmax.f32 %v2922, 0.0
        %v2955 = vmax.f32 %v2923, 0.0
        %v2956 = vmax.f32 %v2924, 0.0
        %v2957 = vmax.f32 %v2925, 0.0
        %v2958 = vmax.f32 %v2926, 0.0
        %v2959 = vmax.f32 %v2927, 0.0
        %v2960 = vmax.f32 %v2928, 0.0
        %v2961 = vmax.f32 %v2929, 0.0
        %v2962 = vmax.f32 %v2930, 0.0
        %v2963 = vmax.f32 %v2931, 0.0
        %v2964 = vmax.f32 %v2932, 0.0
        %v2965 = vmax.f32 %v2933, 0.0
        %v2966 = vpack.c.bf16 %v2935, %v2934
        %v2967 = vpack.c.bf16 %v2937, %v2936
        %v2968 = vpack.c.bf16 %v2939, %v2938
        %v2969 = vpack.c.bf16 %v2941, %v2940
        %v2970 = vpack.c.bf16 %v2943, %v2942
        %v2971 = vpack.c.bf16 %v2945, %v2944
        %v2972 = vpack.c.bf16 %v2947, %v2946
        %v2973 = vpack.c.bf16 %v2949, %v2948
        %v2974 = vpack.c.bf16 %v2951, %v2950
        %v2975 = vpack.c.bf16 %v2953, %v2952
        %v2976 = vpack.c.bf16 %v2955, %v2954
        %v2977 = vpack.c.bf16 %v2957, %v2956
        %v2978 = vpack.c.bf16 %v2959, %v2958
        %v2979 = vpack.c.bf16 %v2961, %v2960
        %v2980 = vpack.c.bf16 %v2963, %v2962
        %v2981 = vpack.c.bf16 %v2965, %v2964
        %v2982 = vld [vmem:[%s1 + $0x208] sm:$0xf]
        %v2983 = vld [vmem:[%s1 + $0x20c] sm:$0xf]
        %v2984 = vld [vmem:[%s1 + $0x210] sm:$0xf]
        %v2985 = vld [vmem:[%s1 + $0x214] sm:$0xf]
        %v2986 = vld [vmem:[%s1 + $0x218] sm:$0xf]
        %v2987 = vld [vmem:[%s1 + $0x21c] sm:$0xf]
        %v2988 = vld [vmem:[%s1 + $0x220] sm:$0xf]
        %v2989 = vld [vmem:[%s1 + $0x224] sm:$0xf]
        %v2990 = vld [vmem:[%s1 + $0x228] sm:$0xf]
        %v2991 = vld [vmem:[%s1 + $0x22c] sm:$0xf]
        %v2992 = vld [vmem:[%s1 + $0x230] sm:$0xf]
        %v2993 = vld [vmem:[%s1 + $0x234] sm:$0xf]
        %v2994 = vld [vmem:[%s1 + $0x238] sm:$0xf]
        %v2995 = vld [vmem:[%s1 + $0x23c] sm:$0xf]
        %v2996 = vld [vmem:[%s1 + $0x240] sm:$0xf]
        %v2997 = vld [vmem:[%s1 + $0x244] sm:$0xf]
        %v2998 = vld [vmem:[%s1 + $0x248] sm:$0xf]
        %v2999 = vld [vmem:[%s1 + $0x24c] sm:$0xf]
        %v3000 = vld [vmem:[%s1 + $0x250] sm:$0xf]
        %v3001 = vld [vmem:[%s1 + $0x254] sm:$0xf]
        %v3002 = vld [vmem:[%s1 + $0x258] sm:$0xf]
        %v3003 = vld [vmem:[%s1 + $0x25c] sm:$0xf]
        %v3004 = vld [vmem:[%s1 + $0x260] sm:$0xf]
        %v3005 = vld [vmem:[%s1 + $0x264] sm:$0xf]
        %v3006 = vld [vmem:[%s1 + $0x268] sm:$0xf]
        %v3007 = vld [vmem:[%s1 + $0x26c] sm:$0xf]
        %v3008 = vld [vmem:[%s1 + $0x270] sm:$0xf]
        %v3009 = vld [vmem:[%s1 + $0x274] sm:$0xf]
        %v3010 = vld [vmem:[%s1 + $0x278] sm:$0xf]
        %v3011 = vld [vmem:[%s1 + $0x27c] sm:$0xf]
        %v3012 = vld [vmem:[%s1 + $0x280] sm:$0xf]
        %v3013 = vld [vmem:[%s1 + $0x284] sm:$0xf]
        %v3030 = vunpack.c.l.b16 %v2998
        %v3031 = vunpack.c.l.b16 %v2999
        %v3032 = vunpack.c.l.b16 %v3000
        %v3033 = vunpack.c.l.b16 %v3001
        %v3034 = vunpack.c.l.b16 %v3002
        %v3035 = vunpack.c.l.b16 %v3003
        %v3036 = vunpack.c.l.b16 %v3004
        %v3037 = vunpack.c.l.b16 %v3005
        %v3038 = vunpack.c.l.b16 %v3006
        %v3039 = vunpack.c.l.b16 %v3007
        %v3040 = vunpack.c.l.b16 %v3008
        %v3041 = vunpack.c.l.b16 %v3009
        %v3042 = vunpack.c.l.b16 %v3010
        %v3043 = vunpack.c.l.b16 %v3011
        %v3044 = vunpack.c.l.b16 %v3012
        %v3045 = vunpack.c.l.b16 %v3013
        %v3046 = vpack.c.b16 %v3031, %v3030
        %v3047 = vpack.c.b16 %v3033, %v3032
        %v3048 = vpack.c.b16 %v3035, %v3034
        %v3049 = vpack.c.b16 %v3037, %v3036
        %v3050 = vpack.c.b16 %v3039, %v3038
        %v3051 = vpack.c.b16 %v3041, %v3040
        %v3052 = vpack.c.b16 %v3043, %v3042
        %v3053 = vpack.c.b16 %v3045, %v3044
        %3062 = vmatprep.subr.bf16.mxu0 0
        %3063 = vmatpush1.bf16.msra.mxu0 %v3046
        %3064 = vmatprep.subr.bf16.mxu0 0
        %3065 = vmatpush1.bf16.msra.mxu0 %v3047
        %3066 = vmatprep.subr.bf16.mxu0 0
        %3067 = vmatpush1.bf16.msra.mxu0 %v3048
        %3068 = vmatprep.subr.bf16.mxu0 0
        %3069 = vmatpush1.bf16.msra.mxu0 %v3049
        %3070 = vmatprep.subr.bf16.mxu0 0
        %3071 = vmatpush1.bf16.msra.mxu0 %v3050
        %3072 = vmatprep.subr.bf16.mxu0 0
        %3073 = vmatpush1.bf16.msra.mxu0 %v3051
        %3074 = vmatprep.subr.bf16.mxu0 0
        %3075 = vmatpush1.bf16.msra.mxu0 %v3052
        %3076 = vmatprep.subr.bf16.mxu0 0
        %3077 = vmatpush1.bf16.msra.mxu0 %v3053
        %3078 = vmatprep.subr.bf16.mxu0 0
        %3079 = vmatpush1.bf16.msra.mxu0 0
        %3080 = vmatprep.subr.bf16.mxu0 0
        %3081 = vmatpush1.bf16.msra.mxu0 0
        %3082 = vmatprep.subr.bf16.mxu0 0
        %3083 = vmatpush1.bf16.msra.mxu0 0
        %3084 = vmatprep.subr.bf16.mxu0 0
        %3085 = vmatpush1.bf16.msra.mxu0 0
        %3086 = vmatprep.subr.bf16.mxu0 0
        %3087 = vmatpush1.bf16.msra.mxu0 0
        %3088 = vmatprep.subr.bf16.mxu0 0
        %3089 = vmatpush1.bf16.msra.mxu0 0
        %3090 = vmatprep.subr.bf16.mxu0 0
        %3091 = vmatpush1.bf16.msra.mxu0 0
        %3092 = vmatprep.subr.bf16.mxu0 0
        %3093 = vmatpush1.bf16.msra.mxu0 0
        %3094 = vmatprep.mubr.bf16.mxu0 0
        %3095 = vmatmul.mubr.bf16.gmra.mrb[0].mxu0 %v2966
        %v3096 = vpop.f32.mrb[0].mxu0
        %v3097 = vadd.f32 0.0, %v3096
        %v3098 = vpop.f32.mrb[0].mxu0
        %v3099 = vpop.f32.mrb[0].mxu0
        %v3100 = vadd.f32 0.0, %v3099
        %v3101 = vpop.f32.mrb[0].mxu0
        %3102 = vmatprep.mubr.bf16.mxu0 0
        %3103 = vmatmul.mubr.bf16.gmra.mrb[0].mxu0 %v2967
        %v3104 = vpop.f32.mrb[0].mxu0
        %v3105 = vadd.f32 0.0, %v3104
        %v3106 = vpop.f32.mrb[0].mxu0
        %v3107 = vpop.f32.mrb[0].mxu0
        %v3108 = vadd.f32 0.0, %v3107
        %v3109 = vpop.f32.mrb[0].mxu0
        %3110 = vmatprep.mubr.bf16.mxu0 0
        %3111 = vmatmul.mubr.bf16.gmra.mrb[0].mxu0 %v2968
        %v3112 = vpop.f32.mrb[0].mxu0
        %v3113 = vadd.f32 0.0, %v3112
        %v3114 = vpop.f32.mrb[0].mxu0
        %v3115 = vpop.f32.mrb[0].mxu0
        %v3116 = vadd.f32 0.0, %v3115
        %v3117 = vpop.f32.mrb[0].mxu0
        %3118 = vmatprep.mubr.bf16.mxu0 0
        %3119 = vmatmul.mubr.bf16.gmra.mrb[0].mxu0 %v2969
        %v3120 = vpop.f32.mrb[0].mxu0
        %v3121 = vadd.f32 0.0, %v3120
        %v3122 = vpop.f32.mrb[0].mxu0
        %v3123 = vpop.f32.mrb[0].mxu0
        %v3124 = vadd.f32 0.0, %v3123
        %v3125 = vpop.f32.mrb[0].mxu0
        %3126 = vmatprep.mubr.bf16.mxu0 0
        %3127 = vmatmul.mubr.bf16.gmra.mrb[0].mxu0 %v2970
        %v3128 = vpop.f32.mrb[0].mxu0
        %v3129 = vadd.f32 0.0, %v3128
        %v3130 = vpop.f32.mrb[0].mxu0
        %v3131 = vpop.f32.mrb[0].mxu0
        %v3132 = vadd.f32 0.0, %v3131
        %v3133 = vpop.f32.mrb[0].mxu0
        %3134 = vmatprep.mubr.bf16.mxu0 0
        %3135 = vmatmul.mubr.bf16.gmra.mrb[0].mxu0 %v2971
        %v3136 = vpop.f32.mrb[0].mxu0
        %v3137 = vadd.f32 0.0, %v3136
        %v3138 = vpop.f32.mrb[0].mxu0
        %v3139 = vpop.f32.mrb[0].mxu0
        %v3140 = vadd.f32 0.0, %v3139
        %v3141 = vpop.f32.mrb[0].mxu0
        %3142 = vmatprep.mubr.bf16.mxu0 0
        %3143 = vmatmul.mubr.bf16.gmra.mrb[0].mxu0 %v2972
        %v3144 = vpop.f32.mrb[0].mxu0
        %v3145 = vadd.f32 0.0, %v3144
        %v3146 = vpop.f32.mrb[0].mxu0
        %v3147 = vpop.f32.mrb[0].mxu0
        %v3148 = vadd.f32 0.0, %v3147
        %v3149 = vpop.f32.mrb[0].mxu0
        %3150 = vmatprep.mubr.bf16.mxu0 0
        %3151 = vmatmul.mubr.bf16.gmra.mrb[0].mxu0 %v2973
        %v3152 = vpop.f32.mrb[0].mxu0
        %v3153 = vadd.f32 0.0, %v3152
        %v3154 = vpop.f32.mrb[0].mxu0
        %v3155 = vpop.f32.mrb[0].mxu0
        %v3156 = vadd.f32 0.0, %v3155
        %v3157 = vpop.f32.mrb[0].mxu0
        %3158 = vmatprep.mubr.bf16.mxu0 0
        %3159 = vmatmul.mubr.bf16.gmra.mrb[0].mxu0 %v2974
        %v3160 = vpop.f32.mrb[0].mxu0
        %v3161 = vadd.f32 0.0, %v3160
        %v3162 = vpop.f32.mrb[0].mxu0
        %v3163 = vpop.f32.mrb[0].mxu0
        %v3164 = vadd.f32 0.0, %v3163
        %v3165 = vpop.f32.mrb[0].mxu0
        %3166 = vmatprep.mubr.bf16.mxu0 0
        %3167 = vmatmul.mubr.bf16.gmra.mrb[0].mxu0 %v2975
        %v3168 = vpop.f32.mrb[0].mxu0
        %v3169 = vadd.f32 0.0, %v3168
        %v3170 = vpop.f32.mrb[0].mxu0
        %v3171 = vpop.f32.mrb[0].mxu0
        %v3172 = vadd.f32 0.0, %v3171
        %v3173 = vpop.f32.mrb[0].mxu0
        %3174 = vmatprep.mubr.bf16.mxu0 0
        %3175 = vmatmul.mubr.bf16.gmra.mrb[0].mxu0 %v2976
        %v3176 = vpop.f32.mrb[0].mxu0
        %v3177 = vadd.f32 0.0, %v3176
        %v3178 = vpop.f32.mrb[0].mxu0
        %v3179 = vpop.f32.mrb[0].mxu0
        %v3180 = vadd.f32 0.0, %v3179
        %v3181 = vpop.f32.mrb[0].mxu0
        %3182 = vmatprep.mubr.bf16.mxu0 0
        %3183 = vmatmul.mubr.bf16.gmra.mrb[0].mxu0 %v2977
        %v3184 = vpop.f32.mrb[0].mxu0
        %v3185 = vadd.f32 0.0, %v3184
        %v3186 = vpop.f32.mrb[0].mxu0
        %v3187 = vpop.f32.mrb[0].mxu0
        %v3188 = vadd.f32 0.0, %v3187
        %v3189 = vpop.f32.mrb[0].mxu0
        %3190 = vmatprep.mubr.bf16.mxu0 0
        %3191 = vmatmul.mubr.bf16.gmra.mrb[0].mxu0 %v2978
        %v3192 = vpop.f32.mrb[0].mxu0
        %v3193 = vadd.f32 0.0, %v3192
        %v3194 = vpop.f32.mrb[0].mxu0
        %v3195 = vpop.f32.mrb[0].mxu0
        %v3196 = vadd.f32 0.0, %v3195
        %v3197 = vpop.f32.mrb[0].mxu0
        %3198 = vmatprep.mubr.bf16.mxu0 0
        %3199 = vmatmul.mubr.bf16.gmra.mrb[0].mxu0 %v2979
        %v3200 = vpop.f32.mrb[0].mxu0
        %v3201 = vadd.f32 0.0, %v3200
        %v3202 = vpop.f32.mrb[0].mxu0
        %v3203 = vpop.f32.mrb[0].mxu0
        %v3204 = vadd.f32 0.0, %v3203
        %v3205 = vpop.f32.mrb[0].mxu0
        %3206 = vmatprep.mubr.bf16.mxu0 0
        %3207 = vmatmul.mubr.bf16.gmra.mrb[0].mxu0 %v2980
        %v3208 = vpop.f32.mrb[0].mxu0
        %v3209 = vadd.f32 0.0, %v3208
        %v3210 = vpop.f32.mrb[0].mxu0
        %v3211 = vpop.f32.mrb[0].mxu0
        %v3212 = vadd.f32 0.0, %v3211
        %v3213 = vpop.f32.mrb[0].mxu0
        %3214 = vmatprep.mubr.bf16.mxu0 0
        %3215 = vmatmul.mubr.bf16.gmra.mrb[0].mxu0 %v2981
        %v3216 = vpop.f32.mrb[0].mxu0
        %v3217 = vadd.f32 0.0, %v3216
        %v3218 = vpop.f32.mrb[0].mxu0
        %v3219 = vpop.f32.mrb[0].mxu0
        %v3220 = vadd.f32 0.0, %v3219
        %v3221 = vpop.f32.mrb[0].mxu0
        %3222 = vdwg.mxu0
        %v3223 = vrot.slane %v3097, 3
        %v3224 = vrot.slane %v3100, 3
        %v3225 = vrot.slane %v3105, 3
        %v3226 = vrot.slane %v3108, 3
        %v3227 = vrot.slane %v3113, 3
        %v3228 = vrot.slane %v3116, 3
        %v3229 = vrot.slane %v3121, 3
        %v3230 = vrot.slane %v3124, 3
        %v3231 = vrot.slane %v3129, 3
        %v3232 = vrot.slane %v3132, 3
        %v3233 = vrot.slane %v3137, 3
        %v3234 = vrot.slane %v3140, 3
        %v3235 = vrot.slane %v3145, 3
        %v3236 = vrot.slane %v3148, 3
        %v3237 = vrot.slane %v3153, 3
        %v3238 = vrot.slane %v3156, 3
        %v3239 = vrot.slane %v3161, 3
        %v3240 = vrot.slane %v3164, 3
        %v3241 = vrot.slane %v3169, 3
        %v3242 = vrot.slane %v3172, 3
        %v3243 = vrot.slane %v3177, 3
        %v3244 = vrot.slane %v3180, 3
        %v3245 = vrot.slane %v3185, 3
        %v3246 = vrot.slane %v3188, 3
        %v3247 = vrot.slane %v3193, 3
        %v3248 = vrot.slane %v3196, 3
        %v3249 = vrot.slane %v3201, 3
        %v3250 = vrot.slane %v3204, 3
        %v3251 = vrot.slane %v3209, 3
        %v3252 = vrot.slane %v3212, 3
        %v3253 = vrot.slane %v3217, 3
        %v3254 = vrot.slane %v3220, 3
        %v3255 = vsel %vm1590, %v3253, %v3254
        %v3256 = vsel %vm1590, %v3252, %v3253
        %v3257 = vsel %vm1590, %v3251, %v3252
        %v3258 = vsel %vm1590, %v3250, %v3251
        %v3259 = vsel %vm1590, %v3249, %v3250
        %v3260 = vsel %vm1590, %v3248, %v3249
        %v3261 = vsel %vm1590, %v3247, %v3248
        %v3262 = vsel %vm1590, %v3246, %v3247
        %v3263 = vsel %vm1590, %v3245, %v3246
        %v3264 = vsel %vm1590, %v3244, %v3245
        %v3265 = vsel %vm1590, %v3243, %v3244
        %v3266 = vsel %vm1590, %v3242, %v3243
        %v3267 = vsel %vm1590, %v3241, %v3242
        %v3268 = vsel %vm1590, %v3240, %v3241
        %v3269 = vsel %vm1590, %v3239, %v3240
        %v3270 = vsel %vm1590, %v3238, %v3239
        %v3271 = vsel %vm1590, %v3237, %v3238
        %v3272 = vsel %vm1590, %v3236, %v3237
        %v3273 = vsel %vm1590, %v3235, %v3236
        %v3274 = vsel %vm1590, %v3234, %v3235
        %v3275 = vsel %vm1590, %v3233, %v3234
        %v3276 = vsel %vm1590, %v3232, %v3233
        %v3277 = vsel %vm1590, %v3231, %v3232
        %v3278 = vsel %vm1590, %v3230, %v3231
        %v3279 = vsel %vm1590, %v3229, %v3230
        %v3280 = vsel %vm1590, %v3228, %v3229
        %v3281 = vsel %vm1590, %v3227, %v3228
        %v3282 = vsel %vm1590, %v3226, %v3227
        %v3283 = vsel %vm1590, %v3225, %v3226
        %v3284 = vsel %vm1590, %v3224, %v3225
        %v3285 = vsel %vm1590, %v3223, %v3224
        %v3286 = vsel %vm1590, %v3254, %v3223
        %v3303 = vunpack.c.l.b16 %v2982
        %v3304 = vunpack.c.l.b16 %v2983
        %v3305 = vunpack.c.l.b16 %v2984
        %v3306 = vunpack.c.l.b16 %v2985
        %v3307 = vunpack.c.l.b16 %v2986
        %v3308 = vunpack.c.l.b16 %v2987
        %v3309 = vunpack.c.l.b16 %v2988
        %v3310 = vunpack.c.l.b16 %v2989
        %v3311 = vunpack.c.l.b16 %v2990
        %v3312 = vunpack.c.l.b16 %v2991
        %v3313 = vunpack.c.l.b16 %v2992
        %v3314 = vunpack.c.l.b16 %v2993
        %v3315 = vunpack.c.l.b16 %v2994
        %v3316 = vunpack.c.l.b16 %v2995
        %v3317 = vunpack.c.l.b16 %v2996
        %v3318 = vunpack.c.l.b16 %v2997
        %v3319 = vpack.c.b16 %v3304, %v3303
        %v3320 = vpack.c.b16 %v3306, %v3305
        %v3321 = vpack.c.b16 %v3308, %v3307
        %v3322 = vpack.c.b16 %v3310, %v3309
        %v3323 = vpack.c.b16 %v3312, %v3311
        %v3324 = vpack.c.b16 %v3314, %v3313
        %v3325 = vpack.c.b16 %v3316, %v3315
        %v3326 = vpack.c.b16 %v3318, %v3317
        %3335 = vmatprep.subr.bf16.mxu0 0
        %3336 = vmatpush1.bf16.msra.mxu0 %v3319
        %3337 = vmatprep.subr.bf16.mxu0 0
        %3338 = vmatpush1.bf16.msra.mxu0 %v3320
        %3339 = vmatprep.subr.bf16.mxu0 0
        %3340 = vmatpush1.bf16.msra.mxu0 %v3321
        %3341 = vmatprep.subr.bf16.mxu0 0
        %3342 = vmatpush1.bf16.msra.mxu0 %v3322
        %3343 = vmatprep.subr.bf16.mxu0 0
        %3344 = vmatpush1.bf16.msra.mxu0 %v3323
        %3345 = vmatprep.subr.bf16.mxu0 0
        %3346 = vmatpush1.bf16.msra.mxu0 %v3324
        %3347 = vmatprep.subr.bf16.mxu0 0
        %3348 = vmatpush1.bf16.msra.mxu0 %v3325
        %3349 = vmatprep.subr.bf16.mxu0 0
        %3350 = vmatpush1.bf16.msra.mxu0 %v3326
        %3351 = vmatprep.subr.bf16.mxu0 0
        %3352 = vmatpush1.bf16.msra.mxu0 0
        %3353 = vmatprep.subr.bf16.mxu0 0
        %3354 = vmatpush1.bf16.msra.mxu0 0
        %3355 = vmatprep.subr.bf16.mxu0 0
        %3356 = vmatpush1.bf16.msra.mxu0 0
        %3357 = vmatprep.subr.bf16.mxu0 0
        %3358 = vmatpush1.bf16.msra.mxu0 0
        %3359 = vmatprep.subr.bf16.mxu0 0
        %3360 = vmatpush1.bf16.msra.mxu0 0
        %3361 = vmatprep.subr.bf16.mxu0 0
        %3362 = vmatpush1.bf16.msra.mxu0 0
        %3363 = vmatprep.subr.bf16.mxu0 0
        %3364 = vmatpush1.bf16.msra.mxu0 0
        %3365 = vmatprep.subr.bf16.mxu0 0
        %3366 = vmatpush1.bf16.msra.mxu0 0
        %3367 = vmatprep.mubr.bf16.mxu0 0
        %3368 = vmatmul.mubr.bf16.gmra.mrb[0].mxu0 %v2966
        %v3369 = vpop.f32.mrb[0].mxu0
        %v3370 = vadd.f32 %v3285, %v3369
        %v3371 = vpop.f32.mrb[0].mxu0
        %v3372 = vpop.f32.mrb[0].mxu0
        %v3373 = vadd.f32 %v3284, %v3372
        %v3374 = vpop.f32.mrb[0].mxu0
        %3375 = vmatprep.mubr.bf16.mxu0 0
        %3376 = vmatmul.mubr.bf16.gmra.mrb[0].mxu0 %v2967
        %v3377 = vpop.f32.mrb[0].mxu0
        %v3378 = vadd.f32 %v3283, %v3377
        %v3379 = vpop.f32.mrb[0].mxu0
        %v3380 = vpop.f32.mrb[0].mxu0
        %v3381 = vadd.f32 %v3282, %v3380
        %v3382 = vpop.f32.mrb[0].mxu0
        %3383 = vmatprep.mubr.bf16.mxu0 0
        %3384 = vmatmul.mubr.bf16.gmra.mrb[0].mxu0 %v2968
        %v3385 = vpop.f32.mrb[0].mxu0
        %v3386 = vadd.f32 %v3281, %v3385
        %v3387 = vpop.f32.mrb[0].mxu0
        %v3388 = vpop.f32.mrb[0].mxu0
        %v3389 = vadd.f32 %v3280, %v3388
        %v3390 = vpop.f32.mrb[0].mxu0
        %3391 = vmatprep.mubr.bf16.mxu0 0
        %3392 = vmatmul.mubr.bf16.gmra.mrb[0].mxu0 %v2969
        %v3393 = vpop.f32.mrb[0].mxu0
        %v3394 = vadd.f32 %v3279, %v3393
        %v3395 = vpop.f32.mrb[0].mxu0
        %v3396 = vpop.f32.mrb[0].mxu0
        %v3397 = vadd.f32 %v3278, %v3396
        %v3398 = vpop.f32.mrb[0].mxu0
        %3399 = vmatprep.mubr.bf16.mxu0 0
        %3400 = vmatmul.mubr.bf16.gmra.mrb[0].mxu0 %v2970
        %v3401 = vpop.f32.mrb[0].mxu0
        %v3402 = vadd.f32 %v3277, %v3401
        %v3403 = vpop.f32.mrb[0].mxu0
        %v3404 = vpop.f32.mrb[0].mxu0
        %v3405 = vadd.f32 %v3276, %v3404
        %v3406 = vpop.f32.mrb[0].mxu0
        %3407 = vmatprep.mubr.bf16.mxu0 0
        %3408 = vmatmul.mubr.bf16.gmra.mrb[0].mxu0 %v2971
        %v3409 = vpop.f32.mrb[0].mxu0
        %v3410 = vadd.f32 %v3275, %v3409
        %v3411 = vpop.f32.mrb[0].mxu0
        %v3412 = vpop.f32.mrb[0].mxu0
        %v3413 = vadd.f32 %v3274, %v3412
        %v3414 = vpop.f32.mrb[0].mxu0
        %3415 = vmatprep.mubr.bf16.mxu0 0
        %3416 = vmatmul.mubr.bf16.gmra.mrb[0].mxu0 %v2972
        %v3417 = vpop.f32.mrb[0].mxu0
        %v3418 = vadd.f32 %v3273, %v3417
        %v3419 = vpop.f32.mrb[0].mxu0
        %v3420 = vpop.f32.mrb[0].mxu0
        %v3421 = vadd.f32 %v3272, %v3420
        %v3422 = vpop.f32.mrb[0].mxu0
        %3423 = vmatprep.mubr.bf16.mxu0 0
        %3424 = vmatmul.mubr.bf16.gmra.mrb[0].mxu0 %v2973
        %v3425 = vpop.f32.mrb[0].mxu0
        %v3426 = vadd.f32 %v3271, %v3425
        %v3427 = vpop.f32.mrb[0].mxu0
        %v3428 = vpop.f32.mrb[0].mxu0
        %v3429 = vadd.f32 %v3270, %v3428
        %v3430 = vpop.f32.mrb[0].mxu0
        %3431 = vmatprep.mubr.bf16.mxu0 0
        %3432 = vmatmul.mubr.bf16.gmra.mrb[0].mxu0 %v2974
        %v3433 = vpop.f32.mrb[0].mxu0
        %v3434 = vadd.f32 %v3269, %v3433
        %v3435 = vpop.f32.mrb[0].mxu0
        %v3436 = vpop.f32.mrb[0].mxu0
        %v3437 = vadd.f32 %v3268, %v3436
        %v3438 = vpop.f32.mrb[0].mxu0
        %3439 = vmatprep.mubr.bf16.mxu0 0
        %3440 = vmatmul.mubr.bf16.gmra.mrb[0].mxu0 %v2975
        %v3441 = vpop.f32.mrb[0].mxu0
        %v3442 = vadd.f32 %v3267, %v3441
        %v3443 = vpop.f32.mrb[0].mxu0
        %v3444 = vpop.f32.mrb[0].mxu0
        %v3445 = vadd.f32 %v3266, %v3444
        %v3446 = vpop.f32.mrb[0].mxu0
        %3447 = vmatprep.mubr.bf16.mxu0 0
        %3448 = vmatmul.mubr.bf16.gmra.mrb[0].mxu0 %v2976
        %v3449 = vpop.f32.mrb[0].mxu0
        %v3450 = vadd.f32 %v3265, %v3449
        %v3451 = vpop.f32.mrb[0].mxu0
        %v3452 = vpop.f32.mrb[0].mxu0
        %v3453 = vadd.f32 %v3264, %v3452
        %v3454 = vpop.f32.mrb[0].mxu0
        %3455 = vmatprep.mubr.bf16.mxu0 0
        %3456 = vmatmul.mubr.bf16.gmra.mrb[0].mxu0 %v2977
        %v3457 = vpop.f32.mrb[0].mxu0
        %v3458 = vadd.f32 %v3263, %v3457
        %v3459 = vpop.f32.mrb[0].mxu0
        %v3460 = vpop.f32.mrb[0].mxu0
        %v3461 = vadd.f32 %v3262, %v3460
        %v3462 = vpop.f32.mrb[0].mxu0
        %3463 = vmatprep.mubr.bf16.mxu0 0
        %3464 = vmatmul.mubr.bf16.gmra.mrb[0].mxu0 %v2978
        %v3465 = vpop.f32.mrb[0].mxu0
        %v3466 = vadd.f32 %v3261, %v3465
        %v3467 = vpop.f32.mrb[0].mxu0
        %v3468 = vpop.f32.mrb[0].mxu0
        %v3469 = vadd.f32 %v3260, %v3468
        %v3470 = vpop.f32.mrb[0].mxu0
        %3471 = vmatprep.mubr.bf16.mxu0 0
        %3472 = vmatmul.mubr.bf16.gmra.mrb[0].mxu0 %v2979
        %v3473 = vpop.f32.mrb[0].mxu0
        %v3474 = vadd.f32 %v3259, %v3473
        %v3475 = vpop.f32.mrb[0].mxu0
        %v3476 = vpop.f32.mrb[0].mxu0
        %v3477 = vadd.f32 %v3258, %v3476
        %v3478 = vpop.f32.mrb[0].mxu0
        %3479 = vmatprep.mubr.bf16.mxu0 0
        %3480 = vmatmul.mubr.bf16.gmra.mrb[0].mxu0 %v2980
        %v3481 = vpop.f32.mrb[0].mxu0
        %v3482 = vadd.f32 %v3257, %v3481
        %v3483 = vpop.f32.mrb[0].mxu0
        %v3484 = vpop.f32.mrb[0].mxu0
        %v3485 = vadd.f32 %v3256, %v3484
        %v3486 = vpop.f32.mrb[0].mxu0
        %3487 = vmatprep.mubr.bf16.mxu0 0
        %3488 = vmatmul.mubr.bf16.gmra.mrb[0].mxu0 %v2981
        %v3489 = vpop.f32.mrb[0].mxu0
        %v3490 = vadd.f32 %v3255, %v3489
        %v3491 = vpop.f32.mrb[0].mxu0
        %v3492 = vpop.f32.mrb[0].mxu0
        %v3493 = vadd.f32 %v3286, %v3492
        %v3494 = vpop.f32.mrb[0].mxu0
        %3495 = vdwg.mxu0
        %v3496 = vld [vmem:[%s1 + $0x288] sm:$0xf]
        %v3497 = vld [vmem:[%s1 + $0x28c] sm:$0xf]
        %v3498 = vld [vmem:[%s1 + $0x290] sm:$0xf]
        %v3499 = vld [vmem:[%s1 + $0x294] sm:$0xf]
        %v3500 = vld [vmem:[%s1 + $0x298] sm:$0xf]
        %v3501 = vld [vmem:[%s1 + $0x29c] sm:$0xf]
        %v3502 = vld [vmem:[%s1 + $0x2a0] sm:$0xf]
        %v3503 = vld [vmem:[%s1 + $0x2a4] sm:$0xf]
        %v3504 = vld [vmem:[%s1 + $0x2a8] sm:$0xf]
        %v3505 = vld [vmem:[%s1 + $0x2ac] sm:$0xf]
        %v3506 = vld [vmem:[%s1 + $0x2b0] sm:$0xf]
        %v3507 = vld [vmem:[%s1 + $0x2b4] sm:$0xf]
        %v3508 = vld [vmem:[%s1 + $0x2b8] sm:$0xf]
        %v3509 = vld [vmem:[%s1 + $0x2bc] sm:$0xf]
        %v3510 = vld [vmem:[%s1 + $0x2c0] sm:$0xf]
        %v3511 = vld [vmem:[%s1 + $0x2c4] sm:$0xf]
        %v3528 = vunpack.c.l.b16 %v3496
        %v3529 = vunpack.c.l.b16 %v3497
        %v3530 = vunpack.c.l.b16 %v3498
        %v3531 = vunpack.c.l.b16 %v3499
        %v3532 = vunpack.c.l.b16 %v3500
        %v3533 = vunpack.c.l.b16 %v3501
        %v3534 = vunpack.c.l.b16 %v3502
        %v3535 = vunpack.c.l.b16 %v3503
        %v3536 = vunpack.c.l.b16 %v3504
        %v3537 = vunpack.c.l.b16 %v3505
        %v3538 = vunpack.c.l.b16 %v3506
        %v3539 = vunpack.c.l.b16 %v3507
        %v3540 = vunpack.c.l.b16 %v3508
        %v3541 = vunpack.c.l.b16 %v3509
        %v3542 = vunpack.c.l.b16 %v3510
        %v3543 = vunpack.c.l.b16 %v3511
        %v3544 = vpack.c.b16 %v3529, %v3528
        %v3545 = vpack.c.b16 %v3531, %v3530
        %v3546 = vpack.c.b16 %v3533, %v3532
        %v3547 = vpack.c.b16 %v3535, %v3534
        %v3548 = vpack.c.b16 %v3537, %v3536
        %v3549 = vpack.c.b16 %v3539, %v3538
        %v3550 = vpack.c.b16 %v3541, %v3540
        %v3551 = vpack.c.b16 %v3543, %v3542
        %3560 = vmatprep.subr.bf16.mxu0 0
        %3561 = vmatpush1.bf16.msra.mxu0 %v3544
        %3562 = vmatprep.subr.bf16.mxu0 0
        %3563 = vmatpush1.bf16.msra.mxu0 %v3545
        %3564 = vmatprep.subr.bf16.mxu0 0
        %3565 = vmatpush1.bf16.msra.mxu0 %v3546
        %3566 = vmatprep.subr.bf16.mxu0 0
        %3567 = vmatpush1.bf16.msra.mxu0 %v3547
        %3568 = vmatprep.subr.bf16.mxu0 0
        %3569 = vmatpush1.bf16.msra.mxu0 %v3548
        %3570 = vmatprep.subr.bf16.mxu0 0
        %3571 = vmatpush1.bf16.msra.mxu0 %v3549
        %3572 = vmatprep.subr.bf16.mxu0 0
        %3573 = vmatpush1.bf16.msra.mxu0 %v3550
        %3574 = vmatprep.subr.bf16.mxu0 0
        %3575 = vmatpush1.bf16.msra.mxu0 %v3551
        %3576 = vmatprep.subr.bf16.mxu0 0
        %3577 = vmatpush1.bf16.msra.mxu0 0
        %3578 = vmatprep.subr.bf16.mxu0 0
        %3579 = vmatpush1.bf16.msra.mxu0 0
        %3580 = vmatprep.subr.bf16.mxu0 0
        %3581 = vmatpush1.bf16.msra.mxu0 0
        %3582 = vmatprep.subr.bf16.mxu0 0
        %3583 = vmatpush1.bf16.msra.mxu0 0
        %3584 = vmatprep.subr.bf16.mxu0 0
        %3585 = vmatpush1.bf16.msra.mxu0 0
        %3586 = vmatprep.subr.bf16.mxu0 0
        %3587 = vmatpush1.bf16.msra.mxu0 0
        %3588 = vmatprep.subr.bf16.mxu0 0
        %3589 = vmatpush1.bf16.msra.mxu0 0
        %3590 = vmatprep.subr.bf16.mxu0 0
        %3591 = vmatpush1.bf16.msra.mxu0 0
        %3592 = vmatprep.mubr.bf16.mxu0 0
        %3593 = vmatmul.mubr.bf16.gmra.mrb[0].mxu0 %v2966
        %v3594 = vpop.f32.mrb[0].mxu0
        %v3595 = vadd.f32 0.0, %v3594
        %v3596 = vpop.f32.mrb[0].mxu0
        %v3597 = vpop.f32.mrb[0].mxu0
        %v3598 = vadd.f32 0.0, %v3597
        %v3599 = vpop.f32.mrb[0].mxu0
        %3600 = vmatprep.mubr.bf16.mxu0 0
        %3601 = vmatmul.mubr.bf16.gmra.mrb[0].mxu0 %v2967
        %v3602 = vpop.f32.mrb[0].mxu0
        %v3603 = vadd.f32 0.0, %v3602
        %v3604 = vpop.f32.mrb[0].mxu0
        %v3605 = vpop.f32.mrb[0].mxu0
        %v3606 = vadd.f32 0.0, %v3605
        %v3607 = vpop.f32.mrb[0].mxu0
        %3608 = vmatprep.mubr.bf16.mxu0 0
        %3609 = vmatmul.mubr.bf16.gmra.mrb[0].mxu0 %v2968
        %v3610 = vpop.f32.mrb[0].mxu0
        %v3611 = vadd.f32 0.0, %v3610
        %v3612 = vpop.f32.mrb[0].mxu0
        %v3613 = vpop.f32.mrb[0].mxu0
        %v3614 = vadd.f32 0.0, %v3613
        %v3615 = vpop.f32.mrb[0].mxu0
        %3616 = vmatprep.mubr.bf16.mxu0 0
        %3617 = vmatmul.mubr.bf16.gmra.mrb[0].mxu0 %v2969
        %v3618 = vpop.f32.mrb[0].mxu0
        %v3619 = vadd.f32 0.0, %v3618
        %v3620 = vpop.f32.mrb[0].mxu0
        %v3621 = vpop.f32.mrb[0].mxu0
        %v3622 = vadd.f32 0.0, %v3621
        %v3623 = vpop.f32.mrb[0].mxu0
        %3624 = vmatprep.mubr.bf16.mxu0 0
        %3625 = vmatmul.mubr.bf16.gmra.mrb[0].mxu0 %v2970
        %v3626 = vpop.f32.mrb[0].mxu0
        %v3627 = vadd.f32 0.0, %v3626
        %v3628 = vpop.f32.mrb[0].mxu0
        %v3629 = vpop.f32.mrb[0].mxu0
        %v3630 = vadd.f32 0.0, %v3629
        %v3631 = vpop.f32.mrb[0].mxu0
        %3632 = vmatprep.mubr.bf16.mxu0 0
        %3633 = vmatmul.mubr.bf16.gmra.mrb[0].mxu0 %v2971
        %v3634 = vpop.f32.mrb[0].mxu0
        %v3635 = vadd.f32 0.0, %v3634
        %v3636 = vpop.f32.mrb[0].mxu0
        %v3637 = vpop.f32.mrb[0].mxu0
        %v3638 = vadd.f32 0.0, %v3637
        %v3639 = vpop.f32.mrb[0].mxu0
        %3640 = vmatprep.mubr.bf16.mxu0 0
        %3641 = vmatmul.mubr.bf16.gmra.mrb[0].mxu0 %v2972
        %v3642 = vpop.f32.mrb[0].mxu0
        %v3643 = vadd.f32 0.0, %v3642
        %v3644 = vpop.f32.mrb[0].mxu0
        %v3645 = vpop.f32.mrb[0].mxu0
        %v3646 = vadd.f32 0.0, %v3645
        %v3647 = vpop.f32.mrb[0].mxu0
        %3648 = vmatprep.mubr.bf16.mxu0 0
        %3649 = vmatmul.mubr.bf16.gmra.mrb[0].mxu0 %v2973
        %v3650 = vpop.f32.mrb[0].mxu0
        %v3651 = vadd.f32 0.0, %v3650
        %v3652 = vpop.f32.mrb[0].mxu0
        %v3653 = vpop.f32.mrb[0].mxu0
        %v3654 = vadd.f32 0.0, %v3653
        %v3655 = vpop.f32.mrb[0].mxu0
        %3656 = vmatprep.mubr.bf16.mxu0 0
        %3657 = vmatmul.mubr.bf16.gmra.mrb[0].mxu0 %v2974
        %v3658 = vpop.f32.mrb[0].mxu0
        %v3659 = vadd.f32 0.0, %v3658
        %v3660 = vpop.f32.mrb[0].mxu0
        %v3661 = vpop.f32.mrb[0].mxu0
        %v3662 = vadd.f32 0.0, %v3661
        %v3663 = vpop.f32.mrb[0].mxu0
        %3664 = vmatprep.mubr.bf16.mxu0 0
        %3665 = vmatmul.mubr.bf16.gmra.mrb[0].mxu0 %v2975
        %v3666 = vpop.f32.mrb[0].mxu0
        %v3667 = vadd.f32 0.0, %v3666
        %v3668 = vpop.f32.mrb[0].mxu0
        %v3669 = vpop.f32.mrb[0].mxu0
        %v3670 = vadd.f32 0.0, %v3669
        %v3671 = vpop.f32.mrb[0].mxu0
        %3672 = vmatprep.mubr.bf16.mxu0 0
        %3673 = vmatmul.mubr.bf16.gmra.mrb[0].mxu0 %v2976
        %v3674 = vpop.f32.mrb[0].mxu0
        %v3675 = vadd.f32 0.0, %v3674
        %v3676 = vpop.f32.mrb[0].mxu0
        %v3677 = vpop.f32.mrb[0].mxu0
        %v3678 = vadd.f32 0.0, %v3677
        %v3679 = vpop.f32.mrb[0].mxu0
        %3680 = vmatprep.mubr.bf16.mxu0 0
        %3681 = vmatmul.mubr.bf16.gmra.mrb[0].mxu0 %v2977
        %v3682 = vpop.f32.mrb[0].mxu0
        %v3683 = vadd.f32 0.0, %v3682
        %v3684 = vpop.f32.mrb[0].mxu0
        %v3685 = vpop.f32.mrb[0].mxu0
        %v3686 = vadd.f32 0.0, %v3685
        %v3687 = vpop.f32.mrb[0].mxu0
        %3688 = vmatprep.mubr.bf16.mxu0 0
        %3689 = vmatmul.mubr.bf16.gmra.mrb[0].mxu0 %v2978
        %v3690 = vpop.f32.mrb[0].mxu0
        %v3691 = vadd.f32 0.0, %v3690
        %v3692 = vpop.f32.mrb[0].mxu0
        %v3693 = vpop.f32.mrb[0].mxu0
        %v3694 = vadd.f32 0.0, %v3693
        %v3695 = vpop.f32.mrb[0].mxu0
        %3696 = vmatprep.mubr.bf16.mxu0 0
        %3697 = vmatmul.mubr.bf16.gmra.mrb[0].mxu0 %v2979
        %v3698 = vpop.f32.mrb[0].mxu0
        %v3699 = vadd.f32 0.0, %v3698
        %v3700 = vpop.f32.mrb[0].mxu0
        %v3701 = vpop.f32.mrb[0].mxu0
        %v3702 = vadd.f32 0.0, %v3701
        %v3703 = vpop.f32.mrb[0].mxu0
        %3704 = vmatprep.mubr.bf16.mxu0 0
        %3705 = vmatmul.mubr.bf16.gmra.mrb[0].mxu0 %v2980
        %v3706 = vpop.f32.mrb[0].mxu0
        %v3707 = vadd.f32 0.0, %v3706
        %v3708 = vpop.f32.mrb[0].mxu0
        %v3709 = vpop.f32.mrb[0].mxu0
        %v3710 = vadd.f32 0.0, %v3709
        %v3711 = vpop.f32.mrb[0].mxu0
        %3712 = vmatprep.mubr.bf16.mxu0 0
        %3713 = vmatmul.mubr.bf16.gmra.mrb[0].mxu0 %v2981
        %v3714 = vpop.f32.mrb[0].mxu0
        %v3715 = vadd.f32 0.0, %v3714
        %v3716 = vpop.f32.mrb[0].mxu0
        %v3717 = vpop.f32.mrb[0].mxu0
        %v3718 = vadd.f32 0.0, %v3717
        %v3719 = vpop.f32.mrb[0].mxu0
        %3720 = vdwg.mxu0
        %v3721 = vrot.slane %v3595, 6
        %v3722 = vrot.slane %v3598, 6
        %v3723 = vrot.slane %v3603, 6
        %v3724 = vrot.slane %v3606, 6
        %v3725 = vrot.slane %v3611, 6
        %v3726 = vrot.slane %v3614, 6
        %v3727 = vrot.slane %v3619, 6
        %v3728 = vrot.slane %v3622, 6
        %v3729 = vrot.slane %v3627, 6
        %v3730 = vrot.slane %v3630, 6
        %v3731 = vrot.slane %v3635, 6
        %v3732 = vrot.slane %v3638, 6
        %v3733 = vrot.slane %v3643, 6
        %v3734 = vrot.slane %v3646, 6
        %v3735 = vrot.slane %v3651, 6
        %v3736 = vrot.slane %v3654, 6
        %v3737 = vrot.slane %v3659, 6
        %v3738 = vrot.slane %v3662, 6
        %v3739 = vrot.slane %v3667, 6
        %v3740 = vrot.slane %v3670, 6
        %v3741 = vrot.slane %v3675, 6
        %v3742 = vrot.slane %v3678, 6
        %v3743 = vrot.slane %v3683, 6
        %v3744 = vrot.slane %v3686, 6
        %v3745 = vrot.slane %v3691, 6
        %v3746 = vrot.slane %v3694, 6
        %v3747 = vrot.slane %v3699, 6
        %v3748 = vrot.slane %v3702, 6
        %v3749 = vrot.slane %v3707, 6
        %v3750 = vrot.slane %v3710, 6
        %v3751 = vrot.slane %v3715, 6
        %v3752 = vrot.slane %v3718, 6
        %vm3753 = vcmp.lt.s32.totalorder %v768, 2
        %v3754 = vsel %vm3753, %v3751, %v3752
        %v3755 = vsel %vm3753, %v3750, %v3751
        %v3756 = vsel %vm3753, %v3749, %v3750
        %v3757 = vsel %vm3753, %v3748, %v3749
        %v3758 = vsel %vm3753, %v3747, %v3748
        %v3759 = vsel %vm3753, %v3746, %v3747
        %v3760 = vsel %vm3753, %v3745, %v3746
        %v3761 = vsel %vm3753, %v3744, %v3745
        %v3762 = vsel %vm3753, %v3743, %v3744
        %v3763 = vsel %vm3753, %v3742, %v3743
        %v3764 = vsel %vm3753, %v3741, %v3742
        %v3765 = vsel %vm3753, %v3740, %v3741
        %v3766 = vsel %vm3753, %v3739, %v3740
        %v3767 = vsel %vm3753, %v3738, %v3739
        %v3768 = vsel %vm3753, %v3737, %v3738
        %v3769 = vsel %vm3753, %v3736, %v3737
        %v3770 = vsel %vm3753, %v3735, %v3736
        %v3771 = vsel %vm3753, %v3734, %v3735
        %v3772 = vsel %vm3753, %v3733, %v3734
        %v3773 = vsel %vm3753, %v3732, %v3733
        %v3774 = vsel %vm3753, %v3731, %v3732
        %v3775 = vsel %vm3753, %v3730, %v3731
        %v3776 = vsel %vm3753, %v3729, %v3730
        %v3777 = vsel %vm3753, %v3728, %v3729
        %v3778 = vsel %vm3753, %v3727, %v3728
        %v3779 = vsel %vm3753, %v3726, %v3727
        %v3780 = vsel %vm3753, %v3725, %v3726
        %v3781 = vsel %vm3753, %v3724, %v3725
        %v3782 = vsel %vm3753, %v3723, %v3724
        %v3783 = vsel %vm3753, %v3722, %v3723
        %v3784 = vsel %vm3753, %v3721, %v3722
        %v3785 = vsel %vm3753, %v3752, %v3721
        %v3786 = vadd.f32 %v3370, %v3784
        %v3787 = vadd.f32 %v3373, %v3783
        %v3788 = vadd.f32 %v3378, %v3782
        %v3789 = vadd.f32 %v3381, %v3781
        %v3790 = vadd.f32 %v3386, %v3780
        %v3791 = vadd.f32 %v3389, %v3779
        %v3792 = vadd.f32 %v3394, %v3778
        %v3793 = vadd.f32 %v3397, %v3777
        %v3794 = vadd.f32 %v3402, %v3776
        %v3795 = vadd.f32 %v3405, %v3775
        %v3796 = vadd.f32 %v3410, %v3774
        %v3797 = vadd.f32 %v3413, %v3773
        %v3798 = vadd.f32 %v3418, %v3772
        %v3799 = vadd.f32 %v3421, %v3771
        %v3800 = vadd.f32 %v3426, %v3770
        %v3801 = vadd.f32 %v3429, %v3769
        %v3802 = vadd.f32 %v3434, %v3768
        %v3803 = vadd.f32 %v3437, %v3767
        %v3804 = vadd.f32 %v3442, %v3766
        %v3805 = vadd.f32 %v3445, %v3765
        %v3806 = vadd.f32 %v3450, %v3764
        %v3807 = vadd.f32 %v3453, %v3763
        %v3808 = vadd.f32 %v3458, %v3762
        %v3809 = vadd.f32 %v3461, %v3761
        %v3810 = vadd.f32 %v3466, %v3760
        %v3811 = vadd.f32 %v3469, %v3759
        %v3812 = vadd.f32 %v3474, %v3758
        %v3813 = vadd.f32 %v3477, %v3757
        %v3814 = vadd.f32 %v3482, %v3756
        %v3815 = vadd.f32 %v3485, %v3755
        %v3816 = vadd.f32 %v3490, %v3754
        %v3817 = vadd.f32 %v3493, %v3785
        %v3818 = vld [vmem:[%s2 + $0x3] sm:$0x1]
        %v3819 = vlaneseq
        %v3820 = vshrl.u32 %v3819, 7
        %v3821 = vsub.s32 0, %v3820
        %v3822 = vrot.slane %v3818, %v3821
        %v3823 = vadd.f32 %v3786, %v3822
        %v3824 = vadd.f32 %v3787, %v3822
        %v3825 = vadd.f32 %v3788, %v3822
        %v3826 = vadd.f32 %v3789, %v3822
        %v3827 = vadd.f32 %v3790, %v3822
        %v3828 = vadd.f32 %v3791, %v3822
        %v3829 = vadd.f32 %v3792, %v3822
        %v3830 = vadd.f32 %v3793, %v3822
        %v3831 = vadd.f32 %v3794, %v3822
        %v3832 = vadd.f32 %v3795, %v3822
        %v3833 = vadd.f32 %v3796, %v3822
        %v3834 = vadd.f32 %v3797, %v3822
        %v3835 = vadd.f32 %v3798, %v3822
        %v3836 = vadd.f32 %v3799, %v3822
        %v3837 = vadd.f32 %v3800, %v3822
        %v3838 = vadd.f32 %v3801, %v3822
        %v3839 = vadd.f32 %v3802, %v3822
        %v3840 = vadd.f32 %v3803, %v3822
        %v3841 = vadd.f32 %v3804, %v3822
        %v3842 = vadd.f32 %v3805, %v3822
        %v3843 = vadd.f32 %v3806, %v3822
        %v3844 = vadd.f32 %v3807, %v3822
        %v3845 = vadd.f32 %v3808, %v3822
        %v3846 = vadd.f32 %v3809, %v3822
        %v3847 = vadd.f32 %v3810, %v3822
        %v3848 = vadd.f32 %v3811, %v3822
        %v3849 = vadd.f32 %v3812, %v3822
        %v3850 = vadd.f32 %v3813, %v3822
        %v3851 = vadd.f32 %v3814, %v3822
        %v3852 = vadd.f32 %v3815, %v3822
        %v3853 = vadd.f32 %v3816, %v3822
        %v3854 = vadd.f32 %v3817, %v3822
        %v3855 = vmax.f32 %v3823, 0.0
        %v3856 = vmax.f32 %v3824, 0.0
        %v3857 = vmax.f32 %v3825, 0.0
        %v3858 = vmax.f32 %v3826, 0.0
        %v3859 = vmax.f32 %v3827, 0.0
        %v3860 = vmax.f32 %v3828, 0.0
        %v3861 = vmax.f32 %v3829, 0.0
        %v3862 = vmax.f32 %v3830, 0.0
        %v3863 = vmax.f32 %v3831, 0.0
        %v3864 = vmax.f32 %v3832, 0.0
        %v3865 = vmax.f32 %v3833, 0.0
        %v3866 = vmax.f32 %v3834, 0.0
        %v3867 = vmax.f32 %v3835, 0.0
        %v3868 = vmax.f32 %v3836, 0.0
        %v3869 = vmax.f32 %v3837, 0.0
        %v3870 = vmax.f32 %v3838, 0.0
        %v3871 = vmax.f32 %v3839, 0.0
        %v3872 = vmax.f32 %v3840, 0.0
        %v3873 = vmax.f32 %v3841, 0.0
        %v3874 = vmax.f32 %v3842, 0.0
        %v3875 = vmax.f32 %v3843, 0.0
        %v3876 = vmax.f32 %v3844, 0.0
        %v3877 = vmax.f32 %v3845, 0.0
        %v3878 = vmax.f32 %v3846, 0.0
        %v3879 = vmax.f32 %v3847, 0.0
        %v3880 = vmax.f32 %v3848, 0.0
        %v3881 = vmax.f32 %v3849, 0.0
        %v3882 = vmax.f32 %v3850, 0.0
        %v3883 = vmax.f32 %v3851, 0.0
        %v3884 = vmax.f32 %v3852, 0.0
        %v3885 = vmax.f32 %v3853, 0.0
        %v3886 = vmax.f32 %v3854, 0.0
        %v3887 = vpack.c.bf16 %v3856, %v3855
        %v3888 = vpack.c.bf16 %v3858, %v3857
        %v3889 = vpack.c.bf16 %v3860, %v3859
        %v3890 = vpack.c.bf16 %v3862, %v3861
        %v3891 = vpack.c.bf16 %v3864, %v3863
        %v3892 = vpack.c.bf16 %v3866, %v3865
        %v3893 = vpack.c.bf16 %v3868, %v3867
        %v3894 = vpack.c.bf16 %v3870, %v3869
        %v3895 = vpack.c.bf16 %v3872, %v3871
        %v3896 = vpack.c.bf16 %v3874, %v3873
        %v3897 = vpack.c.bf16 %v3876, %v3875
        %v3898 = vpack.c.bf16 %v3878, %v3877
        %v3899 = vpack.c.bf16 %v3880, %v3879
        %v3900 = vpack.c.bf16 %v3882, %v3881
        %v3901 = vpack.c.bf16 %v3884, %v3883
        %v3902 = vpack.c.bf16 %v3886, %v3885
        %v3903 = vld [vmem:[%s1 + $0x2c8] sm:$0xf]
        %v3904 = vld [vmem:[%s1 + $0x2cc] sm:$0xf]
        %v3905 = vld [vmem:[%s1 + $0x2d0] sm:$0xf]
        %v3906 = vld [vmem:[%s1 + $0x2d4] sm:$0xf]
        %v3907 = vld [vmem:[%s1 + $0x2d8] sm:$0xf]
        %v3908 = vld [vmem:[%s1 + $0x2dc] sm:$0xf]
        %v3909 = vld [vmem:[%s1 + $0x2e0] sm:$0xf]
        %v3910 = vld [vmem:[%s1 + $0x2e4] sm:$0xf]
        %v3911 = vld [vmem:[%s1 + $0x2e8] sm:$0xf]
        %v3912 = vld [vmem:[%s1 + $0x2ec] sm:$0xf]
        %v3913 = vld [vmem:[%s1 + $0x2f0] sm:$0xf]
        %v3914 = vld [vmem:[%s1 + $0x2f4] sm:$0xf]
        %v3915 = vld [vmem:[%s1 + $0x2f8] sm:$0xf]
        %v3916 = vld [vmem:[%s1 + $0x2fc] sm:$0xf]
        %v3917 = vld [vmem:[%s1 + $0x300] sm:$0xf]
        %v3918 = vld [vmem:[%s1 + $0x304] sm:$0xf]
        %v3919 = vld [vmem:[%s2 + $0x4] sm:$0x1]
        %v3920 = vlaneseq
        %v3921 = vshrl.u32 %v3920, 7
        %v3922 = vsub.s32 0, %v3921
        %v3923 = vrot.slane %v3919, %v3922
        %v3940 = vunpack.c.l.b16 %v3903
        %v3941 = vunpack.c.l.b16 %v3904
        %v3942 = vunpack.c.l.b16 %v3905
        %v3943 = vunpack.c.l.b16 %v3906
        %v3944 = vunpack.c.l.b16 %v3907
        %v3945 = vunpack.c.l.b16 %v3908
        %v3946 = vunpack.c.l.b16 %v3909
        %v3947 = vunpack.c.l.b16 %v3910
        %v3948 = vunpack.c.l.b16 %v3911
        %v3949 = vunpack.c.l.b16 %v3912
        %v3950 = vunpack.c.l.b16 %v3913
        %v3951 = vunpack.c.l.b16 %v3914
        %v3952 = vunpack.c.l.b16 %v3915
        %v3953 = vunpack.c.l.b16 %v3916
        %v3954 = vunpack.c.l.b16 %v3917
        %v3955 = vunpack.c.l.b16 %v3918
        %v3956 = vpack.c.b16 %v3941, %v3940
        %v3957 = vpack.c.b16 %v3943, %v3942
        %v3958 = vpack.c.b16 %v3945, %v3944
        %v3959 = vpack.c.b16 %v3947, %v3946
        %v3960 = vpack.c.b16 %v3949, %v3948
        %v3961 = vpack.c.b16 %v3951, %v3950
        %v3962 = vpack.c.b16 %v3953, %v3952
        %v3963 = vpack.c.b16 %v3955, %v3954
        %3972 = vmatprep.subr.bf16.mxu0 0
        %3973 = vmatpush1.bf16.msra.mxu0 %v3956
        %3974 = vmatprep.subr.bf16.mxu0 0
        %3975 = vmatpush1.bf16.msra.mxu0 %v3957
        %3976 = vmatprep.subr.bf16.mxu0 0
        %3977 = vmatpush1.bf16.msra.mxu0 %v3958
        %3978 = vmatprep.subr.bf16.mxu0 0
        %3979 = vmatpush1.bf16.msra.mxu0 %v3959
        %3980 = vmatprep.subr.bf16.mxu0 0
        %3981 = vmatpush1.bf16.msra.mxu0 %v3960
        %3982 = vmatprep.subr.bf16.mxu0 0
        %3983 = vmatpush1.bf16.msra.mxu0 %v3961
        %3984 = vmatprep.subr.bf16.mxu0 0
        %3985 = vmatpush1.bf16.msra.mxu0 %v3962
        %3986 = vmatprep.subr.bf16.mxu0 0
        %3987 = vmatpush1.bf16.msra.mxu0 %v3963
        %3988 = vmatprep.subr.bf16.mxu0 0
        %3989 = vmatpush1.bf16.msra.mxu0 0
        %3990 = vmatprep.subr.bf16.mxu0 0
        %3991 = vmatpush1.bf16.msra.mxu0 0
        %3992 = vmatprep.subr.bf16.mxu0 0
        %3993 = vmatpush1.bf16.msra.mxu0 0
        %3994 = vmatprep.subr.bf16.mxu0 0
        %3995 = vmatpush1.bf16.msra.mxu0 0
        %3996 = vmatprep.subr.bf16.mxu0 0
        %3997 = vmatpush1.bf16.msra.mxu0 0
        %3998 = vmatprep.subr.bf16.mxu0 0
        %3999 = vmatpush1.bf16.msra.mxu0 0
        %4000 = vmatprep.subr.bf16.mxu0 0
        %4001 = vmatpush1.bf16.msra.mxu0 0
        %4002 = vmatprep.subr.bf16.mxu0 0
        %4003 = vmatpush1.bf16.msra.mxu0 0
        %4004 = vmatprep.mubr.bf16.mxu0 0
        %4005 = vmatmul.mubr.bf16.gmra.mrb[0].mxu0 %v3887
        %v4006 = vpop.f32.mrb[0].mxu0
        %v4007 = vadd.f32 %v3923, %v4006
        %v4008 = vpop.f32.mrb[0].mxu0
        %v4009 = vpop.f32.mrb[0].mxu0
        %v4010 = vadd.f32 %v3923, %v4009
        %v4011 = vpop.f32.mrb[0].mxu0
        %4012 = vmatprep.mubr.bf16.mxu0 0
        %4013 = vmatmul.mubr.bf16.gmra.mrb[0].mxu0 %v3888
        %v4014 = vpop.f32.mrb[0].mxu0
        %v4015 = vadd.f32 %v3923, %v4014
        %v4016 = vpop.f32.mrb[0].mxu0
        %v4017 = vpop.f32.mrb[0].mxu0
        %v4018 = vadd.f32 %v3923, %v4017
        %v4019 = vpop.f32.mrb[0].mxu0
        %4020 = vmatprep.mubr.bf16.mxu0 0
        %4021 = vmatmul.mubr.bf16.gmra.mrb[0].mxu0 %v3889
        %v4022 = vpop.f32.mrb[0].mxu0
        %v4023 = vadd.f32 %v3923, %v4022
        %v4024 = vpop.f32.mrb[0].mxu0
        %v4025 = vpop.f32.mrb[0].mxu0
        %v4026 = vadd.f32 %v3923, %v4025
        %v4027 = vpop.f32.mrb[0].mxu0
        %4028 = vmatprep.mubr.bf16.mxu0 0
        %4029 = vmatmul.mubr.bf16.gmra.mrb[0].mxu0 %v3890
        %v4030 = vpop.f32.mrb[0].mxu0
        %v4031 = vadd.f32 %v3923, %v4030
        %v4032 = vpop.f32.mrb[0].mxu0
        %v4033 = vpop.f32.mrb[0].mxu0
        %v4034 = vadd.f32 %v3923, %v4033
        %v4035 = vpop.f32.mrb[0].mxu0
        %4036 = vmatprep.mubr.bf16.mxu0 0
        %4037 = vmatmul.mubr.bf16.gmra.mrb[0].mxu0 %v3891
        %v4038 = vpop.f32.mrb[0].mxu0
        %v4039 = vadd.f32 %v3923, %v4038
        %v4040 = vpop.f32.mrb[0].mxu0
        %v4041 = vpop.f32.mrb[0].mxu0
        %v4042 = vadd.f32 %v3923, %v4041
        %v4043 = vpop.f32.mrb[0].mxu0
        %4044 = vmatprep.mubr.bf16.mxu0 0
        %4045 = vmatmul.mubr.bf16.gmra.mrb[0].mxu0 %v3892
        %v4046 = vpop.f32.mrb[0].mxu0
        %v4047 = vadd.f32 %v3923, %v4046
        %v4048 = vpop.f32.mrb[0].mxu0
        %v4049 = vpop.f32.mrb[0].mxu0
        %v4050 = vadd.f32 %v3923, %v4049
        %v4051 = vpop.f32.mrb[0].mxu0
        %4052 = vmatprep.mubr.bf16.mxu0 0
        %4053 = vmatmul.mubr.bf16.gmra.mrb[0].mxu0 %v3893
        %v4054 = vpop.f32.mrb[0].mxu0
        %v4055 = vadd.f32 %v3923, %v4054
        %v4056 = vpop.f32.mrb[0].mxu0
        %v4057 = vpop.f32.mrb[0].mxu0
        %v4058 = vadd.f32 %v3923, %v4057
        %v4059 = vpop.f32.mrb[0].mxu0
        %4060 = vmatprep.mubr.bf16.mxu0 0
        %4061 = vmatmul.mubr.bf16.gmra.mrb[0].mxu0 %v3894
        %v4062 = vpop.f32.mrb[0].mxu0
        %v4063 = vadd.f32 %v3923, %v4062
        %v4064 = vpop.f32.mrb[0].mxu0
        %v4065 = vpop.f32.mrb[0].mxu0
        %v4066 = vadd.f32 %v3923, %v4065
        %v4067 = vpop.f32.mrb[0].mxu0
        %4068 = vmatprep.mubr.bf16.mxu0 0
        %4069 = vmatmul.mubr.bf16.gmra.mrb[0].mxu0 %v3895
        %v4070 = vpop.f32.mrb[0].mxu0
        %v4071 = vadd.f32 %v3923, %v4070
        %v4072 = vpop.f32.mrb[0].mxu0
        %v4073 = vpop.f32.mrb[0].mxu0
        %v4074 = vadd.f32 %v3923, %v4073
        %v4075 = vpop.f32.mrb[0].mxu0
        %4076 = vmatprep.mubr.bf16.mxu0 0
        %4077 = vmatmul.mubr.bf16.gmra.mrb[0].mxu0 %v3896
        %v4078 = vpop.f32.mrb[0].mxu0
        %v4079 = vadd.f32 %v3923, %v4078
        %v4080 = vpop.f32.mrb[0].mxu0
        %v4081 = vpop.f32.mrb[0].mxu0
        %v4082 = vadd.f32 %v3923, %v4081
        %v4083 = vpop.f32.mrb[0].mxu0
        %4084 = vmatprep.mubr.bf16.mxu0 0
        %4085 = vmatmul.mubr.bf16.gmra.mrb[0].mxu0 %v3897
        %v4086 = vpop.f32.mrb[0].mxu0
        %v4087 = vadd.f32 %v3923, %v4086
        %v4088 = vpop.f32.mrb[0].mxu0
        %v4089 = vpop.f32.mrb[0].mxu0
        %v4090 = vadd.f32 %v3923, %v4089
        %v4091 = vpop.f32.mrb[0].mxu0
        %4092 = vmatprep.mubr.bf16.mxu0 0
        %4093 = vmatmul.mubr.bf16.gmra.mrb[0].mxu0 %v3898
        %v4094 = vpop.f32.mrb[0].mxu0
        %v4095 = vadd.f32 %v3923, %v4094
        %v4096 = vpop.f32.mrb[0].mxu0
        %v4097 = vpop.f32.mrb[0].mxu0
        %v4098 = vadd.f32 %v3923, %v4097
        %v4099 = vpop.f32.mrb[0].mxu0
        %4100 = vmatprep.mubr.bf16.mxu0 0
        %4101 = vmatmul.mubr.bf16.gmra.mrb[0].mxu0 %v3899
        %v4102 = vpop.f32.mrb[0].mxu0
        %v4103 = vadd.f32 %v3923, %v4102
        %v4104 = vpop.f32.mrb[0].mxu0
        %v4105 = vpop.f32.mrb[0].mxu0
        %v4106 = vadd.f32 %v3923, %v4105
        %v4107 = vpop.f32.mrb[0].mxu0
        %4108 = vmatprep.mubr.bf16.mxu0 0
        %4109 = vmatmul.mubr.bf16.gmra.mrb[0].mxu0 %v3900
        %v4110 = vpop.f32.mrb[0].mxu0
        %v4111 = vadd.f32 %v3923, %v4110
        %v4112 = vpop.f32.mrb[0].mxu0
        %v4113 = vpop.f32.mrb[0].mxu0
        %v4114 = vadd.f32 %v3923, %v4113
        %v4115 = vpop.f32.mrb[0].mxu0
        %4116 = vmatprep.mubr.bf16.mxu0 0
        %4117 = vmatmul.mubr.bf16.gmra.mrb[0].mxu0 %v3901
        %v4118 = vpop.f32.mrb[0].mxu0
        %v4119 = vadd.f32 %v3923, %v4118
        %v4120 = vpop.f32.mrb[0].mxu0
        %v4121 = vpop.f32.mrb[0].mxu0
        %v4122 = vadd.f32 %v3923, %v4121
        %v4123 = vpop.f32.mrb[0].mxu0
        %4124 = vmatprep.mubr.bf16.mxu0 0
        %4125 = vmatmul.mubr.bf16.gmra.mrb[0].mxu0 %v3902
        %v4126 = vpop.f32.mrb[0].mxu0
        %v4127 = vadd.f32 %v3923, %v4126
        %v4128 = vpop.f32.mrb[0].mxu0
        %v4129 = vpop.f32.mrb[0].mxu0
        %v4130 = vadd.f32 %v3923, %v4129
        %v4131 = vpop.f32.mrb[0].mxu0
        %4132 = vdwg.mxu0
        %v4133 = vmax.f32 %v4007, 0.0
        %v4134 = vmax.f32 %v4010, 0.0
        %v4135 = vmax.f32 %v4015, 0.0
        %v4136 = vmax.f32 %v4018, 0.0
        %v4137 = vmax.f32 %v4023, 0.0
        %v4138 = vmax.f32 %v4026, 0.0
        %v4139 = vmax.f32 %v4031, 0.0
        %v4140 = vmax.f32 %v4034, 0.0
        %v4141 = vmax.f32 %v4039, 0.0
        %v4142 = vmax.f32 %v4042, 0.0
        %v4143 = vmax.f32 %v4047, 0.0
        %v4144 = vmax.f32 %v4050, 0.0
        %v4145 = vmax.f32 %v4055, 0.0
        %v4146 = vmax.f32 %v4058, 0.0
        %v4147 = vmax.f32 %v4063, 0.0
        %v4148 = vmax.f32 %v4066, 0.0
        %v4149 = vmax.f32 %v4071, 0.0
        %v4150 = vmax.f32 %v4074, 0.0
        %v4151 = vmax.f32 %v4079, 0.0
        %v4152 = vmax.f32 %v4082, 0.0
        %v4153 = vmax.f32 %v4087, 0.0
        %v4154 = vmax.f32 %v4090, 0.0
        %v4155 = vmax.f32 %v4095, 0.0
        %v4156 = vmax.f32 %v4098, 0.0
        %v4157 = vmax.f32 %v4103, 0.0
        %v4158 = vmax.f32 %v4106, 0.0
        %v4159 = vmax.f32 %v4111, 0.0
        %v4160 = vmax.f32 %v4114, 0.0
        %v4161 = vmax.f32 %v4119, 0.0
        %v4162 = vmax.f32 %v4122, 0.0
        %v4163 = vmax.f32 %v4127, 0.0
        %v4164 = vmax.f32 %v4130, 0.0
        %v4165 = vpack.c.bf16 %v4134, %v4133
        %v4166 = vpack.c.bf16 %v4136, %v4135
        %v4167 = vpack.c.bf16 %v4138, %v4137
        %v4168 = vpack.c.bf16 %v4140, %v4139
        %v4169 = vpack.c.bf16 %v4142, %v4141
        %v4170 = vpack.c.bf16 %v4144, %v4143
        %v4171 = vpack.c.bf16 %v4146, %v4145
        %v4172 = vpack.c.bf16 %v4148, %v4147
        %v4173 = vpack.c.bf16 %v4150, %v4149
        %v4174 = vpack.c.bf16 %v4152, %v4151
        %v4175 = vpack.c.bf16 %v4154, %v4153
        %v4176 = vpack.c.bf16 %v4156, %v4155
        %v4177 = vpack.c.bf16 %v4158, %v4157
        %v4178 = vpack.c.bf16 %v4160, %v4159
        %v4179 = vpack.c.bf16 %v4162, %v4161
        %v4180 = vpack.c.bf16 %v4164, %v4163
        %v4181 = vld [vmem:[%s1 + $0x308] sm:$0xf]
        %v4182 = vld [vmem:[%s1 + $0x30c] sm:$0xf]
        %v4183 = vld [vmem:[%s1 + $0x310] sm:$0xf]
        %v4184 = vld [vmem:[%s1 + $0x314] sm:$0xf]
        %v4185 = vld [vmem:[%s1 + $0x318] sm:$0xf]
        %v4186 = vld [vmem:[%s1 + $0x31c] sm:$0xf]
        %v4187 = vld [vmem:[%s1 + $0x320] sm:$0xf]
        %v4188 = vld [vmem:[%s1 + $0x324] sm:$0xf]
        %v4189 = vld [vmem:[%s1 + $0x328] sm:$0xf]
        %v4190 = vld [vmem:[%s1 + $0x32c] sm:$0xf]
        %v4191 = vld [vmem:[%s1 + $0x330] sm:$0xf]
        %v4192 = vld [vmem:[%s1 + $0x334] sm:$0xf]
        %v4193 = vld [vmem:[%s1 + $0x338] sm:$0xf]
        %v4194 = vld [vmem:[%s1 + $0x33c] sm:$0xf]
        %v4195 = vld [vmem:[%s1 + $0x340] sm:$0xf]
        %v4196 = vld [vmem:[%s1 + $0x344] sm:$0xf]
        %v4197 = vld [vmem:[%s2 + $0x5] sm:$0x1]
        %v4198 = vlaneseq
        %v4199 = vshrl.u32 %v4198, 7
        %v4200 = vsub.s32 0, %v4199
        %v4201 = vrot.slane %v4197, %v4200
        %v4218 = vunpack.c.l.b16 %v4181
        %v4219 = vunpack.c.l.b16 %v4182
        %v4220 = vunpack.c.l.b16 %v4183
        %v4221 = vunpack.c.l.b16 %v4184
        %v4222 = vunpack.c.l.b16 %v4185
        %v4223 = vunpack.c.l.b16 %v4186
        %v4224 = vunpack.c.l.b16 %v4187
        %v4225 = vunpack.c.l.b16 %v4188
        %v4226 = vunpack.c.l.b16 %v4189
        %v4227 = vunpack.c.l.b16 %v4190
        %v4228 = vunpack.c.l.b16 %v4191
        %v4229 = vunpack.c.l.b16 %v4192
        %v4230 = vunpack.c.l.b16 %v4193
        %v4231 = vunpack.c.l.b16 %v4194
        %v4232 = vunpack.c.l.b16 %v4195
        %v4233 = vunpack.c.l.b16 %v4196
        %v4234 = vpack.c.b16 %v4219, %v4218
        %v4235 = vpack.c.b16 %v4221, %v4220
        %v4236 = vpack.c.b16 %v4223, %v4222
        %v4237 = vpack.c.b16 %v4225, %v4224
        %v4238 = vpack.c.b16 %v4227, %v4226
        %v4239 = vpack.c.b16 %v4229, %v4228
        %v4240 = vpack.c.b16 %v4231, %v4230
        %v4241 = vpack.c.b16 %v4233, %v4232
        %4250 = vmatprep.subr.bf16.mxu0 0
        %4251 = vmatpush1.bf16.msra.mxu0 %v4234
        %4252 = vmatprep.subr.bf16.mxu0 0
        %4253 = vmatpush1.bf16.msra.mxu0 %v4235
        %4254 = vmatprep.subr.bf16.mxu0 0
        %4255 = vmatpush1.bf16.msra.mxu0 %v4236
        %4256 = vmatprep.subr.bf16.mxu0 0
        %4257 = vmatpush1.bf16.msra.mxu0 %v4237
        %4258 = vmatprep.subr.bf16.mxu0 0
        %4259 = vmatpush1.bf16.msra.mxu0 %v4238
        %4260 = vmatprep.subr.bf16.mxu0 0
        %4261 = vmatpush1.bf16.msra.mxu0 %v4239
        %4262 = vmatprep.subr.bf16.mxu0 0
        %4263 = vmatpush1.bf16.msra.mxu0 %v4240
        %4264 = vmatprep.subr.bf16.mxu0 0
        %4265 = vmatpush1.bf16.msra.mxu0 %v4241
        %4266 = vmatprep.subr.bf16.mxu0 0
        %4267 = vmatpush1.bf16.msra.mxu0 0
        %4268 = vmatprep.subr.bf16.mxu0 0
        %4269 = vmatpush1.bf16.msra.mxu0 0
        %4270 = vmatprep.subr.bf16.mxu0 0
        %4271 = vmatpush1.bf16.msra.mxu0 0
        %4272 = vmatprep.subr.bf16.mxu0 0
        %4273 = vmatpush1.bf16.msra.mxu0 0
        %4274 = vmatprep.subr.bf16.mxu0 0
        %4275 = vmatpush1.bf16.msra.mxu0 0
        %4276 = vmatprep.subr.bf16.mxu0 0
        %4277 = vmatpush1.bf16.msra.mxu0 0
        %4278 = vmatprep.subr.bf16.mxu0 0
        %4279 = vmatpush1.bf16.msra.mxu0 0
        %4280 = vmatprep.subr.bf16.mxu0 0
        %4281 = vmatpush1.bf16.msra.mxu0 0
        %4282 = vmatprep.mubr.bf16.mxu0 0
        %4283 = vmatmul.mubr.bf16.gmra.mrb[0].mxu0 %v4165
        %v4284 = vpop.f32.mrb[0].mxu0
        %v4285 = vadd.f32 %v4201, %v4284
        %v4286 = vpop.f32.mrb[0].mxu0
        %v4287 = vpop.f32.mrb[0].mxu0
        %v4288 = vadd.f32 %v4201, %v4287
        %v4289 = vpop.f32.mrb[0].mxu0
        %4290 = vmatprep.mubr.bf16.mxu0 0
        %4291 = vmatmul.mubr.bf16.gmra.mrb[0].mxu0 %v4166
        %v4292 = vpop.f32.mrb[0].mxu0
        %v4293 = vadd.f32 %v4201, %v4292
        %v4294 = vpop.f32.mrb[0].mxu0
        %v4295 = vpop.f32.mrb[0].mxu0
        %v4296 = vadd.f32 %v4201, %v4295
        %v4297 = vpop.f32.mrb[0].mxu0
        %4298 = vmatprep.mubr.bf16.mxu0 0
        %4299 = vmatmul.mubr.bf16.gmra.mrb[0].mxu0 %v4167
        %v4300 = vpop.f32.mrb[0].mxu0
        %v4301 = vadd.f32 %v4201, %v4300
        %v4302 = vpop.f32.mrb[0].mxu0
        %v4303 = vpop.f32.mrb[0].mxu0
        %v4304 = vadd.f32 %v4201, %v4303
        %v4305 = vpop.f32.mrb[0].mxu0
        %4306 = vmatprep.mubr.bf16.mxu0 0
        %4307 = vmatmul.mubr.bf16.gmra.mrb[0].mxu0 %v4168
        %v4308 = vpop.f32.mrb[0].mxu0
        %v4309 = vadd.f32 %v4201, %v4308
        %v4310 = vpop.f32.mrb[0].mxu0
        %v4311 = vpop.f32.mrb[0].mxu0
        %v4312 = vadd.f32 %v4201, %v4311
        %v4313 = vpop.f32.mrb[0].mxu0
        %4314 = vmatprep.mubr.bf16.mxu0 0
        %4315 = vmatmul.mubr.bf16.gmra.mrb[0].mxu0 %v4169
        %v4316 = vpop.f32.mrb[0].mxu0
        %v4317 = vadd.f32 %v4201, %v4316
        %v4318 = vpop.f32.mrb[0].mxu0
        %v4319 = vpop.f32.mrb[0].mxu0
        %v4320 = vadd.f32 %v4201, %v4319
        %v4321 = vpop.f32.mrb[0].mxu0
        %4322 = vmatprep.mubr.bf16.mxu0 0
        %4323 = vmatmul.mubr.bf16.gmra.mrb[0].mxu0 %v4170
        %v4324 = vpop.f32.mrb[0].mxu0
        %v4325 = vadd.f32 %v4201, %v4324
        %v4326 = vpop.f32.mrb[0].mxu0
        %v4327 = vpop.f32.mrb[0].mxu0
        %v4328 = vadd.f32 %v4201, %v4327
        %v4329 = vpop.f32.mrb[0].mxu0
        %4330 = vmatprep.mubr.bf16.mxu0 0
        %4331 = vmatmul.mubr.bf16.gmra.mrb[0].mxu0 %v4171
        %v4332 = vpop.f32.mrb[0].mxu0
        %v4333 = vadd.f32 %v4201, %v4332
        %v4334 = vpop.f32.mrb[0].mxu0
        %v4335 = vpop.f32.mrb[0].mxu0
        %v4336 = vadd.f32 %v4201, %v4335
        %v4337 = vpop.f32.mrb[0].mxu0
        %4338 = vmatprep.mubr.bf16.mxu0 0
        %4339 = vmatmul.mubr.bf16.gmra.mrb[0].mxu0 %v4172
        %v4340 = vpop.f32.mrb[0].mxu0
        %v4341 = vadd.f32 %v4201, %v4340
        %v4342 = vpop.f32.mrb[0].mxu0
        %v4343 = vpop.f32.mrb[0].mxu0
        %v4344 = vadd.f32 %v4201, %v4343
        %v4345 = vpop.f32.mrb[0].mxu0
        %4346 = vmatprep.mubr.bf16.mxu0 0
        %4347 = vmatmul.mubr.bf16.gmra.mrb[0].mxu0 %v4173
        %v4348 = vpop.f32.mrb[0].mxu0
        %v4349 = vadd.f32 %v4201, %v4348
        %v4350 = vpop.f32.mrb[0].mxu0
        %v4351 = vpop.f32.mrb[0].mxu0
        %v4352 = vadd.f32 %v4201, %v4351
        %v4353 = vpop.f32.mrb[0].mxu0
        %4354 = vmatprep.mubr.bf16.mxu0 0
        %4355 = vmatmul.mubr.bf16.gmra.mrb[0].mxu0 %v4174
        %v4356 = vpop.f32.mrb[0].mxu0
        %v4357 = vadd.f32 %v4201, %v4356
        %v4358 = vpop.f32.mrb[0].mxu0
        %v4359 = vpop.f32.mrb[0].mxu0
        %v4360 = vadd.f32 %v4201, %v4359
        %v4361 = vpop.f32.mrb[0].mxu0
        %4362 = vmatprep.mubr.bf16.mxu0 0
        %4363 = vmatmul.mubr.bf16.gmra.mrb[0].mxu0 %v4175
        %v4364 = vpop.f32.mrb[0].mxu0
        %v4365 = vadd.f32 %v4201, %v4364
        %v4366 = vpop.f32.mrb[0].mxu0
        %v4367 = vpop.f32.mrb[0].mxu0
        %v4368 = vadd.f32 %v4201, %v4367
        %v4369 = vpop.f32.mrb[0].mxu0
        %4370 = vmatprep.mubr.bf16.mxu0 0
        %4371 = vmatmul.mubr.bf16.gmra.mrb[0].mxu0 %v4176
        %v4372 = vpop.f32.mrb[0].mxu0
        %v4373 = vadd.f32 %v4201, %v4372
        %v4374 = vpop.f32.mrb[0].mxu0
        %v4375 = vpop.f32.mrb[0].mxu0
        %v4376 = vadd.f32 %v4201, %v4375
        %v4377 = vpop.f32.mrb[0].mxu0
        %4378 = vmatprep.mubr.bf16.mxu0 0
        %4379 = vmatmul.mubr.bf16.gmra.mrb[0].mxu0 %v4177
        %v4380 = vpop.f32.mrb[0].mxu0
        %v4381 = vadd.f32 %v4201, %v4380
        %v4382 = vpop.f32.mrb[0].mxu0
        %v4383 = vpop.f32.mrb[0].mxu0
        %v4384 = vadd.f32 %v4201, %v4383
        %v4385 = vpop.f32.mrb[0].mxu0
        %4386 = vmatprep.mubr.bf16.mxu0 0
        %4387 = vmatmul.mubr.bf16.gmra.mrb[0].mxu0 %v4178
        %v4388 = vpop.f32.mrb[0].mxu0
        %v4389 = vadd.f32 %v4201, %v4388
        %v4390 = vpop.f32.mrb[0].mxu0
        %v4391 = vpop.f32.mrb[0].mxu0
        %v4392 = vadd.f32 %v4201, %v4391
        %v4393 = vpop.f32.mrb[0].mxu0
        %4394 = vmatprep.mubr.bf16.mxu0 0
        %4395 = vmatmul.mubr.bf16.gmra.mrb[0].mxu0 %v4179
        %v4396 = vpop.f32.mrb[0].mxu0
        %v4397 = vadd.f32 %v4201, %v4396
        %v4398 = vpop.f32.mrb[0].mxu0
        %v4399 = vpop.f32.mrb[0].mxu0
        %v4400 = vadd.f32 %v4201, %v4399
        %v4401 = vpop.f32.mrb[0].mxu0
        %4402 = vmatprep.mubr.bf16.mxu0 0
        %4403 = vmatmul.mubr.bf16.gmra.mrb[0].mxu0 %v4180
        %v4404 = vpop.f32.mrb[0].mxu0
        %v4405 = vadd.f32 %v4201, %v4404
        %v4406 = vpop.f32.mrb[0].mxu0
        %v4407 = vpop.f32.mrb[0].mxu0
        %v4408 = vadd.f32 %v4201, %v4407
        %v4409 = vpop.f32.mrb[0].mxu0
        %4410 = vdwg.mxu0
        %v4411 = vmax.f32 %v4285, 0.0
        %v4412 = vmax.f32 %v4288, 0.0
        %v4413 = vmax.f32 %v4293, 0.0
        %v4414 = vmax.f32 %v4296, 0.0
        %v4415 = vmax.f32 %v4301, 0.0
        %v4416 = vmax.f32 %v4304, 0.0
        %v4417 = vmax.f32 %v4309, 0.0
        %v4418 = vmax.f32 %v4312, 0.0
        %v4419 = vmax.f32 %v4317, 0.0
        %v4420 = vmax.f32 %v4320, 0.0
        %v4421 = vmax.f32 %v4325, 0.0
        %v4422 = vmax.f32 %v4328, 0.0
        %v4423 = vmax.f32 %v4333, 0.0
        %v4424 = vmax.f32 %v4336, 0.0
        %v4425 = vmax.f32 %v4341, 0.0
        %v4426 = vmax.f32 %v4344, 0.0
        %v4427 = vmax.f32 %v4349, 0.0
        %v4428 = vmax.f32 %v4352, 0.0
        %v4429 = vmax.f32 %v4357, 0.0
        %v4430 = vmax.f32 %v4360, 0.0
        %v4431 = vmax.f32 %v4365, 0.0
        %v4432 = vmax.f32 %v4368, 0.0
        %v4433 = vmax.f32 %v4373, 0.0
        %v4434 = vmax.f32 %v4376, 0.0
        %v4435 = vmax.f32 %v4381, 0.0
        %v4436 = vmax.f32 %v4384, 0.0
        %v4437 = vmax.f32 %v4389, 0.0
        %v4438 = vmax.f32 %v4392, 0.0
        %v4439 = vmax.f32 %v4397, 0.0
        %v4440 = vmax.f32 %v4400, 0.0
        %v4441 = vmax.f32 %v4405, 0.0
        %v4442 = vmax.f32 %v4408, 0.0
        %v4443 = vpack.c.bf16 %v4412, %v4411
        %v4444 = vpack.c.bf16 %v4414, %v4413
        %v4445 = vpack.c.bf16 %v4416, %v4415
        %v4446 = vpack.c.bf16 %v4418, %v4417
        %v4447 = vpack.c.bf16 %v4420, %v4419
        %v4448 = vpack.c.bf16 %v4422, %v4421
        %v4449 = vpack.c.bf16 %v4424, %v4423
        %v4450 = vpack.c.bf16 %v4426, %v4425
        %v4451 = vpack.c.bf16 %v4428, %v4427
        %v4452 = vpack.c.bf16 %v4430, %v4429
        %v4453 = vpack.c.bf16 %v4432, %v4431
        %v4454 = vpack.c.bf16 %v4434, %v4433
        %v4455 = vpack.c.bf16 %v4436, %v4435
        %v4456 = vpack.c.bf16 %v4438, %v4437
        %v4457 = vpack.c.bf16 %v4440, %v4439
        %v4458 = vpack.c.bf16 %v4442, %v4441
        %v4459 = vunpack.c.l.bf16 %v4443
        %v4460 = vunpack.c.h.bf16 %v4443
        %v4461 = vunpack.c.l.bf16 %v4444
        %v4462 = vunpack.c.h.bf16 %v4444
        %v4463 = vunpack.c.l.bf16 %v4445
        %v4464 = vunpack.c.h.bf16 %v4445
        %v4465 = vunpack.c.l.bf16 %v4446
        %v4466 = vunpack.c.h.bf16 %v4446
        %v4467 = vunpack.c.l.bf16 %v4447
        %v4468 = vunpack.c.h.bf16 %v4447
        %v4469 = vunpack.c.l.bf16 %v4448
        %v4470 = vunpack.c.h.bf16 %v4448
        %v4471 = vunpack.c.l.bf16 %v4449
        %v4472 = vunpack.c.h.bf16 %v4449
        %v4473 = vunpack.c.l.bf16 %v4450
        %v4474 = vunpack.c.h.bf16 %v4450
        %v4475 = vunpack.c.l.bf16 %v4451
        %v4476 = vunpack.c.h.bf16 %v4451
        %v4477 = vunpack.c.l.bf16 %v4452
        %v4478 = vunpack.c.h.bf16 %v4452
        %v4479 = vunpack.c.l.bf16 %v4453
        %v4480 = vunpack.c.h.bf16 %v4453
        %v4481 = vunpack.c.l.bf16 %v4454
        %v4482 = vunpack.c.h.bf16 %v4454
        %v4483 = vunpack.c.l.bf16 %v4455
        %v4484 = vunpack.c.h.bf16 %v4455
        %v4485 = vunpack.c.l.bf16 %v4456
        %v4486 = vunpack.c.h.bf16 %v4456
        %v4487 = vunpack.c.l.bf16 %v4457
        %v4488 = vunpack.c.h.bf16 %v4457
        %v4489 = vunpack.c.l.bf16 %v4458
        %v4490 = vunpack.c.h.bf16 %v4458
        %v4491 = vadd.s32 %v768, 8
        %v4492 = vadd.s32 %v768, 16
        %v4493 = vadd.s32 %v768, 24
        %v4494 = vadd.s32 %v768, 32
        %v4495 = vadd.s32 %v768, 40
        %v4496 = vadd.s32 %v768, 48
        %v4497 = vadd.s32 %v768, 56
        %vm4498 = vcmp.lt.s32.totalorder %v768, 50
        %vm4499 = vcmp.lt.s32.totalorder %v4491, 50
        %vm4500 = vcmp.lt.s32.totalorder %v4492, 50
        %vm4501 = vcmp.lt.s32.totalorder %v4493, 50
        %vm4502 = vcmp.lt.s32.totalorder %v4494, 50
        %vm4503 = vcmp.lt.s32.totalorder %v4495, 50
        %vm4504 = vcmp.lt.s32.totalorder %v4496, 50
        %vm4505 = vcmp.lt.s32.totalorder %v4497, 50
        %v4506 = vsel %vm4498, 1, 0
        %v4507 = vsel %vm4499, 1, 0
        %v4508 = vsel %vm4500, 1, 0
        %v4509 = vsel %vm4501, 1, 0
        %v4510 = vsel %vm4502, 1, 0
        %v4511 = vsel %vm4503, 1, 0
        %v4512 = vsel %vm4504, 1, 0
        %v4513 = vsel %vm4505, 1, 0
        %v4514 = vcvt.s32.f32 %v4506
        %v4515 = vcvt.s32.f32 %v4507
        %v4516 = vcvt.s32.f32 %v4508
        %v4517 = vcvt.s32.f32 %v4509
        %v4518 = vcvt.s32.f32 %v4510
        %v4519 = vcvt.s32.f32 %v4511
        %v4520 = vcvt.s32.f32 %v4512
        %v4521 = vcvt.s32.f32 %v4513
        %v4522 = vmul.f32 %v4459, %v4514
        %v4523 = vmul.f32 %v4460, %v4515
        %v4524 = vmul.f32 %v4461, %v4516
        %v4525 = vmul.f32 %v4462, %v4517
        %v4526 = vmul.f32 %v4463, %v4518
        %v4527 = vmul.f32 %v4464, %v4519
        %v4528 = vmul.f32 %v4465, %v4520
        %v4529 = vmul.f32 %v4466, %v4521
        %v4530 = vmul.f32 %v4467, %v4514
        %v4531 = vmul.f32 %v4468, %v4515
        %v4532 = vmul.f32 %v4469, %v4516
        %v4533 = vmul.f32 %v4470, %v4517
        %v4534 = vmul.f32 %v4471, %v4518
        %v4535 = vmul.f32 %v4472, %v4519
        %v4536 = vmul.f32 %v4473, %v4520
        %v4537 = vmul.f32 %v4474, %v4521
        %v4538 = vmul.f32 %v4475, %v4514
        %v4539 = vmul.f32 %v4476, %v4515
        %v4540 = vmul.f32 %v4477, %v4516
        %v4541 = vmul.f32 %v4478, %v4517
        %v4542 = vmul.f32 %v4479, %v4518
        %v4543 = vmul.f32 %v4480, %v4519
        %v4544 = vmul.f32 %v4481, %v4520
        %v4545 = vmul.f32 %v4482, %v4521
        %v4546 = vmul.f32 %v4483, %v4514
        %v4547 = vmul.f32 %v4484, %v4515
        %v4548 = vmul.f32 %v4485, %v4516
        %v4549 = vmul.f32 %v4486, %v4517
        %v4550 = vmul.f32 %v4487, %v4518
        %v4551 = vmul.f32 %v4488, %v4519
        %v4552 = vmul.f32 %v4489, %v4520
        %v4553 = vmul.f32 %v4490, %v4521
        %v4554 = vadd.f32 %v4522, %v4523
        %v4555 = vadd.f32 %v4554, %v4524
        %v4556 = vadd.f32 %v4555, %v4525
        %v4557 = vadd.f32 %v4556, %v4526
        %v4558 = vadd.f32 %v4557, %v4527
        %v4559 = vadd.f32 %v4558, %v4528
        %v4560 = vadd.f32 %v4559, %v4529
        %v4561 = vrot.slane %v4560, 4
        %v4562 = vadd.f32 %v4560, %v4561
        %v4563 = vrot.slane %v4562, 2
        %v4564 = vadd.f32 %v4562, %v4563
        %v4565 = vrot.slane %v4564, 1
        %v4566 = vadd.f32 %v4564, %v4565
        %v4567 = vadd.f32 %v4530, %v4531
        %v4568 = vadd.f32 %v4567, %v4532
        %v4569 = vadd.f32 %v4568, %v4533
        %v4570 = vadd.f32 %v4569, %v4534
        %v4571 = vadd.f32 %v4570, %v4535
        %v4572 = vadd.f32 %v4571, %v4536
        %v4573 = vadd.f32 %v4572, %v4537
        %v4574 = vrot.slane %v4573, 4
        %v4575 = vadd.f32 %v4573, %v4574
        %v4576 = vrot.slane %v4575, 2
        %v4577 = vadd.f32 %v4575, %v4576
        %v4578 = vrot.slane %v4577, 1
        %v4579 = vadd.f32 %v4577, %v4578
        %v4580 = vadd.f32 %v4538, %v4539
        %v4581 = vadd.f32 %v4580, %v4540
        %v4582 = vadd.f32 %v4581, %v4541
        %v4583 = vadd.f32 %v4582, %v4542
        %v4584 = vadd.f32 %v4583, %v4543
        %v4585 = vadd.f32 %v4584, %v4544
        %v4586 = vadd.f32 %v4585, %v4545
        %v4587 = vrot.slane %v4586, 4
        %v4588 = vadd.f32 %v4586, %v4587
        %v4589 = vrot.slane %v4588, 2
        %v4590 = vadd.f32 %v4588, %v4589
        %v4591 = vrot.slane %v4590, 1
        %v4592 = vadd.f32 %v4590, %v4591
        %v4593 = vadd.f32 %v4546, %v4547
        %v4594 = vadd.f32 %v4593, %v4548
        %v4595 = vadd.f32 %v4594, %v4549
        %v4596 = vadd.f32 %v4595, %v4550
        %v4597 = vadd.f32 %v4596, %v4551
        %v4598 = vadd.f32 %v4597, %v4552
        %v4599 = vadd.f32 %v4598, %v4553
        %v4600 = vrot.slane %v4599, 4
        %v4601 = vadd.f32 %v4599, %v4600
        %v4602 = vrot.slane %v4601, 2
        %v4603 = vadd.f32 %v4601, %v4602
        %v4604 = vrot.slane %v4603, 1
        %v4605 = vadd.f32 %v4603, %v4604
        %v4606 = vmul.f32 %v4566, 0.02
        %v4607 = vmul.f32 %v4579, 0.02
        %v4608 = vmul.f32 %v4592, 0.02
        %v4609 = vmul.f32 %v4605, 0.02
        %v4610 = vsub.f32 %v4459, %v4606
        %v4611 = vsub.f32 %v4460, %v4606
        %v4612 = vsub.f32 %v4461, %v4606
        %v4613 = vsub.f32 %v4462, %v4606
        %v4614 = vsub.f32 %v4463, %v4606
        %v4615 = vsub.f32 %v4464, %v4606
        %v4616 = vsub.f32 %v4465, %v4606
        %v4617 = vsub.f32 %v4466, %v4606
        %v4618 = vsub.f32 %v4467, %v4607
        %v4619 = vsub.f32 %v4468, %v4607
        %v4620 = vsub.f32 %v4469, %v4607
        %v4621 = vsub.f32 %v4470, %v4607
        %v4622 = vsub.f32 %v4471, %v4607
        %v4623 = vsub.f32 %v4472, %v4607
        %v4624 = vsub.f32 %v4473, %v4607
        %v4625 = vsub.f32 %v4474, %v4607
        %v4626 = vsub.f32 %v4475, %v4608
        %v4627 = vsub.f32 %v4476, %v4608
        %v4628 = vsub.f32 %v4477, %v4608
        %v4629 = vsub.f32 %v4478, %v4608
        %v4630 = vsub.f32 %v4479, %v4608
        %v4631 = vsub.f32 %v4480, %v4608
        %v4632 = vsub.f32 %v4481, %v4608
        %v4633 = vsub.f32 %v4482, %v4608
        %v4634 = vsub.f32 %v4483, %v4609
        %v4635 = vsub.f32 %v4484, %v4609
        %v4636 = vsub.f32 %v4485, %v4609
        %v4637 = vsub.f32 %v4486, %v4609
        %v4638 = vsub.f32 %v4487, %v4609
        %v4639 = vsub.f32 %v4488, %v4609
        %v4640 = vsub.f32 %v4489, %v4609
        %v4641 = vsub.f32 %v4490, %v4609
        %v4642 = vmul.f32 %v4610, %v4514
        %v4643 = vmul.f32 %v4611, %v4515
        %v4644 = vmul.f32 %v4612, %v4516
        %v4645 = vmul.f32 %v4613, %v4517
        %v4646 = vmul.f32 %v4614, %v4518
        %v4647 = vmul.f32 %v4615, %v4519
        %v4648 = vmul.f32 %v4616, %v4520
        %v4649 = vmul.f32 %v4617, %v4521
        %v4650 = vmul.f32 %v4618, %v4514
        %v4651 = vmul.f32 %v4619, %v4515
        %v4652 = vmul.f32 %v4620, %v4516
        %v4653 = vmul.f32 %v4621, %v4517
        %v4654 = vmul.f32 %v4622, %v4518
        %v4655 = vmul.f32 %v4623, %v4519
        %v4656 = vmul.f32 %v4624, %v4520
        %v4657 = vmul.f32 %v4625, %v4521
        %v4658 = vmul.f32 %v4626, %v4514
        %v4659 = vmul.f32 %v4627, %v4515
        %v4660 = vmul.f32 %v4628, %v4516
        %v4661 = vmul.f32 %v4629, %v4517
        %v4662 = vmul.f32 %v4630, %v4518
        %v4663 = vmul.f32 %v4631, %v4519
        %v4664 = vmul.f32 %v4632, %v4520
        %v4665 = vmul.f32 %v4633, %v4521
        %v4666 = vmul.f32 %v4634, %v4514
        %v4667 = vmul.f32 %v4635, %v4515
        %v4668 = vmul.f32 %v4636, %v4516
        %v4669 = vmul.f32 %v4637, %v4517
        %v4670 = vmul.f32 %v4638, %v4518
        %v4671 = vmul.f32 %v4639, %v4519
        %v4672 = vmul.f32 %v4640, %v4520
        %v4673 = vmul.f32 %v4641, %v4521
        %v4674 = vmul.f32 %v4642, %v4642
        %v4675 = vmul.f32 %v4643, %v4643
        %v4676 = vmul.f32 %v4644, %v4644
        %v4677 = vmul.f32 %v4645, %v4645
        %v4678 = vmul.f32 %v4646, %v4646
        %v4679 = vmul.f32 %v4647, %v4647
        %v4680 = vmul.f32 %v4648, %v4648
        %v4681 = vmul.f32 %v4649, %v4649
        %v4682 = vmul.f32 %v4650, %v4650
        %v4683 = vmul.f32 %v4651, %v4651
        %v4684 = vmul.f32 %v4652, %v4652
        %v4685 = vmul.f32 %v4653, %v4653
        %v4686 = vmul.f32 %v4654, %v4654
        %v4687 = vmul.f32 %v4655, %v4655
        %v4688 = vmul.f32 %v4656, %v4656
        %v4689 = vmul.f32 %v4657, %v4657
        %v4690 = vmul.f32 %v4658, %v4658
        %v4691 = vmul.f32 %v4659, %v4659
        %v4692 = vmul.f32 %v4660, %v4660
        %v4693 = vmul.f32 %v4661, %v4661
        %v4694 = vmul.f32 %v4662, %v4662
        %v4695 = vmul.f32 %v4663, %v4663
        %v4696 = vmul.f32 %v4664, %v4664
        %v4697 = vmul.f32 %v4665, %v4665
        %v4698 = vmul.f32 %v4666, %v4666
        %v4699 = vmul.f32 %v4667, %v4667
        %v4700 = vmul.f32 %v4668, %v4668
        %v4701 = vmul.f32 %v4669, %v4669
        %v4702 = vmul.f32 %v4670, %v4670
        %v4703 = vmul.f32 %v4671, %v4671
        %v4704 = vmul.f32 %v4672, %v4672
        %v4705 = vmul.f32 %v4673, %v4673
        %v4706 = vadd.f32 %v4674, %v4675
        %v4707 = vadd.f32 %v4706, %v4676
        %v4708 = vadd.f32 %v4707, %v4677
        %v4709 = vadd.f32 %v4708, %v4678
        %v4710 = vadd.f32 %v4709, %v4679
        %v4711 = vadd.f32 %v4710, %v4680
        %v4712 = vadd.f32 %v4711, %v4681
        %v4713 = vrot.slane %v4712, 4
        %v4714 = vadd.f32 %v4712, %v4713
        %v4715 = vrot.slane %v4714, 2
        %v4716 = vadd.f32 %v4714, %v4715
        %v4717 = vrot.slane %v4716, 1
        %v4718 = vadd.f32 %v4716, %v4717
        %v4719 = vadd.f32 %v4682, %v4683
        %v4720 = vadd.f32 %v4719, %v4684
        %v4721 = vadd.f32 %v4720, %v4685
        %v4722 = vadd.f32 %v4721, %v4686
        %v4723 = vadd.f32 %v4722, %v4687
        %v4724 = vadd.f32 %v4723, %v4688
        %v4725 = vadd.f32 %v4724, %v4689
        %v4726 = vrot.slane %v4725, 4
        %v4727 = vadd.f32 %v4725, %v4726
        %v4728 = vrot.slane %v4727, 2
        %v4729 = vadd.f32 %v4727, %v4728
        %v4730 = vrot.slane %v4729, 1
        %v4731 = vadd.f32 %v4729, %v4730
        %v4732 = vadd.f32 %v4690, %v4691
        %v4733 = vadd.f32 %v4732, %v4692
        %v4734 = vadd.f32 %v4733, %v4693
        %v4735 = vadd.f32 %v4734, %v4694
        %v4736 = vadd.f32 %v4735, %v4695
        %v4737 = vadd.f32 %v4736, %v4696
        %v4738 = vadd.f32 %v4737, %v4697
        %v4739 = vrot.slane %v4738, 4
        %v4740 = vadd.f32 %v4738, %v4739
        %v4741 = vrot.slane %v4740, 2
        %v4742 = vadd.f32 %v4740, %v4741
        %v4743 = vrot.slane %v4742, 1
        %v4744 = vadd.f32 %v4742, %v4743
        %v4745 = vadd.f32 %v4698, %v4699
        %v4746 = vadd.f32 %v4745, %v4700
        %v4747 = vadd.f32 %v4746, %v4701
        %v4748 = vadd.f32 %v4747, %v4702
        %v4749 = vadd.f32 %v4748, %v4703
        %v4750 = vadd.f32 %v4749, %v4704
        %v4751 = vadd.f32 %v4750, %v4705
        %v4752 = vrot.slane %v4751, 4
        %v4753 = vadd.f32 %v4751, %v4752
        %v4754 = vrot.slane %v4753, 2
        %v4755 = vadd.f32 %v4753, %v4754
        %v4756 = vrot.slane %v4755, 1
        %v4757 = vadd.f32 %v4755, %v4756
        %v4758 = vmul.f32 %v4718, 0.02
        %v4759 = vmul.f32 %v4731, 0.02
        %v4760 = vmul.f32 %v4744, 0.02
        %v4761 = vmul.f32 %v4757, 0.02
        %v4762 = vadd.f32 %v4758, 1e-05
        %v4763 = vadd.f32 %v4759, 1e-05
        %v4764 = vadd.f32 %v4760, 1e-05
        %v4765 = vadd.f32 %v4761, 1e-05
        %v4766 = vrsqrt.pop %v4762
        %v4767 = vmul.f32 %v4762, %v4766
        %vm4768 = vcmp.eq.f32.partialorder %v4762, inf
        %v4769 = vsel %vm4768, %v4762, %v4767
        %vm4770 = vcmp.eq.f32.partialorder %v4762, 0.0
        %v4771 = vand.u32 %v4762, 2147483648
        %v4772 = vsel %vm4770, %v4771, %v4769
        %v4773 = vrsqrt.pop %v4763
        %v4774 = vmul.f32 %v4763, %v4773
        %vm4775 = vcmp.eq.f32.partialorder %v4763, inf
        %v4776 = vsel %vm4775, %v4763, %v4774
        %vm4777 = vcmp.eq.f32.partialorder %v4763, 0.0
        %v4778 = vand.u32 %v4763, 2147483648
        %v4779 = vsel %vm4777, %v4778, %v4776
        %v4780 = vrsqrt.pop %v4764
        %v4781 = vmul.f32 %v4764, %v4780
        %vm4782 = vcmp.eq.f32.partialorder %v4764, inf
        %v4783 = vsel %vm4782, %v4764, %v4781
        %vm4784 = vcmp.eq.f32.partialorder %v4764, 0.0
        %v4785 = vand.u32 %v4764, 2147483648
        %v4786 = vsel %vm4784, %v4785, %v4783
        %v4787 = vrsqrt.pop %v4765
        %v4788 = vmul.f32 %v4765, %v4787
        %vm4789 = vcmp.eq.f32.partialorder %v4765, inf
        %v4790 = vsel %vm4789, %v4765, %v4788
        %vm4791 = vcmp.eq.f32.partialorder %v4765, 0.0
        %v4792 = vand.u32 %v4765, 2147483648
        %v4793 = vsel %vm4791, %v4792, %v4790
        %v4794 = vpack.c.bf16 %v4606, %v4606
        %v4795 = vpack.c.bf16 %v4607, %v4607
        %v4796 = vpack.c.bf16 %v4608, %v4608
        %v4797 = vpack.c.bf16 %v4609, %v4609
        %v4798 = vld [vmem:[%s1 + $0x348] sm:$0xf]
        %v4799 = vld [vmem:[%s1 + $0x34c] sm:$0xf]
        %v4800 = vld [vmem:[%s1 + $0x350] sm:$0xf]
        %v4801 = vld [vmem:[%s1 + $0x354] sm:$0xf]
        %v4802 = vld [vmem:[%s1 + $0x358] sm:$0xf]
        %v4803 = vld [vmem:[%s1 + $0x35c] sm:$0xf]
        %v4804 = vld [vmem:[%s1 + $0x360] sm:$0xf]
        %v4805 = vld [vmem:[%s1 + $0x364] sm:$0xf]
        %v4806 = vld [vmem:[%s1 + $0x368] sm:$0xf]
        %v4807 = vld [vmem:[%s1 + $0x36c] sm:$0xf]
        %v4808 = vld [vmem:[%s1 + $0x370] sm:$0xf]
        %v4809 = vld [vmem:[%s1 + $0x374] sm:$0xf]
        %v4810 = vld [vmem:[%s1 + $0x378] sm:$0xf]
        %v4811 = vld [vmem:[%s1 + $0x37c] sm:$0xf]
        %v4812 = vld [vmem:[%s1 + $0x380] sm:$0xf]
        %v4813 = vld [vmem:[%s1 + $0x384] sm:$0xf]
        %v4814 = vpack.c.bf16 %v4772, %v4772
        %v4815 = vpack.c.bf16 %v4779, %v4779
        %v4816 = vpack.c.bf16 %v4786, %v4786
        %v4817 = vpack.c.bf16 %v4793, %v4793
        %v4818 = vld [vmem:[%s1 + $0x388] sm:$0xf]
        %v4819 = vld [vmem:[%s1 + $0x38c] sm:$0xf]
        %v4820 = vld [vmem:[%s1 + $0x390] sm:$0xf]
        %v4821 = vld [vmem:[%s1 + $0x394] sm:$0xf]
        %v4822 = vld [vmem:[%s1 + $0x398] sm:$0xf]
        %v4823 = vld [vmem:[%s1 + $0x39c] sm:$0xf]
        %v4824 = vld [vmem:[%s1 + $0x3a0] sm:$0xf]
        %v4825 = vld [vmem:[%s1 + $0x3a4] sm:$0xf]
        %v4826 = vld [vmem:[%s1 + $0x3a8] sm:$0xf]
        %v4827 = vld [vmem:[%s1 + $0x3ac] sm:$0xf]
        %v4828 = vld [vmem:[%s1 + $0x3b0] sm:$0xf]
        %v4829 = vld [vmem:[%s1 + $0x3b4] sm:$0xf]
        %v4830 = vld [vmem:[%s1 + $0x3b8] sm:$0xf]
        %v4831 = vld [vmem:[%s1 + $0x3bc] sm:$0xf]
        %v4832 = vld [vmem:[%s1 + $0x3c0] sm:$0xf]
        %v4833 = vld [vmem:[%s1 + $0x3c4] sm:$0xf]
        %v4838 = vunpack.c.l.b16 %v4814
        %v4839 = vunpack.c.l.b16 %v4815
        %v4840 = vunpack.c.l.b16 %v4816
        %v4841 = vunpack.c.l.b16 %v4817
        %vm4842 = vcmask 1041409
        %v4843 = vsel %vm4842, %v4839, %v4838
        %vm4844 = vcmask 1042434
        %v4845 = vsel %vm4844, %v4840, %v4843
        %vm4846 = vcmask 1043459
        %v4847 = vsel %vm4846, %v4841, %v4845
        %v4848 = vpack.c.b16 %v4847, %v4847
        %v4866 = vunpack.c.l.b16 %v4818
        %v4867 = vunpack.c.l.b16 %v4819
        %v4868 = vunpack.c.l.b16 %v4820
        %v4869 = vunpack.c.l.b16 %v4821
        %v4870 = vunpack.c.l.b16 %v4822
        %v4871 = vunpack.c.l.b16 %v4823
        %v4872 = vunpack.c.l.b16 %v4824
        %v4873 = vunpack.c.l.b16 %v4825
        %v4874 = vunpack.c.l.b16 %v4826
        %v4875 = vunpack.c.l.b16 %v4827
        %v4876 = vunpack.c.l.b16 %v4828
        %v4877 = vunpack.c.l.b16 %v4829
        %v4878 = vunpack.c.l.b16 %v4830
        %v4879 = vunpack.c.l.b16 %v4831
        %v4880 = vunpack.c.l.b16 %v4832
        %v4881 = vunpack.c.l.b16 %v4833
        %v4882 = vpack.c.b16 %v4867, %v4866
        %v4883 = vpack.c.b16 %v4869, %v4868
        %v4884 = vpack.c.b16 %v4871, %v4870
        %v4885 = vpack.c.b16 %v4873, %v4872
        %v4886 = vpack.c.b16 %v4875, %v4874
        %v4887 = vpack.c.b16 %v4877, %v4876
        %v4888 = vpack.c.b16 %v4879, %v4878
        %v4889 = vpack.c.b16 %v4881, %v4880
        %4898 = vmatprep.subr.bf16.mxu0 0
        %4899 = vmatpush1.bf16.msra.mxu0 %v4882
        %4900 = vmatprep.subr.bf16.mxu0 0
        %4901 = vmatpush1.bf16.msra.mxu0 %v4883
        %4902 = vmatprep.subr.bf16.mxu0 0
        %4903 = vmatpush1.bf16.msra.mxu0 %v4884
        %4904 = vmatprep.subr.bf16.mxu0 0
        %4905 = vmatpush1.bf16.msra.mxu0 %v4885
        %4906 = vmatprep.subr.bf16.mxu0 0
        %4907 = vmatpush1.bf16.msra.mxu0 %v4886
        %4908 = vmatprep.subr.bf16.mxu0 0
        %4909 = vmatpush1.bf16.msra.mxu0 %v4887
        %4910 = vmatprep.subr.bf16.mxu0 0
        %4911 = vmatpush1.bf16.msra.mxu0 %v4888
        %4912 = vmatprep.subr.bf16.mxu0 0
        %4913 = vmatpush1.bf16.msra.mxu0 %v4889
        %4914 = vmatprep.subr.bf16.mxu0 0
        %4915 = vmatpush1.bf16.msra.mxu0 0
        %4916 = vmatprep.subr.bf16.mxu0 0
        %4917 = vmatpush1.bf16.msra.mxu0 0
        %4918 = vmatprep.subr.bf16.mxu0 0
        %4919 = vmatpush1.bf16.msra.mxu0 0
        %4920 = vmatprep.subr.bf16.mxu0 0
        %4921 = vmatpush1.bf16.msra.mxu0 0
        %4922 = vmatprep.subr.bf16.mxu0 0
        %4923 = vmatpush1.bf16.msra.mxu0 0
        %4924 = vmatprep.subr.bf16.mxu0 0
        %4925 = vmatpush1.bf16.msra.mxu0 0
        %4926 = vmatprep.subr.bf16.mxu0 0
        %4927 = vmatpush1.bf16.msra.mxu0 0
        %4928 = vmatprep.subr.bf16.mxu0 0
        %4929 = vmatpush1.bf16.msra.mxu0 0
        %4930 = vmatprep.mubr.bf16.mxu0 0
        %4931 = vmatmul.mubr.bf16.gmra.mrb[0].mxu0 %v4848
        %v4932 = vpop.f32.mrb[0].mxu0
        %v4933 = vadd.f32 0.0, %v4932
        %v4934 = vpop.f32.mrb[0].mxu0
        %v4935 = vpop.f32.mrb[0].mxu0
        %v4936 = vpop.f32.mrb[0].mxu0
        %4937 = vdwg.mxu0
        %v4942 = vunpack.c.l.b16 %v4794
        %v4943 = vunpack.c.l.b16 %v4795
        %v4944 = vunpack.c.l.b16 %v4796
        %v4945 = vunpack.c.l.b16 %v4797
        %v4946 = vsel %vm4842, %v4943, %v4942
        %v4947 = vsel %vm4844, %v4944, %v4946
        %v4948 = vsel %vm4846, %v4945, %v4947
        %v4949 = vpack.c.b16 %v4948, %v4948
        %v4967 = vunpack.c.l.b16 %v4798
        %v4968 = vunpack.c.l.b16 %v4799
        %v4969 = vunpack.c.l.b16 %v4800
        %v4970 = vunpack.c.l.b16 %v4801
        %v4971 = vunpack.c.l.b16 %v4802
        %v4972 = vunpack.c.l.b16 %v4803
        %v4973 = vunpack.c.l.b16 %v4804
        %v4974 = vunpack.c.l.b16 %v4805
        %v4975 = vunpack.c.l.b16 %v4806
        %v4976 = vunpack.c.l.b16 %v4807
        %v4977 = vunpack.c.l.b16 %v4808
        %v4978 = vunpack.c.l.b16 %v4809
        %v4979 = vunpack.c.l.b16 %v4810
        %v4980 = vunpack.c.l.b16 %v4811
        %v4981 = vunpack.c.l.b16 %v4812
        %v4982 = vunpack.c.l.b16 %v4813
        %v4983 = vpack.c.b16 %v4968, %v4967
        %v4984 = vpack.c.b16 %v4970, %v4969
        %v4985 = vpack.c.b16 %v4972, %v4971
        %v4986 = vpack.c.b16 %v4974, %v4973
        %v4987 = vpack.c.b16 %v4976, %v4975
        %v4988 = vpack.c.b16 %v4978, %v4977
        %v4989 = vpack.c.b16 %v4980, %v4979
        %v4990 = vpack.c.b16 %v4982, %v4981
        %4999 = vmatprep.subr.bf16.mxu0 0
        %5000 = vmatpush1.bf16.msra.mxu0 %v4983
        %5001 = vmatprep.subr.bf16.mxu0 0
        %5002 = vmatpush1.bf16.msra.mxu0 %v4984
        %5003 = vmatprep.subr.bf16.mxu0 0
        %5004 = vmatpush1.bf16.msra.mxu0 %v4985
        %5005 = vmatprep.subr.bf16.mxu0 0
        %5006 = vmatpush1.bf16.msra.mxu0 %v4986
        %5007 = vmatprep.subr.bf16.mxu0 0
        %5008 = vmatpush1.bf16.msra.mxu0 %v4987
        %5009 = vmatprep.subr.bf16.mxu0 0
        %5010 = vmatpush1.bf16.msra.mxu0 %v4988
        %5011 = vmatprep.subr.bf16.mxu0 0
        %5012 = vmatpush1.bf16.msra.mxu0 %v4989
        %5013 = vmatprep.subr.bf16.mxu0 0
        %5014 = vmatpush1.bf16.msra.mxu0 %v4990
        %5015 = vmatprep.subr.bf16.mxu0 0
        %5016 = vmatpush1.bf16.msra.mxu0 0
        %5017 = vmatprep.subr.bf16.mxu0 0
        %5018 = vmatpush1.bf16.msra.mxu0 0
        %5019 = vmatprep.subr.bf16.mxu0 0
        %5020 = vmatpush1.bf16.msra.mxu0 0
        %5021 = vmatprep.subr.bf16.mxu0 0
        %5022 = vmatpush1.bf16.msra.mxu0 0
        %5023 = vmatprep.subr.bf16.mxu0 0
        %5024 = vmatpush1.bf16.msra.mxu0 0
        %5025 = vmatprep.subr.bf16.mxu0 0
        %5026 = vmatpush1.bf16.msra.mxu0 0
        %5027 = vmatprep.subr.bf16.mxu0 0
        %5028 = vmatpush1.bf16.msra.mxu0 0
        %5029 = vmatprep.subr.bf16.mxu0 0
        %5030 = vmatpush1.bf16.msra.mxu0 0
        %5031 = vmatprep.mubr.bf16.mxu0 0
        %5032 = vmatmul.mubr.bf16.gmra.mrb[0].mxu0 %v4949
        %v5033 = vpop.f32.mrb[0].mxu0
        %v5034 = vadd.f32 %v4933, %v5033
        %v5035 = vpop.f32.mrb[0].mxu0
        %v5036 = vpop.f32.mrb[0].mxu0
        %v5037 = vpop.f32.mrb[0].mxu0
        %5038 = vdwg.mxu0
        %v5039 = vld [vmem:[%s2 + $0x6] sm:$0x1]
        %v5040 = vlaneseq
        %v5041 = vshrl.u32 %v5040, 7
        %v5042 = vsub.s32 0, %v5041
        %v5043 = vrot.slane %v5039, %v5042
        %v5044 = vadd.f32 %v5034, %v5043
        %v5045 = vmax.f32 %v5044, 0.0
        %v5046 = vpack.c.bf16 %v5045, %v5045
        %v5047 = vld [vmem:[%s1 + $0x3c8] sm:$0xf]
        %v5048 = vld [vmem:[%s1 + $0x3cc] sm:$0xf]
        %v5049 = vld [vmem:[%s1 + $0x3d0] sm:$0xf]
        %v5050 = vld [vmem:[%s1 + $0x3d4] sm:$0xf]
        %v5051 = vld [vmem:[%s1 + $0x3d8] sm:$0xf]
        %v5052 = vld [vmem:[%s1 + $0x3dc] sm:$0xf]
        %v5053 = vld [vmem:[%s1 + $0x3e0] sm:$0xf]
        %v5054 = vld [vmem:[%s1 + $0x3e4] sm:$0xf]
        %v5055 = vld [vmem:[%s1 + $0x3e8] sm:$0xf]
        %v5056 = vld [vmem:[%s1 + $0x3ec] sm:$0xf]
        %v5057 = vld [vmem:[%s1 + $0x3f0] sm:$0xf]
        %v5058 = vld [vmem:[%s1 + $0x3f4] sm:$0xf]
        %v5059 = vld [vmem:[%s1 + $0x3f8] sm:$0xf]
        %v5060 = vld [vmem:[%s1 + $0x3fc] sm:$0xf]
        %v5061 = vld [vmem:[%s1 + $0x400] sm:$0xf]
        %v5062 = vld [vmem:[%s1 + $0x404] sm:$0xf]
        %v5063 = vld [vmem:[%s2 + $0x7] sm:$0x1]
        %v5064 = vlaneseq
        %v5065 = vshrl.u32 %v5064, 7
        %v5066 = vsub.s32 0, %v5065
        %v5067 = vrot.slane %v5063, %v5066
        %v5084 = vunpack.c.l.b16 %v5047
        %v5085 = vunpack.c.l.b16 %v5048
        %v5086 = vunpack.c.l.b16 %v5049
        %v5087 = vunpack.c.l.b16 %v5050
        %v5088 = vunpack.c.l.b16 %v5051
        %v5089 = vunpack.c.l.b16 %v5052
        %v5090 = vunpack.c.l.b16 %v5053
        %v5091 = vunpack.c.l.b16 %v5054
        %v5092 = vunpack.c.l.b16 %v5055
        %v5093 = vunpack.c.l.b16 %v5056
        %v5094 = vunpack.c.l.b16 %v5057
        %v5095 = vunpack.c.l.b16 %v5058
        %v5096 = vunpack.c.l.b16 %v5059
        %v5097 = vunpack.c.l.b16 %v5060
        %v5098 = vunpack.c.l.b16 %v5061
        %v5099 = vunpack.c.l.b16 %v5062
        %v5100 = vpack.c.b16 %v5085, %v5084
        %v5101 = vpack.c.b16 %v5087, %v5086
        %v5102 = vpack.c.b16 %v5089, %v5088
        %v5103 = vpack.c.b16 %v5091, %v5090
        %v5104 = vpack.c.b16 %v5093, %v5092
        %v5105 = vpack.c.b16 %v5095, %v5094
        %v5106 = vpack.c.b16 %v5097, %v5096
        %v5107 = vpack.c.b16 %v5099, %v5098
        %5116 = vmatprep.subr.bf16.mxu0 0
        %5117 = vmatpush1.bf16.msra.mxu0 %v5100
        %5118 = vmatprep.subr.bf16.mxu0 0
        %5119 = vmatpush1.bf16.msra.mxu0 %v5101
        %5120 = vmatprep.subr.bf16.mxu0 0
        %5121 = vmatpush1.bf16.msra.mxu0 %v5102
        %5122 = vmatprep.subr.bf16.mxu0 0
        %5123 = vmatpush1.bf16.msra.mxu0 %v5103
        %5124 = vmatprep.subr.bf16.mxu0 0
        %5125 = vmatpush1.bf16.msra.mxu0 %v5104
        %5126 = vmatprep.subr.bf16.mxu0 0
        %5127 = vmatpush1.bf16.msra.mxu0 %v5105
        %5128 = vmatprep.subr.bf16.mxu0 0
        %5129 = vmatpush1.bf16.msra.mxu0 %v5106
        %5130 = vmatprep.subr.bf16.mxu0 0
        %5131 = vmatpush1.bf16.msra.mxu0 %v5107
        %5132 = vmatprep.subr.bf16.mxu0 0
        %5133 = vmatpush1.bf16.msra.mxu0 0
        %5134 = vmatprep.subr.bf16.mxu0 0
        %5135 = vmatpush1.bf16.msra.mxu0 0
        %5136 = vmatprep.subr.bf16.mxu0 0
        %5137 = vmatpush1.bf16.msra.mxu0 0
        %5138 = vmatprep.subr.bf16.mxu0 0
        %5139 = vmatpush1.bf16.msra.mxu0 0
        %5140 = vmatprep.subr.bf16.mxu0 0
        %5141 = vmatpush1.bf16.msra.mxu0 0
        %5142 = vmatprep.subr.bf16.mxu0 0
        %5143 = vmatpush1.bf16.msra.mxu0 0
        %5144 = vmatprep.subr.bf16.mxu0 0
        %5145 = vmatpush1.bf16.msra.mxu0 0
        %5146 = vmatprep.subr.bf16.mxu0 0
        %5147 = vmatpush1.bf16.msra.mxu0 0
        %5148 = vmatprep.mubr.bf16.mxu0 0
        %5149 = vmatmul.mubr.bf16.gmra.mrb[0].mxu0 %v5046
        %v5150 = vpop.f32.mrb[0].mxu0
        %v5151 = vadd.f32 %v5067, %v5150
        %v5152 = vpop.f32.mrb[0].mxu0
        %v5153 = vpop.f32.mrb[0].mxu0
        %v5154 = vpop.f32.mrb[0].mxu0
        %5155 = vdwg.mxu0
        %v5156 = vmax.f32 %v5151, 0.0
        %v5157 = vpack.c.bf16 %v5156, %v5156
        %v5158 = vld [vmem:[%s1 + $0x408] sm:$0xf]
        %v5159 = vld [vmem:[%s1 + $0x40c] sm:$0xf]
        %v5160 = vld [vmem:[%s1 + $0x410] sm:$0xf]
        %v5161 = vld [vmem:[%s1 + $0x414] sm:$0xf]
        %v5162 = vld [vmem:[%s1 + $0x418] sm:$0xf]
        %v5163 = vld [vmem:[%s1 + $0x41c] sm:$0xf]
        %v5164 = vld [vmem:[%s1 + $0x420] sm:$0xf]
        %v5165 = vld [vmem:[%s1 + $0x424] sm:$0xf]
        %v5166 = vld [vmem:[%s1 + $0x428] sm:$0xf]
        %v5167 = vld [vmem:[%s1 + $0x42c] sm:$0xf]
        %v5168 = vld [vmem:[%s1 + $0x430] sm:$0xf]
        %v5169 = vld [vmem:[%s1 + $0x434] sm:$0xf]
        %v5170 = vld [vmem:[%s1 + $0x438] sm:$0xf]
        %v5171 = vld [vmem:[%s1 + $0x43c] sm:$0xf]
        %v5172 = vld [vmem:[%s1 + $0x440] sm:$0xf]
        %v5173 = vld [vmem:[%s1 + $0x444] sm:$0xf]
        %v5174 = vld [vmem:[%s2 + $0x8] sm:$0x1]
        %v5175 = vlaneseq
        %v5176 = vshrl.u32 %v5175, 7
        %v5177 = vsub.s32 0, %v5176
        %v5178 = vrot.slane %v5174, %v5177
        %v5195 = vunpack.c.l.b16 %v5158
        %v5196 = vunpack.c.l.b16 %v5159
        %v5197 = vunpack.c.l.b16 %v5160
        %v5198 = vunpack.c.l.b16 %v5161
        %v5199 = vunpack.c.l.b16 %v5162
        %v5200 = vunpack.c.l.b16 %v5163
        %v5201 = vunpack.c.l.b16 %v5164
        %v5202 = vunpack.c.l.b16 %v5165
        %v5203 = vunpack.c.l.b16 %v5166
        %v5204 = vunpack.c.l.b16 %v5167
        %v5205 = vunpack.c.l.b16 %v5168
        %v5206 = vunpack.c.l.b16 %v5169
        %v5207 = vunpack.c.l.b16 %v5170
        %v5208 = vunpack.c.l.b16 %v5171
        %v5209 = vunpack.c.l.b16 %v5172
        %v5210 = vunpack.c.l.b16 %v5173
        %v5211 = vpack.c.b16 %v5196, %v5195
        %v5212 = vpack.c.b16 %v5198, %v5197
        %v5213 = vpack.c.b16 %v5200, %v5199
        %v5214 = vpack.c.b16 %v5202, %v5201
        %v5215 = vpack.c.b16 %v5204, %v5203
        %v5216 = vpack.c.b16 %v5206, %v5205
        %v5217 = vpack.c.b16 %v5208, %v5207
        %v5218 = vpack.c.b16 %v5210, %v5209
        %5227 = vmatprep.subr.bf16.mxu0 0
        %5228 = vmatpush1.bf16.msra.mxu0 %v5211
        %5229 = vmatprep.subr.bf16.mxu0 0
        %5230 = vmatpush1.bf16.msra.mxu0 %v5212
        %5231 = vmatprep.subr.bf16.mxu0 0
        %5232 = vmatpush1.bf16.msra.mxu0 %v5213
        %5233 = vmatprep.subr.bf16.mxu0 0
        %5234 = vmatpush1.bf16.msra.mxu0 %v5214
        %5235 = vmatprep.subr.bf16.mxu0 0
        %5236 = vmatpush1.bf16.msra.mxu0 %v5215
        %5237 = vmatprep.subr.bf16.mxu0 0
        %5238 = vmatpush1.bf16.msra.mxu0 %v5216
        %5239 = vmatprep.subr.bf16.mxu0 0
        %5240 = vmatpush1.bf16.msra.mxu0 %v5217
        %5241 = vmatprep.subr.bf16.mxu0 0
        %5242 = vmatpush1.bf16.msra.mxu0 %v5218
        %5243 = vmatprep.subr.bf16.mxu0 0
        %5244 = vmatpush1.bf16.msra.mxu0 0
        %5245 = vmatprep.subr.bf16.mxu0 0
        %5246 = vmatpush1.bf16.msra.mxu0 0
        %5247 = vmatprep.subr.bf16.mxu0 0
        %5248 = vmatpush1.bf16.msra.mxu0 0
        %5249 = vmatprep.subr.bf16.mxu0 0
        %5250 = vmatpush1.bf16.msra.mxu0 0
        %5251 = vmatprep.subr.bf16.mxu0 0
        %5252 = vmatpush1.bf16.msra.mxu0 0
        %5253 = vmatprep.subr.bf16.mxu0 0
        %5254 = vmatpush1.bf16.msra.mxu0 0
        %5255 = vmatprep.subr.bf16.mxu0 0
        %5256 = vmatpush1.bf16.msra.mxu0 0
        %5257 = vmatprep.subr.bf16.mxu0 0
        %5258 = vmatpush1.bf16.msra.mxu0 0
        %5259 = vmatprep.mubr.bf16.mxu0 0
        %5260 = vmatmul.mubr.bf16.gmra.mrb[0].mxu0 %v5157
        %v5261 = vpop.f32.mrb[0].mxu0
        %v5262 = vadd.f32 %v5178, %v5261
        %v5263 = vpop.f32.mrb[0].mxu0
        %v5264 = vpop.f32.mrb[0].mxu0
        %v5265 = vpop.f32.mrb[0].mxu0
        %5266 = vdwg.mxu0
        %5267 = vst [vmem:[%s166] sm:$0xf] %v5262
        %s5268 = sand.u32 %s93, 1
        %s5269 = scalar_lea.sflag [#allocation3], %s5268
        %s5270 = sand.u32 %s93, 1
        %s5271 = smul.addr %s5270, 4
        %s5272 = scalar_lea.vmem [#allocation2], %s5271
        // Predicated region
        $region33: #{lft_xvector_forward.1} parent=31 // pred_check
          %p5273 = pneg %p103
        $region34: #{lft_xvector_forward.1} parent=31 // pred_check_branch
          %5275 = sbr.rel (%p5273) target = $region36
        $region35: #{lft_xvector_forward.1} parent=31 // pred_region
          %s5277 = ssub.s32 64, 64
          %5278 = vsyncadd %s5269, %s5277
          %s5279 = smul.addr %s17, 64
          %s5280 = scalar_lea.hbm %s3, %s5279
          %s5282 = sshll.u32 %s5272, 4
          %s5283 = int_to_ptr.vmem [resolvable:$true] %s5282
          %5285 = dma.vmem_to_hbm [thread:$0]  %s5283, 64, %s5280, %s5269
        $region36: #{lft_xvector_forward.1} parent=31 // pred_fallthru
          _
      $region32: #{lft_xvector_forward.1} parent=5 // pred_fallthru
        _
      %p5286 = scmp.le.s32.totalorder 2, %s12
      // Predicated region
      $region37: #{lft_xvector_forward.1} parent=5 // pred_check
        %p5287 = pneg %p5286
      $region38: #{lft_xvector_forward.1} parent=5 // pred_check_branch
        %5289 = sbr.rel (%p5287) target = $region40
      $region39: #{lft_xvector_forward.1} parent=5 // pred_region
        %s5290 = ssub.s32 %s12, 2
        // Predicated region
        $region41: #{lft_xvector_forward.1} parent=39 // pred_check
          %p5291 = pneg %p109
        $region42: #{lft_xvector_forward.1} parent=39 // pred_check_branch
          %5293 = sbr.rel (%p5291) target = $region44
        $region43: #{lft_xvector_forward.1} parent=39 // pred_region
          %s5294 = sand.u32 %s94, 1
          %s5295 = scalar_lea.sflag [#allocation3], %s5294
          %s5296 = sand.u32 %s94, 1
          %s5297 = smul.addr %s5296, 4
          %s5298 = scalar_lea.vmem [#allocation2], %s5297
          %5299 = dma.done %s5295, 64
        $region44: #{lft_xvector_forward.1} parent=39 // pred_fallthru
          _
      $region40: #{lft_xvector_forward.1} parent=5 // pred_fallthru
        _
    $region6: #{lft_xvector_forward.1} parent=1 // loop_footer
      %s16 = sadd.s32 1, %s12
    $region7: #{lft_xvector_forward.1} parent=1 // loop_footer_branch
      %11 = sbr.rel target = $region3
    $region8: #{lft_xvector_forward.1} parent=1 // loop_exit
      _
    %5300 = vsyncpa [#allocation3], 1
    %s5301 = scalar_lea.sflag [#allocation3], 1
    %5302 = vsyncpa %s5301, 1

</llo_original>
